<compile_context>
chip_gen: v6e
topology: v6e:2x2x1
jax: 0.10.0
libtpu: 0.0.40
codegen_flags: <defaults>
</compile_context>

<pallas_src>
import functools

import jax
import jax.numpy as jnp
import numpy as np
from jax.experimental import pallas as pl
from jax.experimental.pallas import tpu as pltpu


# ----------------------------------------------------------------------------
# Fused Pallas kernel: num_layers x GRU  +  Linear on last hidden state
# ----------------------------------------------------------------------------
def _tfnaive_fused_kernel(num_layers, T, B, H, x_ref, *refs):
    """Fused multi-layer GRU + Linear (single invocation, everything in VMEM).

    in_refs : x2d (T*B, IN)  time-major, flattened
              per layer: w_i  (3, IN_l, H) f32   input->gate weights (r,z,n)
                         w_h  (3, H, H)   bf16   hidden->gate weights (r,z,n)
                         bias (3, 1, H)   f32    [b_ir+b_hr, b_iz+b_hz, b_in]
                         bhn  (1, H)      f32    b_hn (stays inside r*(...))
              out_w (H, O) f32, out_b (1, O) f32
    out_ref : o (B, O)
    scratch : seq_s (T, B, H)   current layer's hidden sequence (next layer's input)
              gr_s/gz_s/gn_s (T, B, H)  hoisted per-gate input pre-activations
    """
    n_lw = 4 * num_layers
    layer_refs = [refs[4 * l:4 * l + 4] for l in range(num_layers)]
    wout_ref, bout_ref = refs[n_lw], refs[n_lw + 1]
    o_ref = refs[n_lw + 2]
    seq_s, gr_s, gz_s, gn_s = refs[n_lw + 3:n_lw + 7]

    h_last = jnp.zeros((B, H), jnp.float32)
    for layer, (w_i_ref, w_h_ref, bias_ref, bhn_ref) in enumerate(layer_refs):
        # ---- prologue: hoisted input->gate matmuls for the whole sequence ----
        if layer == 0:
            xin = x_ref[...]                                  # (T*B, IN), already 2-D
        else:
            xin = seq_s[...].reshape(T * B, H)                # previous layer's sequence
        gr_s[...] = (jnp.dot(xin, w_i_ref[0], preferred_element_type=jnp.float32)
                     + bias_ref[0]).reshape(T, B, H)
        gz_s[...] = (jnp.dot(xin, w_i_ref[1], preferred_element_type=jnp.float32)
                     + bias_ref[1]).reshape(T, B, H)
        gn_s[...] = (jnp.dot(xin, w_i_ref[2], preferred_element_type=jnp.float32)
                     + bias_ref[2]).reshape(T, B, H)

        # ---- hoist loop-invariant loads / broadcasts out of the unrolled loop ----
        w_hr = w_h_ref[0]                                     # (H, H) bf16
        w_hz = w_h_ref[1]
        w_hn = w_h_ref[2]
        b_hn = jnp.broadcast_to(bhn_ref[...], (B, H))         # broadcast once, not per step
        write_seq = layer < num_layers - 1                    # last layer's seq is never read

        # ---- serial recurrence: h carried in vregs; only h@W_h* + gate math per step ----
        def step(t, h, w_hr=w_hr, w_hz=w_hz, w_hn=w_hn, b_hn=b_hn, write_seq=write_seq):
            h_bf = h.astype(jnp.bfloat16)
            gh_r = jnp.dot(h_bf, w_hr, preferred_element_type=jnp.float32)
            gh_z = jnp.dot(h_bf, w_hz, preferred_element_type=jnp.float32)
            gh_n = jnp.dot(h_bf, w_hn, preferred_element_type=jnp.float32)
            r = jax.nn.sigmoid(gr_s[t] + gh_r)
            z = jax.nn.sigmoid(gz_s[t] + gh_z)
            n = jnp.tanh(gn_s[t] + r * (gh_n + b_hn))
            h_new = (1.0 - z) * n + z * h
            if write_seq:
                seq_s[t] = h_new
            return h_new

        h_last = jax.lax.fori_loop(0, T, step,
                                   jnp.zeros((B, H), jnp.float32), unroll=True)

    # ---- output layer on the last timestep of the last layer ----
    o_ref[...] = (
        jnp.dot(h_last, wout_ref[...], preferred_element_type=jnp.float32)
        + bout_ref[...]
    ).astype(o_ref.dtype)


# ----------------------------------------------------------------------------
# Wrapper (weight packing + pallas_call)
# ----------------------------------------------------------------------------
def _pack_layer(layer):
    """PyTorch-layout GRU layer -> per-gate, MXU-friendly kernel operands."""
    w_ih, w_hh = layer["w_ih"], layer["w_hh"]      # (3H, in), (3H, H)
    b_ih, b_hh = layer["b_ih"], layer["b_hh"]      # (3H,), (3H,)
    H = w_hh.shape[1]
    w_ir, w_iz, w_in = w_ih[:H], w_ih[H:2 * H], w_ih[2 * H:]
    w_hr, w_hz, w_hn = w_hh[:H], w_hh[H:2 * H], w_hh[2 * H:]
    b_ir, b_iz, b_in = b_ih[:H], b_ih[H:2 * H], b_ih[2 * H:]
    b_hr, b_hz, b_hn = b_hh[:H], b_hh[H:2 * H], b_hh[2 * H:]
    w_i = jnp.stack([w_ir.T, w_iz.T, w_in.T]).astype(jnp.float32)        # (3, in, H)
    w_h = jnp.stack([w_hr.T, w_hz.T, w_hn.T]).astype(jnp.bfloat16)       # (3, H, H) bf16
    bias = jnp.stack([(b_ir + b_hr)[None, :],                            # r/z parts of b_hh
                      (b_iz + b_hz)[None, :],                            # folded into prologue
                      b_in[None, :]]).astype(jnp.float32)                # (3, 1, H)
    bhn = b_hn[None, :].astype(jnp.float32)                              # (1, H)
    return w_i, w_h, bias, bhn


def tfnaive_forward(X_btf, params):
    """Equivalent of TFnaive.forward(X) with return_intermediary=False.

    X_btf: (B, T, input_size), batch-first like PyTorch.
    Returns (B, input_size) — output Linear applied to the last timestep's hidden state.
    """
    assert X_btf.ndim == 3
    B, T, IN = X_btf.shape
    num_layers = len(params["gru"])
    H = params["gru"][0]["w_hh"].shape[1]
    O = params["out_w"].shape[0]

    # Time-major flatten done once in the wrapper (removes the in-kernel reorder loop).
    x2d = jnp.transpose(X_btf, (1, 0, 2)).reshape(T * B, IN).astype(jnp.float32)

    args = [x2d]
    for layer in params["gru"]:
        args += list(_pack_layer(layer))
    args += [params["out_w"].T.astype(jnp.float32),            # (H, O)
             params["out_b"][None, :].astype(jnp.float32)]     # (1, O)

    vmem = pl.BlockSpec(memory_space=pltpu.MemorySpace.VMEM)
    kernel = functools.partial(_tfnaive_fused_kernel, num_layers, T, B, H)

    return pl.pallas_call(
        kernel,
        out_shape=jax.ShapeDtypeStruct((B, O), jnp.float32),
        in_specs=[vmem] * len(args),
        out_specs=vmem,
        scratch_shapes=[
            pltpu.VMEM((T, B, H), jnp.float32),   # hidden sequence of current layer
            pltpu.VMEM((T, B, H), jnp.float32),   # gi_r (hoisted, bias-folded)
            pltpu.VMEM((T, B, H), jnp.float32),   # gi_z
            pltpu.VMEM((T, B, H), jnp.float32),   # gi_n
        ],
    )(*args)


# ----------------------------------------------------------------------------
# Deterministic parameter initialization (PyTorch GRU/Linear layout)
# ----------------------------------------------------------------------------
def init_params(key, input_size, hidden_size, num_layers):
    params = {"gru": []}
    k = 1.0 / np.sqrt(hidden_size)
    for layer in range(num_layers):
        in_dim = input_size if layer == 0 else hidden_size
        key, k1, k2, k3, k4 = jax.random.split(key, 5)
        params["gru"].append({
            "w_ih": jax.random.uniform(k1, (3 * hidden_size, in_dim), jnp.float32, -k, k),
            "w_hh": jax.random.uniform(k2, (3 * hidden_size, hidden_size), jnp.float32, -k, k),
            "b_ih": jax.random.uniform(k3, (3 * hidden_size,), jnp.float32, -k, k),
            "b_hh": jax.random.uniform(k4, (3 * hidden_size,), jnp.float32, -k, k),
        })
    key, k5, k6 = jax.random.split(key, 3)
    params["out_w"] = jax.random.uniform(k5, (input_size, hidden_size), jnp.float32, -k, k)
    params["out_b"] = jax.random.uniform(k6, (input_size,), jnp.float32, -k, k)
    return params


# ----------------------------------------------------------------------------
# Pure-JAX reference (PyTorch GRU semantics, f32 throughout)
# ----------------------------------------------------------------------------
def reference_forward(X_btf, params):
    x = jnp.transpose(X_btf, (1, 0, 2)).astype(jnp.float32)   # (T, B, F)
    B = x.shape[1]
    for layer in params["gru"]:
        w_ih, w_hh = layer["w_ih"], layer["w_hh"]
        b_ih, b_hh = layer["b_ih"], layer["b_hh"]
        H = w_hh.shape[1]

        def step(h, x_t, w_ih=w_ih, w_hh=w_hh, b_ih=b_ih, b_hh=b_hh, H=H):
            gi = x_t @ w_ih.T + b_ih
            gh = h @ w_hh.T + b_hh
            r = jax.nn.sigmoid(gi[:, :H] + gh[:, :H])
            z = jax.nn.sigmoid(gi[:, H:2 * H] + gh[:, H:2 * H])
            n = jnp.tanh(gi[:, 2 * H:] + r * gh[:, 2 * H:])
            h_new = (1.0 - z) * n + z * h
            return h_new, h_new

        h0 = jnp.zeros((B, H), jnp.float32)
        _, x = jax.lax.scan(step, h0, x)
    return x[-1] @ params["out_w"].T + params["out_b"]


# ----------------------------------------------------------------------------
# Main
# ----------------------------------------------------------------------------
if __name__ == "__main__":
    input_size = 4
    hidden_size = 32
    num_layers = 2
    batch = 2
    seq = 8

    root = jax.random.PRNGKey(0)
    k_params, k_x = jax.random.split(root)
    params = init_params(k_params, input_size, hidden_size, num_layers)
    X = jax.random.normal(k_x, (batch, seq, input_size), jnp.float32)

    out = tfnaive_forward(X, params)          # (batch, input_size)
    out = jax.block_until_ready(out)

    ref = jax.block_until_ready(reference_forward(X, params))
    # Tolerance accounts for the bf16 MXU operands on the recurrence matmuls (gate and
    # activation math stay f32); real bugs (wrong gate order / bias) would be >1e-2 off.
    np.testing.assert_allclose(np.asarray(out), np.asarray(ref), rtol=5e-3, atol=5e-3)

    print("KERNEL_OK")
</pallas_src>

<mosaic_0001>
module attributes {stable_mosaic.version = 11 : i64} {
  func.func @_tfnaive_fused_kernel(%arg0: memref<16x4xf32, #tpu.memory_space<vmem>>, %arg1: memref<3x4x32xf32, #tpu.memory_space<vmem>>, %arg2: memref<3x32x32xbf16, #tpu.memory_space<vmem>>, %arg3: memref<3x1x32xf32, #tpu.memory_space<vmem>>, %arg4: memref<1x32xf32, #tpu.memory_space<vmem>>, %arg5: memref<3x32x32xf32, #tpu.memory_space<vmem>>, %arg6: memref<3x32x32xbf16, #tpu.memory_space<vmem>>, %arg7: memref<3x1x32xf32, #tpu.memory_space<vmem>>, %arg8: memref<1x32xf32, #tpu.memory_space<vmem>>, %arg9: memref<32x4xf32, #tpu.memory_space<vmem>>, %arg10: memref<1x4xf32, #tpu.memory_space<vmem>>, %arg11: memref<2x4xf32, #tpu.memory_space<vmem>>, %arg12: memref<8x2x32xf32, #tpu.memory_space<vmem>>, %arg13: memref<8x2x32xf32, #tpu.memory_space<vmem>>, %arg14: memref<8x2x32xf32, #tpu.memory_space<vmem>>, %arg15: memref<8x2x32xf32, #tpu.memory_space<vmem>>) attributes {dimension_semantics = [], scalar_prefetch = 0 : i64, scratch_operands = 4 : i64, tpu.core_type = #tpu.core_type<tc>} {
    %c0 = arith.constant 0 : index
    %c0_0 = arith.constant 0 : index
    %0 = vector.load %arg0[%c0, %c0_0] : memref<16x4xf32, #tpu.memory_space<vmem>>, vector<16x4xf32>
    %c0_1 = arith.constant 0 : index
    %c0_2 = arith.constant 0 : index
    %c0_3 = arith.constant 0 : index
    %1 = vector.load %arg1[%c0_1, %c0_2, %c0_3] : memref<3x4x32xf32, #tpu.memory_space<vmem>>, vector<1x4x32xf32>
    %2 = vector.shape_cast %1 : vector<1x4x32xf32> to vector<4x32xf32>
    %cst = arith.constant dense<0.000000e+00> : vector<16x32xf32>
    %3 = tpu.matmul %0, %2, %cst {dimension_numbers = #tpu.dot_dimension_numbers<[1], [0], [0], [1], [0, 0, 1, 1], [], []>} : vector<16x4xf32>, vector<4x32xf32>, vector<16x32xf32> -> vector<16x32xf32>
    %c0_4 = arith.constant 0 : index
    %c0_5 = arith.constant 0 : index
    %c0_6 = arith.constant 0 : index
    %4 = vector.load %arg3[%c0_4, %c0_5, %c0_6] : memref<3x1x32xf32, #tpu.memory_space<vmem>>, vector<1x1x32xf32>
    %5 = vector.shape_cast %4 : vector<1x1x32xf32> to vector<1x32xf32>
    %6 = vector.broadcast %5 : vector<1x32xf32> to vector<16x32xf32>
    %7 = arith.addf %3, %6 : vector<16x32xf32>
    %8 = vector.shape_cast %7 : vector<16x32xf32> to vector<8x2x32xf32>
    %c0_7 = arith.constant 0 : index
    %c0_8 = arith.constant 0 : index
    %c0_9 = arith.constant 0 : index
    %9 = vector.load %arg13[%c0_7, %c0_8, %c0_9] : memref<8x2x32xf32, #tpu.memory_space<vmem>>, vector<8x2x32xf32>
    tpu.vector_store %arg13[%c0_7, %c0_8, %c0_9], %8 {strides = array<i32>} : memref<8x2x32xf32, #tpu.memory_space<vmem>>, vector<8x2x32xf32>,
    %c1 = arith.constant 1 : index
    %c0_10 = arith.constant 0 : index
    %c0_11 = arith.constant 0 : index
    %10 = vector.load %arg1[%c1, %c0_10, %c0_11] : memref<3x4x32xf32, #tpu.memory_space<vmem>>, vector<1x4x32xf32>
    %11 = vector.shape_cast %10 : vector<1x4x32xf32> to vector<4x32xf32>
    %cst_12 = arith.constant dense<0.000000e+00> : vector<16x32xf32>
    %12 = tpu.matmul %0, %11, %cst_12 {dimension_numbers = #tpu.dot_dimension_numbers<[1], [0], [0], [1], [0, 0, 1, 1], [], []>} : vector<16x4xf32>, vector<4x32xf32>, vector<16x32xf32> -> vector<16x32xf32>
    %c1_13 = arith.constant 1 : index
    %c0_14 = arith.constant 0 : index
    %c0_15 = arith.constant 0 : index
    %13 = vector.load %arg3[%c1_13, %c0_14, %c0_15] : memref<3x1x32xf32, #tpu.memory_space<vmem>>, vector<1x1x32xf32>
    %14 = vector.shape_cast %13 : vector<1x1x32xf32> to vector<1x32xf32>
    %15 = vector.broadcast %14 : vector<1x32xf32> to vector<16x32xf32>
    %16 = arith.addf %12, %15 : vector<16x32xf32>
    %17 = vector.shape_cast %16 : vector<16x32xf32> to vector<8x2x32xf32>
    %c0_16 = arith.constant 0 : index
    %c0_17 = arith.constant 0 : index
    %c0_18 = arith.constant 0 : index
    %18 = vector.load %arg14[%c0_16, %c0_17, %c0_18] : memref<8x2x32xf32, #tpu.memory_space<vmem>>, vector<8x2x32xf32>
    tpu.vector_store %arg14[%c0_16, %c0_17, %c0_18], %17 {strides = array<i32>} : memref<8x2x32xf32, #tpu.memory_space<vmem>>, vector<8x2x32xf32>,
    %c2 = arith.constant 2 : index
    %c0_19 = arith.constant 0 : index
    %c0_20 = arith.constant 0 : index
    %19 = vector.load %arg1[%c2, %c0_19, %c0_20] : memref<3x4x32xf32, #tpu.memory_space<vmem>>, vector<1x4x32xf32>
    %20 = vector.shape_cast %19 : vector<1x4x32xf32> to vector<4x32xf32>
    %cst_21 = arith.constant dense<0.000000e+00> : vector<16x32xf32>
    %21 = tpu.matmul %0, %20, %cst_21 {dimension_numbers = #tpu.dot_dimension_numbers<[1], [0], [0], [1], [0, 0, 1, 1], [], []>} : vector<16x4xf32>, vector<4x32xf32>, vector<16x32xf32> -> vector<16x32xf32>
    %c2_22 = arith.constant 2 : index
    %c0_23 = arith.constant 0 : index
    %c0_24 = arith.constant 0 : index
    %22 = vector.load %arg3[%c2_22, %c0_23, %c0_24] : memref<3x1x32xf32, #tpu.memory_space<vmem>>, vector<1x1x32xf32>
    %23 = vector.shape_cast %22 : vector<1x1x32xf32> to vector<1x32xf32>
    %24 = vector.broadcast %23 : vector<1x32xf32> to vector<16x32xf32>
    %25 = arith.addf %21, %24 : vector<16x32xf32>
    %26 = vector.shape_cast %25 : vector<16x32xf32> to vector<8x2x32xf32>
    %c0_25 = arith.constant 0 : index
    %c0_26 = arith.constant 0 : index
    %c0_27 = arith.constant 0 : index
    %27 = vector.load %arg15[%c0_25, %c0_26, %c0_27] : memref<8x2x32xf32, #tpu.memory_space<vmem>>, vector<8x2x32xf32>
    tpu.vector_store %arg15[%c0_25, %c0_26, %c0_27], %26 {strides = array<i32>} : memref<8x2x32xf32, #tpu.memory_space<vmem>>, vector<8x2x32xf32>,
    %c0_28 = arith.constant 0 : index
    %c0_29 = arith.constant 0 : index
    %c0_30 = arith.constant 0 : index
    %28 = vector.load %arg2[%c0_28, %c0_29, %c0_30] : memref<3x32x32xbf16, #tpu.memory_space<vmem>>, vector<1x32x32xbf16>
    %29 = vector.shape_cast %28 : vector<1x32x32xbf16> to vector<32x32xbf16>
    %c1_31 = arith.constant 1 : index
    %c0_32 = arith.constant 0 : index
    %c0_33 = arith.constant 0 : index
    %30 = vector.load %arg2[%c1_31, %c0_32, %c0_33] : memref<3x32x32xbf16, #tpu.memory_space<vmem>>, vector<1x32x32xbf16>
    %31 = vector.shape_cast %30 : vector<1x32x32xbf16> to vector<32x32xbf16>
    %c2_34 = arith.constant 2 : index
    %c0_35 = arith.constant 0 : index
    %c0_36 = arith.constant 0 : index
    %32 = vector.load %arg2[%c2_34, %c0_35, %c0_36] : memref<3x32x32xbf16, #tpu.memory_space<vmem>>, vector<1x32x32xbf16>
    %33 = vector.shape_cast %32 : vector<1x32x32xbf16> to vector<32x32xbf16>
    %c0_37 = arith.constant 0 : index
    %c0_38 = arith.constant 0 : index
    %34 = vector.load %arg4[%c0_37, %c0_38] : memref<1x32xf32, #tpu.memory_space<vmem>>, vector<1x32xf32>
    %35 = vector.shape_cast %34 : vector<1x32xf32> to vector<1x32xf32>
    %36 = vector.broadcast %35 : vector<1x32xf32> to vector<2x32xf32>
    %cst_39 = arith.constant 0.000000e+00 : f32
    %37 = vector.broadcast %cst_39 : f32 to vector<2x32xf32>
    %c0_i32 = arith.constant 0 : i32
    %38 = arith.truncf %37 : vector<2x32xf32> to vector<2x32xbf16>
    %cst_40 = arith.constant dense<0.000000e+00> : vector<2x32xf32>
    %39 = tpu.matmul %38, %29, %cst_40 {dimension_numbers = #tpu.dot_dimension_numbers<[1], [0], [0], [1], [0, 0, 1, 1], [], []>} : vector<2x32xbf16>, vector<32x32xbf16>, vector<2x32xf32> -> vector<2x32xf32>
    %cst_41 = arith.constant dense<0.000000e+00> : vector<2x32xf32>
    %40 = tpu.matmul %38, %31, %cst_41 {dimension_numbers = #tpu.dot_dimension_numbers<[1], [0], [0], [1], [0, 0, 1, 1], [], []>} : vector<2x32xbf16>, vector<32x32xbf16>, vector<2x32xf32> -> vector<2x32xf32>
    %cst_42 = arith.constant dense<0.000000e+00> : vector<2x32xf32>
    %41 = tpu.matmul %38, %33, %cst_42 {dimension_numbers = #tpu.dot_dimension_numbers<[1], [0], [0], [1], [0, 0, 1, 1], [], []>} : vector<2x32xbf16>, vector<32x32xbf16>, vector<2x32xf32> -> vector<2x32xf32>
    %42 = arith.index_cast %c0_i32 : i32 to index
    %c0_43 = arith.constant 0 : index
    %c0_44 = arith.constant 0 : index
    %43 = vector.load %arg13[%42, %c0_43, %c0_44] : memref<8x2x32xf32, #tpu.memory_space<vmem>>, vector<1x2x32xf32>
    %44 = vector.shape_cast %43 : vector<1x2x32xf32> to vector<2x32xf32>
    %45 = arith.addf %44, %39 : vector<2x32xf32>
    %46 = arith.negf %45 : vector<2x32xf32>
    %47 = math.exp %46 : vector<2x32xf32>
    %cst_45 = arith.constant 1.000000e+00 : f32
    %48 = vector.broadcast %cst_45 : f32 to vector<2x32xf32>
    %49 = arith.addf %48, %47 : vector<2x32xf32>
    %50 = arith.divf %48, %49 : vector<2x32xf32>
    %51 = arith.index_cast %c0_i32 : i32 to index
    %c0_46 = arith.constant 0 : index
    %c0_47 = arith.constant 0 : index
    %52 = vector.load %arg14[%51, %c0_46, %c0_47] : memref<8x2x32xf32, #tpu.memory_space<vmem>>, vector<1x2x32xf32>
    %53 = vector.shape_cast %52 : vector<1x2x32xf32> to vector<2x32xf32>
    %54 = arith.addf %53, %40 : vector<2x32xf32>
    %55 = arith.negf %54 : vector<2x32xf32>
    %56 = math.exp %55 : vector<2x32xf32>
    %cst_48 = arith.constant 1.000000e+00 : f32
    %57 = vector.broadcast %cst_48 : f32 to vector<2x32xf32>
    %58 = arith.addf %57, %56 : vector<2x32xf32>
    %59 = arith.divf %57, %58 : vector<2x32xf32>
    %60 = arith.index_cast %c0_i32 : i32 to index
    %c0_49 = arith.constant 0 : index
    %c0_50 = arith.constant 0 : index
    %61 = vector.load %arg15[%60, %c0_49, %c0_50] : memref<8x2x32xf32, #tpu.memory_space<vmem>>, vector<1x2x32xf32>
    %62 = vector.shape_cast %61 : vector<1x2x32xf32> to vector<2x32xf32>
    %63 = arith.addf %41, %36 : vector<2x32xf32>
    %64 = arith.mulf %50, %63 : vector<2x32xf32>
    %65 = arith.addf %62, %64 : vector<2x32xf32>
    %66 = math.tanh %65 : vector<2x32xf32>
    %cst_51 = arith.constant 1.000000e+00 : f32
    %67 = vector.broadcast %cst_51 : f32 to vector<2x32xf32>
    %68 = arith.subf %67, %59 : vector<2x32xf32>
    %69 = arith.mulf %68, %66 : vector<2x32xf32>
    %70 = arith.mulf %59, %37 : vector<2x32xf32>
    %71 = arith.addf %69, %70 : vector<2x32xf32>
    %72 = arith.index_cast %c0_i32 : i32 to index
    %c0_52 = arith.constant 0 : index
    %c0_53 = arith.constant 0 : index
    %73 = vector.load %arg12[%72, %c0_52, %c0_53] : memref<8x2x32xf32, #tpu.memory_space<vmem>>, vector<1x2x32xf32>
    %74 = vector.shape_cast %73 : vector<1x2x32xf32> to vector<2x32xf32>
    %75 = vector.shape_cast %71 : vector<2x32xf32> to vector<1x2x32xf32>
    tpu.vector_store %arg12[%72, %c0_52, %c0_53], %75 {strides = array<i32>} : memref<8x2x32xf32, #tpu.memory_space<vmem>>, vector<1x2x32xf32>,
    %c1_i32 = arith.constant 1 : i32
    %76 = arith.truncf %71 : vector<2x32xf32> to vector<2x32xbf16>
    %cst_54 = arith.constant dense<0.000000e+00> : vector<2x32xf32>
    %77 = tpu.matmul %76, %29, %cst_54 {dimension_numbers = #tpu.dot_dimension_numbers<[1], [0], [0], [1], [0, 0, 1, 1], [], []>} : vector<2x32xbf16>, vector<32x32xbf16>, vector<2x32xf32> -> vector<2x32xf32>
    %cst_55 = arith.constant dense<0.000000e+00> : vector<2x32xf32>
    %78 = tpu.matmul %76, %31, %cst_55 {dimension_numbers = #tpu.dot_dimension_numbers<[1], [0], [0], [1], [0, 0, 1, 1], [], []>} : vector<2x32xbf16>, vector<32x32xbf16>, vector<2x32xf32> -> vector<2x32xf32>
    %cst_56 = arith.constant dense<0.000000e+00> : vector<2x32xf32>
    %79 = tpu.matmul %76, %33, %cst_56 {dimension_numbers = #tpu.dot_dimension_numbers<[1], [0], [0], [1], [0, 0, 1, 1], [], []>} : vector<2x32xbf16>, vector<32x32xbf16>, vector<2x32xf32> -> vector<2x32xf32>
    %80 = arith.index_cast %c1_i32 : i32 to index
    %c0_57 = arith.constant 0 : index
    %c0_58 = arith.constant 0 : index
    %81 = vector.load %arg13[%80, %c0_57, %c0_58] : memref<8x2x32xf32, #tpu.memory_space<vmem>>, vector<1x2x32xf32>
    %82 = vector.shape_cast %81 : vector<1x2x32xf32> to vector<2x32xf32>
    %83 = arith.addf %82, %77 : vector<2x32xf32>
    %84 = arith.negf %83 : vector<2x32xf32>
    %85 = math.exp %84 : vector<2x32xf32>
    %cst_59 = arith.constant 1.000000e+00 : f32
    %86 = vector.broadcast %cst_59 : f32 to vector<2x32xf32>
    %87 = arith.addf %86, %85 : vector<2x32xf32>
    %88 = arith.divf %86, %87 : vector<2x32xf32>
    %89 = arith.index_cast %c1_i32 : i32 to index
    %c0_60 = arith.constant 0 : index
    %c0_61 = arith.constant 0 : index
    %90 = vector.load %arg14[%89, %c0_60, %c0_61] : memref<8x2x32xf32, #tpu.memory_space<vmem>>, vector<1x2x32xf32>
    %91 = vector.shape_cast %90 : vector<1x2x32xf32> to vector<2x32xf32>
    %92 = arith.addf %91, %78 : vector<2x32xf32>
    %93 = arith.negf %92 : vector<2x32xf32>
    %94 = math.exp %93 : vector<2x32xf32>
    %cst_62 = arith.constant 1.000000e+00 : f32
    %95 = vector.broadcast %cst_62 : f32 to vector<2x32xf32>
    %96 = arith.addf %95, %94 : vector<2x32xf32>
    %97 = arith.divf %95, %96 : vector<2x32xf32>
    %98 = arith.index_cast %c1_i32 : i32 to index
    %c0_63 = arith.constant 0 : index
    %c0_64 = arith.constant 0 : index
    %99 = vector.load %arg15[%98, %c0_63, %c0_64] : memref<8x2x32xf32, #tpu.memory_space<vmem>>, vector<1x2x32xf32>
    %100 = vector.shape_cast %99 : vector<1x2x32xf32> to vector<2x32xf32>
    %101 = arith.addf %79, %36 : vector<2x32xf32>
    %102 = arith.mulf %88, %101 : vector<2x32xf32>
    %103 = arith.addf %100, %102 : vector<2x32xf32>
    %104 = math.tanh %103 : vector<2x32xf32>
    %cst_65 = arith.constant 1.000000e+00 : f32
    %105 = vector.broadcast %cst_65 : f32 to vector<2x32xf32>
    %106 = arith.subf %105, %97 : vector<2x32xf32>
    %107 = arith.mulf %106, %104 : vector<2x32xf32>
    %108 = arith.mulf %97, %71 : vector<2x32xf32>
    %109 = arith.addf %107, %108 : vector<2x32xf32>
    %110 = arith.index_cast %c1_i32 : i32 to index
    %c0_66 = arith.constant 0 : index
    %c0_67 = arith.constant 0 : index
    %111 = vector.load %arg12[%110, %c0_66, %c0_67] : memref<8x2x32xf32, #tpu.memory_space<vmem>>, vector<1x2x32xf32>
    %112 = vector.shape_cast %111 : vector<1x2x32xf32> to vector<2x32xf32>
    %113 = vector.shape_cast %109 : vector<2x32xf32> to vector<1x2x32xf32>
    tpu.vector_store %arg12[%110, %c0_66, %c0_67], %113 {strides = array<i32>} : memref<8x2x32xf32, #tpu.memory_space<vmem>>, vector<1x2x32xf32>,
    %c2_i32 = arith.constant 2 : i32
    %114 = arith.truncf %109 : vector<2x32xf32> to vector<2x32xbf16>
    %cst_68 = arith.constant dense<0.000000e+00> : vector<2x32xf32>
    %115 = tpu.matmul %114, %29, %cst_68 {dimension_numbers = #tpu.dot_dimension_numbers<[1], [0], [0], [1], [0, 0, 1, 1], [], []>} : vector<2x32xbf16>, vector<32x32xbf16>, vector<2x32xf32> -> vector<2x32xf32>
    %cst_69 = arith.constant dense<0.000000e+00> : vector<2x32xf32>
    %116 = tpu.matmul %114, %31, %cst_69 {dimension_numbers = #tpu.dot_dimension_numbers<[1], [0], [0], [1], [0, 0, 1, 1], [], []>} : vector<2x32xbf16>, vector<32x32xbf16>, vector<2x32xf32> -> vector<2x32xf32>
    %cst_70 = arith.constant dense<0.000000e+00> : vector<2x32xf32>
    %117 = tpu.matmul %114, %33, %cst_70 {dimension_numbers = #tpu.dot_dimension_numbers<[1], [0], [0], [1], [0, 0, 1, 1], [], []>} : vector<2x32xbf16>, vector<32x32xbf16>, vector<2x32xf32> -> vector<2x32xf32>
    %118 = arith.index_cast %c2_i32 : i32 to index
    %c0_71 = arith.constant 0 : index
    %c0_72 = arith.constant 0 : index
    %119 = vector.load %arg13[%118, %c0_71, %c0_72] : memref<8x2x32xf32, #tpu.memory_space<vmem>>, vector<1x2x32xf32>
    %120 = vector.shape_cast %119 : vector<1x2x32xf32> to vector<2x32xf32>
    %121 = arith.addf %120, %115 : vector<2x32xf32>
    %122 = arith.negf %121 : vector<2x32xf32>
    %123 = math.exp %122 : vector<2x32xf32>
    %cst_73 = arith.constant 1.000000e+00 : f32
    %124 = vector.broadcast %cst_73 : f32 to vector<2x32xf32>
    %125 = arith.addf %124, %123 : vector<2x32xf32>
    %126 = arith.divf %124, %125 : vector<2x32xf32>
    %127 = arith.index_cast %c2_i32 : i32 to index
    %c0_74 = arith.constant 0 : index
    %c0_75 = arith.constant 0 : index
    %128 = vector.load %arg14[%127, %c0_74, %c0_75] : memref<8x2x32xf32, #tpu.memory_space<vmem>>, vector<1x2x32xf32>
    %129 = vector.shape_cast %128 : vector<1x2x32xf32> to vector<2x32xf32>
    %130 = arith.addf %129, %116 : vector<2x32xf32>
    %131 = arith.negf %130 : vector<2x32xf32>
    %132 = math.exp %131 : vector<2x32xf32>
    %cst_76 = arith.constant 1.000000e+00 : f32
    %133 = vector.broadcast %cst_76 : f32 to vector<2x32xf32>
    %134 = arith.addf %133, %132 : vector<2x32xf32>
    %135 = arith.divf %133, %134 : vector<2x32xf32>
    %136 = arith.index_cast %c2_i32 : i32 to index
    %c0_77 = arith.constant 0 : index
    %c0_78 = arith.constant 0 : index
    %137 = vector.load %arg15[%136, %c0_77, %c0_78] : memref<8x2x32xf32, #tpu.memory_space<vmem>>, vector<1x2x32xf32>
    %138 = vector.shape_cast %137 : vector<1x2x32xf32> to vector<2x32xf32>
    %139 = arith.addf %117, %36 : vector<2x32xf32>
    %140 = arith.mulf %126, %139 : vector<2x32xf32>
    %141 = arith.addf %138, %140 : vector<2x32xf32>
    %142 = math.tanh %141 : vector<2x32xf32>
    %cst_79 = arith.constant 1.000000e+00 : f32
    %143 = vector.broadcast %cst_79 : f32 to vector<2x32xf32>
    %144 = arith.subf %143, %135 : vector<2x32xf32>
    %145 = arith.mulf %144, %142 : vector<2x32xf32>
    %146 = arith.mulf %135, %109 : vector<2x32xf32>
    %147 = arith.addf %145, %146 : vector<2x32xf32>
    %148 = arith.index_cast %c2_i32 : i32 to index
    %c0_80 = arith.constant 0 : index
    %c0_81 = arith.constant 0 : index
    %149 = vector.load %arg12[%148, %c0_80, %c0_81] : memref<8x2x32xf32, #tpu.memory_space<vmem>>, vector<1x2x32xf32>
    %150 = vector.shape_cast %149 : vector<1x2x32xf32> to vector<2x32xf32>
    %151 = vector.shape_cast %147 : vector<2x32xf32> to vector<1x2x32xf32>
    tpu.vector_store %arg12[%148, %c0_80, %c0_81], %151 {strides = array<i32>} : memref<8x2x32xf32, #tpu.memory_space<vmem>>, vector<1x2x32xf32>,
    %c3_i32 = arith.constant 3 : i32
    %152 = arith.truncf %147 : vector<2x32xf32> to vector<2x32xbf16>
    %cst_82 = arith.constant dense<0.000000e+00> : vector<2x32xf32>
    %153 = tpu.matmul %152, %29, %cst_82 {dimension_numbers = #tpu.dot_dimension_numbers<[1], [0], [0], [1], [0, 0, 1, 1], [], []>} : vector<2x32xbf16>, vector<32x32xbf16>, vector<2x32xf32> -> vector<2x32xf32>
    %cst_83 = arith.constant dense<0.000000e+00> : vector<2x32xf32>
    %154 = tpu.matmul %152, %31, %cst_83 {dimension_numbers = #tpu.dot_dimension_numbers<[1], [0], [0], [1], [0, 0, 1, 1], [], []>} : vector<2x32xbf16>, vector<32x32xbf16>, vector<2x32xf32> -> vector<2x32xf32>
    %cst_84 = arith.constant dense<0.000000e+00> : vector<2x32xf32>
    %155 = tpu.matmul %152, %33, %cst_84 {dimension_numbers = #tpu.dot_dimension_numbers<[1], [0], [0], [1], [0, 0, 1, 1], [], []>} : vector<2x32xbf16>, vector<32x32xbf16>, vector<2x32xf32> -> vector<2x32xf32>
    %156 = arith.index_cast %c3_i32 : i32 to index
    %c0_85 = arith.constant 0 : index
    %c0_86 = arith.constant 0 : index
    %157 = vector.load %arg13[%156, %c0_85, %c0_86] : memref<8x2x32xf32, #tpu.memory_space<vmem>>, vector<1x2x32xf32>
    %158 = vector.shape_cast %157 : vector<1x2x32xf32> to vector<2x32xf32>
    %159 = arith.addf %158, %153 : vector<2x32xf32>
    %160 = arith.negf %159 : vector<2x32xf32>
    %161 = math.exp %160 : vector<2x32xf32>
    %cst_87 = arith.constant 1.000000e+00 : f32
    %162 = vector.broadcast %cst_87 : f32 to vector<2x32xf32>
    %163 = arith.addf %162, %161 : vector<2x32xf32>
    %164 = arith.divf %162, %163 : vector<2x32xf32>
    %165 = arith.index_cast %c3_i32 : i32 to index
    %c0_88 = arith.constant 0 : index
    %c0_89 = arith.constant 0 : index
    %166 = vector.load %arg14[%165, %c0_88, %c0_89] : memref<8x2x32xf32, #tpu.memory_space<vmem>>, vector<1x2x32xf32>
    %167 = vector.shape_cast %166 : vector<1x2x32xf32> to vector<2x32xf32>
    %168 = arith.addf %167, %154 : vector<2x32xf32>
    %169 = arith.negf %168 : vector<2x32xf32>
    %170 = math.exp %169 : vector<2x32xf32>
    %cst_90 = arith.constant 1.000000e+00 : f32
    %171 = vector.broadcast %cst_90 : f32 to vector<2x32xf32>
    %172 = arith.addf %171, %170 : vector<2x32xf32>
    %173 = arith.divf %171, %172 : vector<2x32xf32>
    %174 = arith.index_cast %c3_i32 : i32 to index
    %c0_91 = arith.constant 0 : index
    %c0_92 = arith.constant 0 : index
    %175 = vector.load %arg15[%174, %c0_91, %c0_92] : memref<8x2x32xf32, #tpu.memory_space<vmem>>, vector<1x2x32xf32>
    %176 = vector.shape_cast %175 : vector<1x2x32xf32> to vector<2x32xf32>
    %177 = arith.addf %155, %36 : vector<2x32xf32>
    %178 = arith.mulf %164, %177 : vector<2x32xf32>
    %179 = arith.addf %176, %178 : vector<2x32xf32>
    %180 = math.tanh %179 : vector<2x32xf32>
    %cst_93 = arith.constant 1.000000e+00 : f32
    %181 = vector.broadcast %cst_93 : f32 to vector<2x32xf32>
    %182 = arith.subf %181, %173 : vector<2x32xf32>
    %183 = arith.mulf %182, %180 : vector<2x32xf32>
    %184 = arith.mulf %173, %147 : vector<2x32xf32>
    %185 = arith.addf %183, %184 : vector<2x32xf32>
    %186 = arith.index_cast %c3_i32 : i32 to index
    %c0_94 = arith.constant 0 : index
    %c0_95 = arith.constant 0 : index
    %187 = vector.load %arg12[%186, %c0_94, %c0_95] : memref<8x2x32xf32, #tpu.memory_space<vmem>>, vector<1x2x32xf32>
    %188 = vector.shape_cast %187 : vector<1x2x32xf32> to vector<2x32xf32>
    %189 = vector.shape_cast %185 : vector<2x32xf32> to vector<1x2x32xf32>
    tpu.vector_store %arg12[%186, %c0_94, %c0_95], %189 {strides = array<i32>} : memref<8x2x32xf32, #tpu.memory_space<vmem>>, vector<1x2x32xf32>,
    %c4_i32 = arith.constant 4 : i32
    %190 = arith.truncf %185 : vector<2x32xf32> to vector<2x32xbf16>
    %cst_96 = arith.constant dense<0.000000e+00> : vector<2x32xf32>
    %191 = tpu.matmul %190, %29, %cst_96 {dimension_numbers = #tpu.dot_dimension_numbers<[1], [0], [0], [1], [0, 0, 1, 1], [], []>} : vector<2x32xbf16>, vector<32x32xbf16>, vector<2x32xf32> -> vector<2x32xf32>
    %cst_97 = arith.constant dense<0.000000e+00> : vector<2x32xf32>
    %192 = tpu.matmul %190, %31, %cst_97 {dimension_numbers = #tpu.dot_dimension_numbers<[1], [0], [0], [1], [0, 0, 1, 1], [], []>} : vector<2x32xbf16>, vector<32x32xbf16>, vector<2x32xf32> -> vector<2x32xf32>
    %cst_98 = arith.constant dense<0.000000e+00> : vector<2x32xf32>
    %193 = tpu.matmul %190, %33, %cst_98 {dimension_numbers = #tpu.dot_dimension_numbers<[1], [0], [0], [1], [0, 0, 1, 1], [], []>} : vector<2x32xbf16>, vector<32x32xbf16>, vector<2x32xf32> -> vector<2x32xf32>
    %194 = arith.index_cast %c4_i32 : i32 to index
    %c0_99 = arith.constant 0 : index
    %c0_100 = arith.constant 0 : index
    %195 = vector.load %arg13[%194, %c0_99, %c0_100] : memref<8x2x32xf32, #tpu.memory_space<vmem>>, vector<1x2x32xf32>
    %196 = vector.shape_cast %195 : vector<1x2x32xf32> to vector<2x32xf32>
    %197 = arith.addf %196, %191 : vector<2x32xf32>
    %198 = arith.negf %197 : vector<2x32xf32>
    %199 = math.exp %198 : vector<2x32xf32>
    %cst_101 = arith.constant 1.000000e+00 : f32
    %200 = vector.broadcast %cst_101 : f32 to vector<2x32xf32>
    %201 = arith.addf %200, %199 : vector<2x32xf32>
    %202 = arith.divf %200, %201 : vector<2x32xf32>
    %203 = arith.index_cast %c4_i32 : i32 to index
    %c0_102 = arith.constant 0 : index
    %c0_103 = arith.constant 0 : index
    %204 = vector.load %arg14[%203, %c0_102, %c0_103] : memref<8x2x32xf32, #tpu.memory_space<vmem>>, vector<1x2x32xf32>
    %205 = vector.shape_cast %204 : vector<1x2x32xf32> to vector<2x32xf32>
    %206 = arith.addf %205, %192 : vector<2x32xf32>
    %207 = arith.negf %206 : vector<2x32xf32>
    %208 = math.exp %207 : vector<2x32xf32>
    %cst_104 = arith.constant 1.000000e+00 : f32
    %209 = vector.broadcast %cst_104 : f32 to vector<2x32xf32>
    %210 = arith.addf %209, %208 : vector<2x32xf32>
    %211 = arith.divf %209, %210 : vector<2x32xf32>
    %212 = arith.index_cast %c4_i32 : i32 to index
    %c0_105 = arith.constant 0 : index
    %c0_106 = arith.constant 0 : index
    %213 = vector.load %arg15[%212, %c0_105, %c0_106] : memref<8x2x32xf32, #tpu.memory_space<vmem>>, vector<1x2x32xf32>
    %214 = vector.shape_cast %213 : vector<1x2x32xf32> to vector<2x32xf32>
    %215 = arith.addf %193, %36 : vector<2x32xf32>
    %216 = arith.mulf %202, %215 : vector<2x32xf32>
    %217 = arith.addf %214, %216 : vector<2x32xf32>
    %218 = math.tanh %217 : vector<2x32xf32>
    %cst_107 = arith.constant 1.000000e+00 : f32
    %219 = vector.broadcast %cst_107 : f32 to vector<2x32xf32>
    %220 = arith.subf %219, %211 : vector<2x32xf32>
    %221 = arith.mulf %220, %218 : vector<2x32xf32>
    %222 = arith.mulf %211, %185 : vector<2x32xf32>
    %223 = arith.addf %221, %222 : vector<2x32xf32>
    %224 = arith.index_cast %c4_i32 : i32 to index
    %c0_108 = arith.constant 0 : index
    %c0_109 = arith.constant 0 : index
    %225 = vector.load %arg12[%224, %c0_108, %c0_109] : memref<8x2x32xf32, #tpu.memory_space<vmem>>, vector<1x2x32xf32>
    %226 = vector.shape_cast %225 : vector<1x2x32xf32> to vector<2x32xf32>
    %227 = vector.shape_cast %223 : vector<2x32xf32> to vector<1x2x32xf32>
    tpu.vector_store %arg12[%224, %c0_108, %c0_109], %227 {strides = array<i32>} : memref<8x2x32xf32, #tpu.memory_space<vmem>>, vector<1x2x32xf32>,
    %c5_i32 = arith.constant 5 : i32
    %228 = arith.truncf %223 : vector<2x32xf32> to vector<2x32xbf16>
    %cst_110 = arith.constant dense<0.000000e+00> : vector<2x32xf32>
    %229 = tpu.matmul %228, %29, %cst_110 {dimension_numbers = #tpu.dot_dimension_numbers<[1], [0], [0], [1], [0, 0, 1, 1], [], []>} : vector<2x32xbf16>, vector<32x32xbf16>, vector<2x32xf32> -> vector<2x32xf32>
    %cst_111 = arith.constant dense<0.000000e+00> : vector<2x32xf32>
    %230 = tpu.matmul %228, %31, %cst_111 {dimension_numbers = #tpu.dot_dimension_numbers<[1], [0], [0], [1], [0, 0, 1, 1], [], []>} : vector<2x32xbf16>, vector<32x32xbf16>, vector<2x32xf32> -> vector<2x32xf32>
    %cst_112 = arith.constant dense<0.000000e+00> : vector<2x32xf32>
    %231 = tpu.matmul %228, %33, %cst_112 {dimension_numbers = #tpu.dot_dimension_numbers<[1], [0], [0], [1], [0, 0, 1, 1], [], []>} : vector<2x32xbf16>, vector<32x32xbf16>, vector<2x32xf32> -> vector<2x32xf32>
    %232 = arith.index_cast %c5_i32 : i32 to index
    %c0_113 = arith.constant 0 : index
    %c0_114 = arith.constant 0 : index
    %233 = vector.load %arg13[%232, %c0_113, %c0_114] : memref<8x2x32xf32, #tpu.memory_space<vmem>>, vector<1x2x32xf32>
    %234 = vector.shape_cast %233 : vector<1x2x32xf32> to vector<2x32xf32>
    %235 = arith.addf %234, %229 : vector<2x32xf32>
    %236 = arith.negf %235 : vector<2x32xf32>
    %237 = math.exp %236 : vector<2x32xf32>
    %cst_115 = arith.constant 1.000000e+00 : f32
    %238 = vector.broadcast %cst_115 : f32 to vector<2x32xf32>
    %239 = arith.addf %238, %237 : vector<2x32xf32>
    %240 = arith.divf %238, %239 : vector<2x32xf32>
    %241 = arith.index_cast %c5_i32 : i32 to index
    %c0_116 = arith.constant 0 : index
    %c0_117 = arith.constant 0 : index
    %242 = vector.load %arg14[%241, %c0_116, %c0_117] : memref<8x2x32xf32, #tpu.memory_space<vmem>>, vector<1x2x32xf32>
    %243 = vector.shape_cast %242 : vector<1x2x32xf32> to vector<2x32xf32>
    %244 = arith.addf %243, %230 : vector<2x32xf32>
    %245 = arith.negf %244 : vector<2x32xf32>
    %246 = math.exp %245 : vector<2x32xf32>
    %cst_118 = arith.constant 1.000000e+00 : f32
    %247 = vector.broadcast %cst_118 : f32 to vector<2x32xf32>
    %248 = arith.addf %247, %246 : vector<2x32xf32>
    %249 = arith.divf %247, %248 : vector<2x32xf32>
    %250 = arith.index_cast %c5_i32 : i32 to index
    %c0_119 = arith.constant 0 : index
    %c0_120 = arith.constant 0 : index
    %251 = vector.load %arg15[%250, %c0_119, %c0_120] : memref<8x2x32xf32, #tpu.memory_space<vmem>>, vector<1x2x32xf32>
    %252 = vector.shape_cast %251 : vector<1x2x32xf32> to vector<2x32xf32>
    %253 = arith.addf %231, %36 : vector<2x32xf32>
    %254 = arith.mulf %240, %253 : vector<2x32xf32>
    %255 = arith.addf %252, %254 : vector<2x32xf32>
    %256 = math.tanh %255 : vector<2x32xf32>
    %cst_121 = arith.constant 1.000000e+00 : f32
    %257 = vector.broadcast %cst_121 : f32 to vector<2x32xf32>
    %258 = arith.subf %257, %249 : vector<2x32xf32>
    %259 = arith.mulf %258, %256 : vector<2x32xf32>
    %260 = arith.mulf %249, %223 : vector<2x32xf32>
    %261 = arith.addf %259, %260 : vector<2x32xf32>
    %262 = arith.index_cast %c5_i32 : i32 to index
    %c0_122 = arith.constant 0 : index
    %c0_123 = arith.constant 0 : index
    %263 = vector.load %arg12[%262, %c0_122, %c0_123] : memref<8x2x32xf32, #tpu.memory_space<vmem>>, vector<1x2x32xf32>
    %264 = vector.shape_cast %263 : vector<1x2x32xf32> to vector<2x32xf32>
    %265 = vector.shape_cast %261 : vector<2x32xf32> to vector<1x2x32xf32>
    tpu.vector_store %arg12[%262, %c0_122, %c0_123], %265 {strides = array<i32>} : memref<8x2x32xf32, #tpu.memory_space<vmem>>, vector<1x2x32xf32>,
    %c6_i32 = arith.constant 6 : i32
    %266 = arith.truncf %261 : vector<2x32xf32> to vector<2x32xbf16>
    %cst_124 = arith.constant dense<0.000000e+00> : vector<2x32xf32>
    %267 = tpu.matmul %266, %29, %cst_124 {dimension_numbers = #tpu.dot_dimension_numbers<[1], [0], [0], [1], [0, 0, 1, 1], [], []>} : vector<2x32xbf16>, vector<32x32xbf16>, vector<2x32xf32> -> vector<2x32xf32>
    %cst_125 = arith.constant dense<0.000000e+00> : vector<2x32xf32>
    %268 = tpu.matmul %266, %31, %cst_125 {dimension_numbers = #tpu.dot_dimension_numbers<[1], [0], [0], [1], [0, 0, 1, 1], [], []>} : vector<2x32xbf16>, vector<32x32xbf16>, vector<2x32xf32> -> vector<2x32xf32>
    %cst_126 = arith.constant dense<0.000000e+00> : vector<2x32xf32>
    %269 = tpu.matmul %266, %33, %cst_126 {dimension_numbers = #tpu.dot_dimension_numbers<[1], [0], [0], [1], [0, 0, 1, 1], [], []>} : vector<2x32xbf16>, vector<32x32xbf16>, vector<2x32xf32> -> vector<2x32xf32>
    %270 = arith.index_cast %c6_i32 : i32 to index
    %c0_127 = arith.constant 0 : index
    %c0_128 = arith.constant 0 : index
    %271 = vector.load %arg13[%270, %c0_127, %c0_128] : memref<8x2x32xf32, #tpu.memory_space<vmem>>, vector<1x2x32xf32>
    %272 = vector.shape_cast %271 : vector<1x2x32xf32> to vector<2x32xf32>
    %273 = arith.addf %272, %267 : vector<2x32xf32>
    %274 = arith.negf %273 : vector<2x32xf32>
    %275 = math.exp %274 : vector<2x32xf32>
    %cst_129 = arith.constant 1.000000e+00 : f32
    %276 = vector.broadcast %cst_129 : f32 to vector<2x32xf32>
    %277 = arith.addf %276, %275 : vector<2x32xf32>
    %278 = arith.divf %276, %277 : vector<2x32xf32>
    %279 = arith.index_cast %c6_i32 : i32 to index
    %c0_130 = arith.constant 0 : index
    %c0_131 = arith.constant 0 : index
    %280 = vector.load %arg14[%279, %c0_130, %c0_131] : memref<8x2x32xf32, #tpu.memory_space<vmem>>, vector<1x2x32xf32>
    %281 = vector.shape_cast %280 : vector<1x2x32xf32> to vector<2x32xf32>
    %282 = arith.addf %281, %268 : vector<2x32xf32>
    %283 = arith.negf %282 : vector<2x32xf32>
    %284 = math.exp %283 : vector<2x32xf32>
    %cst_132 = arith.constant 1.000000e+00 : f32
    %285 = vector.broadcast %cst_132 : f32 to vector<2x32xf32>
    %286 = arith.addf %285, %284 : vector<2x32xf32>
    %287 = arith.divf %285, %286 : vector<2x32xf32>
    %288 = arith.index_cast %c6_i32 : i32 to index
    %c0_133 = arith.constant 0 : index
    %c0_134 = arith.constant 0 : index
    %289 = vector.load %arg15[%288, %c0_133, %c0_134] : memref<8x2x32xf32, #tpu.memory_space<vmem>>, vector<1x2x32xf32>
    %290 = vector.shape_cast %289 : vector<1x2x32xf32> to vector<2x32xf32>
    %291 = arith.addf %269, %36 : vector<2x32xf32>
    %292 = arith.mulf %278, %291 : vector<2x32xf32>
    %293 = arith.addf %290, %292 : vector<2x32xf32>
    %294 = math.tanh %293 : vector<2x32xf32>
    %cst_135 = arith.constant 1.000000e+00 : f32
    %295 = vector.broadcast %cst_135 : f32 to vector<2x32xf32>
    %296 = arith.subf %295, %287 : vector<2x32xf32>
    %297 = arith.mulf %296, %294 : vector<2x32xf32>
    %298 = arith.mulf %287, %261 : vector<2x32xf32>
    %299 = arith.addf %297, %298 : vector<2x32xf32>
    %300 = arith.index_cast %c6_i32 : i32 to index
    %c0_136 = arith.constant 0 : index
    %c0_137 = arith.constant 0 : index
    %301 = vector.load %arg12[%300, %c0_136, %c0_137] : memref<8x2x32xf32, #tpu.memory_space<vmem>>, vector<1x2x32xf32>
    %302 = vector.shape_cast %301 : vector<1x2x32xf32> to vector<2x32xf32>
    %303 = vector.shape_cast %299 : vector<2x32xf32> to vector<1x2x32xf32>
    tpu.vector_store %arg12[%300, %c0_136, %c0_137], %303 {strides = array<i32>} : memref<8x2x32xf32, #tpu.memory_space<vmem>>, vector<1x2x32xf32>,
    %c7_i32 = arith.constant 7 : i32
    %304 = arith.truncf %299 : vector<2x32xf32> to vector<2x32xbf16>
    %cst_138 = arith.constant dense<0.000000e+00> : vector<2x32xf32>
    %305 = tpu.matmul %304, %29, %cst_138 {dimension_numbers = #tpu.dot_dimension_numbers<[1], [0], [0], [1], [0, 0, 1, 1], [], []>} : vector<2x32xbf16>, vector<32x32xbf16>, vector<2x32xf32> -> vector<2x32xf32>
    %cst_139 = arith.constant dense<0.000000e+00> : vector<2x32xf32>
    %306 = tpu.matmul %304, %31, %cst_139 {dimension_numbers = #tpu.dot_dimension_numbers<[1], [0], [0], [1], [0, 0, 1, 1], [], []>} : vector<2x32xbf16>, vector<32x32xbf16>, vector<2x32xf32> -> vector<2x32xf32>
    %cst_140 = arith.constant dense<0.000000e+00> : vector<2x32xf32>
    %307 = tpu.matmul %304, %33, %cst_140 {dimension_numbers = #tpu.dot_dimension_numbers<[1], [0], [0], [1], [0, 0, 1, 1], [], []>} : vector<2x32xbf16>, vector<32x32xbf16>, vector<2x32xf32> -> vector<2x32xf32>
    %308 = arith.index_cast %c7_i32 : i32 to index
    %c0_141 = arith.constant 0 : index
    %c0_142 = arith.constant 0 : index
    %309 = vector.load %arg13[%308, %c0_141, %c0_142] : memref<8x2x32xf32, #tpu.memory_space<vmem>>, vector<1x2x32xf32>
    %310 = vector.shape_cast %309 : vector<1x2x32xf32> to vector<2x32xf32>
    %311 = arith.addf %310, %305 : vector<2x32xf32>
    %312 = arith.negf %311 : vector<2x32xf32>
    %313 = math.exp %312 : vector<2x32xf32>
    %cst_143 = arith.constant 1.000000e+00 : f32
    %314 = vector.broadcast %cst_143 : f32 to vector<2x32xf32>
    %315 = arith.addf %314, %313 : vector<2x32xf32>
    %316 = arith.divf %314, %315 : vector<2x32xf32>
    %317 = arith.index_cast %c7_i32 : i32 to index
    %c0_144 = arith.constant 0 : index
    %c0_145 = arith.constant 0 : index
    %318 = vector.load %arg14[%317, %c0_144, %c0_145] : memref<8x2x32xf32, #tpu.memory_space<vmem>>, vector<1x2x32xf32>
    %319 = vector.shape_cast %318 : vector<1x2x32xf32> to vector<2x32xf32>
    %320 = arith.addf %319, %306 : vector<2x32xf32>
    %321 = arith.negf %320 : vector<2x32xf32>
    %322 = math.exp %321 : vector<2x32xf32>
    %cst_146 = arith.constant 1.000000e+00 : f32
    %323 = vector.broadcast %cst_146 : f32 to vector<2x32xf32>
    %324 = arith.addf %323, %322 : vector<2x32xf32>
    %325 = arith.divf %323, %324 : vector<2x32xf32>
    %326 = arith.index_cast %c7_i32 : i32 to index
    %c0_147 = arith.constant 0 : index
    %c0_148 = arith.constant 0 : index
    %327 = vector.load %arg15[%326, %c0_147, %c0_148] : memref<8x2x32xf32, #tpu.memory_space<vmem>>, vector<1x2x32xf32>
    %328 = vector.shape_cast %327 : vector<1x2x32xf32> to vector<2x32xf32>
    %329 = arith.addf %307, %36 : vector<2x32xf32>
    %330 = arith.mulf %316, %329 : vector<2x32xf32>
    %331 = arith.addf %328, %330 : vector<2x32xf32>
    %332 = math.tanh %331 : vector<2x32xf32>
    %cst_149 = arith.constant 1.000000e+00 : f32
    %333 = vector.broadcast %cst_149 : f32 to vector<2x32xf32>
    %334 = arith.subf %333, %325 : vector<2x32xf32>
    %335 = arith.mulf %334, %332 : vector<2x32xf32>
    %336 = arith.mulf %325, %299 : vector<2x32xf32>
    %337 = arith.addf %335, %336 : vector<2x32xf32>
    %338 = arith.index_cast %c7_i32 : i32 to index
    %c0_150 = arith.constant 0 : index
    %c0_151 = arith.constant 0 : index
    %339 = vector.load %arg12[%338, %c0_150, %c0_151] : memref<8x2x32xf32, #tpu.memory_space<vmem>>, vector<1x2x32xf32>
    %340 = vector.shape_cast %339 : vector<1x2x32xf32> to vector<2x32xf32>
    %341 = vector.shape_cast %337 : vector<2x32xf32> to vector<1x2x32xf32>
    tpu.vector_store %arg12[%338, %c0_150, %c0_151], %341 {strides = array<i32>} : memref<8x2x32xf32, #tpu.memory_space<vmem>>, vector<1x2x32xf32>,
    %c8_i32 = arith.constant 8 : i32
    %c0_152 = arith.constant 0 : index
    %c0_153 = arith.constant 0 : index
    %c0_154 = arith.constant 0 : index
    %342 = vector.load %arg12[%c0_152, %c0_153, %c0_154] : memref<8x2x32xf32, #tpu.memory_space<vmem>>, vector<8x2x32xf32>
    %343 = vector.shape_cast %342 : vector<8x2x32xf32> to vector<16x32xf32>
    %c0_155 = arith.constant 0 : index
    %c0_156 = arith.constant 0 : index
    %c0_157 = arith.constant 0 : index
    %344 = vector.load %arg5[%c0_155, %c0_156, %c0_157] : memref<3x32x32xf32, #tpu.memory_space<vmem>>, vector<1x32x32xf32>
    %345 = vector.shape_cast %344 : vector<1x32x32xf32> to vector<32x32xf32>
    %cst_158 = arith.constant dense<0.000000e+00> : vector<16x32xf32>
    %346 = tpu.matmul %343, %345, %cst_158 {dimension_numbers = #tpu.dot_dimension_numbers<[1], [0], [0], [1], [0, 0, 1, 1], [], []>} : vector<16x32xf32>, vector<32x32xf32>, vector<16x32xf32> -> vector<16x32xf32>
    %c0_159 = arith.constant 0 : index
    %c0_160 = arith.constant 0 : index
    %c0_161 = arith.constant 0 : index
    %347 = vector.load %arg7[%c0_159, %c0_160, %c0_161] : memref<3x1x32xf32, #tpu.memory_space<vmem>>, vector<1x1x32xf32>
    %348 = vector.shape_cast %347 : vector<1x1x32xf32> to vector<1x32xf32>
    %349 = vector.broadcast %348 : vector<1x32xf32> to vector<16x32xf32>
    %350 = arith.addf %346, %349 : vector<16x32xf32>
    %351 = vector.shape_cast %350 : vector<16x32xf32> to vector<8x2x32xf32>
    %c0_162 = arith.constant 0 : index
    %c0_163 = arith.constant 0 : index
    %c0_164 = arith.constant 0 : index
    %352 = vector.load %arg13[%c0_162, %c0_163, %c0_164] : memref<8x2x32xf32, #tpu.memory_space<vmem>>, vector<8x2x32xf32>
    tpu.vector_store %arg13[%c0_162, %c0_163, %c0_164], %351 {strides = array<i32>} : memref<8x2x32xf32, #tpu.memory_space<vmem>>, vector<8x2x32xf32>,
    %c1_165 = arith.constant 1 : index
    %c0_166 = arith.constant 0 : index
    %c0_167 = arith.constant 0 : index
    %353 = vector.load %arg5[%c1_165, %c0_166, %c0_167] : memref<3x32x32xf32, #tpu.memory_space<vmem>>, vector<1x32x32xf32>
    %354 = vector.shape_cast %353 : vector<1x32x32xf32> to vector<32x32xf32>
    %cst_168 = arith.constant dense<0.000000e+00> : vector<16x32xf32>
    %355 = tpu.matmul %343, %354, %cst_168 {dimension_numbers = #tpu.dot_dimension_numbers<[1], [0], [0], [1], [0, 0, 1, 1], [], []>} : vector<16x32xf32>, vector<32x32xf32>, vector<16x32xf32> -> vector<16x32xf32>
    %c1_169 = arith.constant 1 : index
    %c0_170 = arith.constant 0 : index
    %c0_171 = arith.constant 0 : index
    %356 = vector.load %arg7[%c1_169, %c0_170, %c0_171] : memref<3x1x32xf32, #tpu.memory_space<vmem>>, vector<1x1x32xf32>
    %357 = vector.shape_cast %356 : vector<1x1x32xf32> to vector<1x32xf32>
    %358 = vector.broadcast %357 : vector<1x32xf32> to vector<16x32xf32>
    %359 = arith.addf %355, %358 : vector<16x32xf32>
    %360 = vector.shape_cast %359 : vector<16x32xf32> to vector<8x2x32xf32>
    %c0_172 = arith.constant 0 : index
    %c0_173 = arith.constant 0 : index
    %c0_174 = arith.constant 0 : index
    %361 = vector.load %arg14[%c0_172, %c0_173, %c0_174] : memref<8x2x32xf32, #tpu.memory_space<vmem>>, vector<8x2x32xf32>
    tpu.vector_store %arg14[%c0_172, %c0_173, %c0_174], %360 {strides = array<i32>} : memref<8x2x32xf32, #tpu.memory_space<vmem>>, vector<8x2x32xf32>,
    %c2_175 = arith.constant 2 : index
    %c0_176 = arith.constant 0 : index
    %c0_177 = arith.constant 0 : index
    %362 = vector.load %arg5[%c2_175, %c0_176, %c0_177] : memref<3x32x32xf32, #tpu.memory_space<vmem>>, vector<1x32x32xf32>
    %363 = vector.shape_cast %362 : vector<1x32x32xf32> to vector<32x32xf32>
    %cst_178 = arith.constant dense<0.000000e+00> : vector<16x32xf32>
    %364 = tpu.matmul %343, %363, %cst_178 {dimension_numbers = #tpu.dot_dimension_numbers<[1], [0], [0], [1], [0, 0, 1, 1], [], []>} : vector<16x32xf32>, vector<32x32xf32>, vector<16x32xf32> -> vector<16x32xf32>
    %c2_179 = arith.constant 2 : index
    %c0_180 = arith.constant 0 : index
    %c0_181 = arith.constant 0 : index
    %365 = vector.load %arg7[%c2_179, %c0_180, %c0_181] : memref<3x1x32xf32, #tpu.memory_space<vmem>>, vector<1x1x32xf32>
    %366 = vector.shape_cast %365 : vector<1x1x32xf32> to vector<1x32xf32>
    %367 = vector.broadcast %366 : vector<1x32xf32> to vector<16x32xf32>
    %368 = arith.addf %364, %367 : vector<16x32xf32>
    %369 = vector.shape_cast %368 : vector<16x32xf32> to vector<8x2x32xf32>
    %c0_182 = arith.constant 0 : index
    %c0_183 = arith.constant 0 : index
    %c0_184 = arith.constant 0 : index
    %370 = vector.load %arg15[%c0_182, %c0_183, %c0_184] : memref<8x2x32xf32, #tpu.memory_space<vmem>>, vector<8x2x32xf32>
    tpu.vector_store %arg15[%c0_182, %c0_183, %c0_184], %369 {strides = array<i32>} : memref<8x2x32xf32, #tpu.memory_space<vmem>>, vector<8x2x32xf32>,
    %c0_185 = arith.constant 0 : index
    %c0_186 = arith.constant 0 : index
    %c0_187 = arith.constant 0 : index
    %371 = vector.load %arg6[%c0_185, %c0_186, %c0_187] : memref<3x32x32xbf16, #tpu.memory_space<vmem>>, vector<1x32x32xbf16>
    %372 = vector.shape_cast %371 : vector<1x32x32xbf16> to vector<32x32xbf16>
    %c1_188 = arith.constant 1 : index
    %c0_189 = arith.constant 0 : index
    %c0_190 = arith.constant 0 : index
    %373 = vector.load %arg6[%c1_188, %c0_189, %c0_190] : memref<3x32x32xbf16, #tpu.memory_space<vmem>>, vector<1x32x32xbf16>
    %374 = vector.shape_cast %373 : vector<1x32x32xbf16> to vector<32x32xbf16>
    %c2_191 = arith.constant 2 : index
    %c0_192 = arith.constant 0 : index
    %c0_193 = arith.constant 0 : index
    %375 = vector.load %arg6[%c2_191, %c0_192, %c0_193] : memref<3x32x32xbf16, #tpu.memory_space<vmem>>, vector<1x32x32xbf16>
    %376 = vector.shape_cast %375 : vector<1x32x32xbf16> to vector<32x32xbf16>
    %c0_194 = arith.constant 0 : index
    %c0_195 = arith.constant 0 : index
    %377 = vector.load %arg8[%c0_194, %c0_195] : memref<1x32xf32, #tpu.memory_space<vmem>>, vector<1x32xf32>
    %378 = vector.shape_cast %377 : vector<1x32xf32> to vector<1x32xf32>
    %379 = vector.broadcast %378 : vector<1x32xf32> to vector<2x32xf32>
    %cst_196 = arith.constant 0.000000e+00 : f32
    %380 = vector.broadcast %cst_196 : f32 to vector<2x32xf32>
    %c0_i32_197 = arith.constant 0 : i32
    %381 = arith.truncf %380 : vector<2x32xf32> to vector<2x32xbf16>
    %cst_198 = arith.constant dense<0.000000e+00> : vector<2x32xf32>
    %382 = tpu.matmul %381, %372, %cst_198 {dimension_numbers = #tpu.dot_dimension_numbers<[1], [0], [0], [1], [0, 0, 1, 1], [], []>} : vector<2x32xbf16>, vector<32x32xbf16>, vector<2x32xf32> -> vector<2x32xf32>
    %cst_199 = arith.constant dense<0.000000e+00> : vector<2x32xf32>
    %383 = tpu.matmul %381, %374, %cst_199 {dimension_numbers = #tpu.dot_dimension_numbers<[1], [0], [0], [1], [0, 0, 1, 1], [], []>} : vector<2x32xbf16>, vector<32x32xbf16>, vector<2x32xf32> -> vector<2x32xf32>
    %cst_200 = arith.constant dense<0.000000e+00> : vector<2x32xf32>
    %384 = tpu.matmul %381, %376, %cst_200 {dimension_numbers = #tpu.dot_dimension_numbers<[1], [0], [0], [1], [0, 0, 1, 1], [], []>} : vector<2x32xbf16>, vector<32x32xbf16>, vector<2x32xf32> -> vector<2x32xf32>
    %385 = arith.index_cast %c0_i32_197 : i32 to index
    %c0_201 = arith.constant 0 : index
    %c0_202 = arith.constant 0 : index
    %386 = vector.load %arg13[%385, %c0_201, %c0_202] : memref<8x2x32xf32, #tpu.memory_space<vmem>>, vector<1x2x32xf32>
    %387 = vector.shape_cast %386 : vector<1x2x32xf32> to vector<2x32xf32>
    %388 = arith.addf %387, %382 : vector<2x32xf32>
    %389 = arith.negf %388 : vector<2x32xf32>
    %390 = math.exp %389 : vector<2x32xf32>
    %cst_203 = arith.constant 1.000000e+00 : f32
    %391 = vector.broadcast %cst_203 : f32 to vector<2x32xf32>
    %392 = arith.addf %391, %390 : vector<2x32xf32>
    %393 = arith.divf %391, %392 : vector<2x32xf32>
    %394 = arith.index_cast %c0_i32_197 : i32 to index
    %c0_204 = arith.constant 0 : index
    %c0_205 = arith.constant 0 : index
    %395 = vector.load %arg14[%394, %c0_204, %c0_205] : memref<8x2x32xf32, #tpu.memory_space<vmem>>, vector<1x2x32xf32>
    %396 = vector.shape_cast %395 : vector<1x2x32xf32> to vector<2x32xf32>
    %397 = arith.addf %396, %383 : vector<2x32xf32>
    %398 = arith.negf %397 : vector<2x32xf32>
    %399 = math.exp %398 : vector<2x32xf32>
    %cst_206 = arith.constant 1.000000e+00 : f32
    %400 = vector.broadcast %cst_206 : f32 to vector<2x32xf32>
    %401 = arith.addf %400, %399 : vector<2x32xf32>
    %402 = arith.divf %400, %401 : vector<2x32xf32>
    %403 = arith.index_cast %c0_i32_197 : i32 to index
    %c0_207 = arith.constant 0 : index
    %c0_208 = arith.constant 0 : index
    %404 = vector.load %arg15[%403, %c0_207, %c0_208] : memref<8x2x32xf32, #tpu.memory_space<vmem>>, vector<1x2x32xf32>
    %405 = vector.shape_cast %404 : vector<1x2x32xf32> to vector<2x32xf32>
    %406 = arith.addf %384, %379 : vector<2x32xf32>
    %407 = arith.mulf %393, %406 : vector<2x32xf32>
    %408 = arith.addf %405, %407 : vector<2x32xf32>
    %409 = math.tanh %408 : vector<2x32xf32>
    %cst_209 = arith.constant 1.000000e+00 : f32
    %410 = vector.broadcast %cst_209 : f32 to vector<2x32xf32>
    %411 = arith.subf %410, %402 : vector<2x32xf32>
    %412 = arith.mulf %411, %409 : vector<2x32xf32>
    %413 = arith.mulf %402, %380 : vector<2x32xf32>
    %414 = arith.addf %412, %413 : vector<2x32xf32>
    %c1_i32_210 = arith.constant 1 : i32
    %415 = arith.truncf %414 : vector<2x32xf32> to vector<2x32xbf16>
    %cst_211 = arith.constant dense<0.000000e+00> : vector<2x32xf32>
    %416 = tpu.matmul %415, %372, %cst_211 {dimension_numbers = #tpu.dot_dimension_numbers<[1], [0], [0], [1], [0, 0, 1, 1], [], []>} : vector<2x32xbf16>, vector<32x32xbf16>, vector<2x32xf32> -> vector<2x32xf32>
    %cst_212 = arith.constant dense<0.000000e+00> : vector<2x32xf32>
    %417 = tpu.matmul %415, %374, %cst_212 {dimension_numbers = #tpu.dot_dimension_numbers<[1], [0], [0], [1], [0, 0, 1, 1], [], []>} : vector<2x32xbf16>, vector<32x32xbf16>, vector<2x32xf32> -> vector<2x32xf32>
    %cst_213 = arith.constant dense<0.000000e+00> : vector<2x32xf32>
    %418 = tpu.matmul %415, %376, %cst_213 {dimension_numbers = #tpu.dot_dimension_numbers<[1], [0], [0], [1], [0, 0, 1, 1], [], []>} : vector<2x32xbf16>, vector<32x32xbf16>, vector<2x32xf32> -> vector<2x32xf32>
    %419 = arith.index_cast %c1_i32_210 : i32 to index
    %c0_214 = arith.constant 0 : index
    %c0_215 = arith.constant 0 : index
    %420 = vector.load %arg13[%419, %c0_214, %c0_215] : memref<8x2x32xf32, #tpu.memory_space<vmem>>, vector<1x2x32xf32>
    %421 = vector.shape_cast %420 : vector<1x2x32xf32> to vector<2x32xf32>
    %422 = arith.addf %421, %416 : vector<2x32xf32>
    %423 = arith.negf %422 : vector<2x32xf32>
    %424 = math.exp %423 : vector<2x32xf32>
    %cst_216 = arith.constant 1.000000e+00 : f32
    %425 = vector.broadcast %cst_216 : f32 to vector<2x32xf32>
    %426 = arith.addf %425, %424 : vector<2x32xf32>
    %427 = arith.divf %425, %426 : vector<2x32xf32>
    %428 = arith.index_cast %c1_i32_210 : i32 to index
    %c0_217 = arith.constant 0 : index
    %c0_218 = arith.constant 0 : index
    %429 = vector.load %arg14[%428, %c0_217, %c0_218] : memref<8x2x32xf32, #tpu.memory_space<vmem>>, vector<1x2x32xf32>
    %430 = vector.shape_cast %429 : vector<1x2x32xf32> to vector<2x32xf32>
    %431 = arith.addf %430, %417 : vector<2x32xf32>
    %432 = arith.negf %431 : vector<2x32xf32>
    %433 = math.exp %432 : vector<2x32xf32>
    %cst_219 = arith.constant 1.000000e+00 : f32
    %434 = vector.broadcast %cst_219 : f32 to vector<2x32xf32>
    %435 = arith.addf %434, %433 : vector<2x32xf32>
    %436 = arith.divf %434, %435 : vector<2x32xf32>
    %437 = arith.index_cast %c1_i32_210 : i32 to index
    %c0_220 = arith.constant 0 : index
    %c0_221 = arith.constant 0 : index
    %438 = vector.load %arg15[%437, %c0_220, %c0_221] : memref<8x2x32xf32, #tpu.memory_space<vmem>>, vector<1x2x32xf32>
    %439 = vector.shape_cast %438 : vector<1x2x32xf32> to vector<2x32xf32>
    %440 = arith.addf %418, %379 : vector<2x32xf32>
    %441 = arith.mulf %427, %440 : vector<2x32xf32>
    %442 = arith.addf %439, %441 : vector<2x32xf32>
    %443 = math.tanh %442 : vector<2x32xf32>
    %cst_222 = arith.constant 1.000000e+00 : f32
    %444 = vector.broadcast %cst_222 : f32 to vector<2x32xf32>
    %445 = arith.subf %444, %436 : vector<2x32xf32>
    %446 = arith.mulf %445, %443 : vector<2x32xf32>
    %447 = arith.mulf %436, %414 : vector<2x32xf32>
    %448 = arith.addf %446, %447 : vector<2x32xf32>
    %c2_i32_223 = arith.constant 2 : i32
    %449 = arith.truncf %448 : vector<2x32xf32> to vector<2x32xbf16>
    %cst_224 = arith.constant dense<0.000000e+00> : vector<2x32xf32>
    %450 = tpu.matmul %449, %372, %cst_224 {dimension_numbers = #tpu.dot_dimension_numbers<[1], [0], [0], [1], [0, 0, 1, 1], [], []>} : vector<2x32xbf16>, vector<32x32xbf16>, vector<2x32xf32> -> vector<2x32xf32>
    %cst_225 = arith.constant dense<0.000000e+00> : vector<2x32xf32>
    %451 = tpu.matmul %449, %374, %cst_225 {dimension_numbers = #tpu.dot_dimension_numbers<[1], [0], [0], [1], [0, 0, 1, 1], [], []>} : vector<2x32xbf16>, vector<32x32xbf16>, vector<2x32xf32> -> vector<2x32xf32>
    %cst_226 = arith.constant dense<0.000000e+00> : vector<2x32xf32>
    %452 = tpu.matmul %449, %376, %cst_226 {dimension_numbers = #tpu.dot_dimension_numbers<[1], [0], [0], [1], [0, 0, 1, 1], [], []>} : vector<2x32xbf16>, vector<32x32xbf16>, vector<2x32xf32> -> vector<2x32xf32>
    %453 = arith.index_cast %c2_i32_223 : i32 to index
    %c0_227 = arith.constant 0 : index
    %c0_228 = arith.constant 0 : index
    %454 = vector.load %arg13[%453, %c0_227, %c0_228] : memref<8x2x32xf32, #tpu.memory_space<vmem>>, vector<1x2x32xf32>
    %455 = vector.shape_cast %454 : vector<1x2x32xf32> to vector<2x32xf32>
    %456 = arith.addf %455, %450 : vector<2x32xf32>
    %457 = arith.negf %456 : vector<2x32xf32>
    %458 = math.exp %457 : vector<2x32xf32>
    %cst_229 = arith.constant 1.000000e+00 : f32
    %459 = vector.broadcast %cst_229 : f32 to vector<2x32xf32>
    %460 = arith.addf %459, %458 : vector<2x32xf32>
    %461 = arith.divf %459, %460 : vector<2x32xf32>
    %462 = arith.index_cast %c2_i32_223 : i32 to index
    %c0_230 = arith.constant 0 : index
    %c0_231 = arith.constant 0 : index
    %463 = vector.load %arg14[%462, %c0_230, %c0_231] : memref<8x2x32xf32, #tpu.memory_space<vmem>>, vector<1x2x32xf32>
    %464 = vector.shape_cast %463 : vector<1x2x32xf32> to vector<2x32xf32>
    %465 = arith.addf %464, %451 : vector<2x32xf32>
    %466 = arith.negf %465 : vector<2x32xf32>
    %467 = math.exp %466 : vector<2x32xf32>
    %cst_232 = arith.constant 1.000000e+00 : f32
    %468 = vector.broadcast %cst_232 : f32 to vector<2x32xf32>
    %469 = arith.addf %468, %467 : vector<2x32xf32>
    %470 = arith.divf %468, %469 : vector<2x32xf32>
    %471 = arith.index_cast %c2_i32_223 : i32 to index
    %c0_233 = arith.constant 0 : index
    %c0_234 = arith.constant 0 : index
    %472 = vector.load %arg15[%471, %c0_233, %c0_234] : memref<8x2x32xf32, #tpu.memory_space<vmem>>, vector<1x2x32xf32>
    %473 = vector.shape_cast %472 : vector<1x2x32xf32> to vector<2x32xf32>
    %474 = arith.addf %452, %379 : vector<2x32xf32>
    %475 = arith.mulf %461, %474 : vector<2x32xf32>
    %476 = arith.addf %473, %475 : vector<2x32xf32>
    %477 = math.tanh %476 : vector<2x32xf32>
    %cst_235 = arith.constant 1.000000e+00 : f32
    %478 = vector.broadcast %cst_235 : f32 to vector<2x32xf32>
    %479 = arith.subf %478, %470 : vector<2x32xf32>
    %480 = arith.mulf %479, %477 : vector<2x32xf32>
    %481 = arith.mulf %470, %448 : vector<2x32xf32>
    %482 = arith.addf %480, %481 : vector<2x32xf32>
    %c3_i32_236 = arith.constant 3 : i32
    %483 = arith.truncf %482 : vector<2x32xf32> to vector<2x32xbf16>
    %cst_237 = arith.constant dense<0.000000e+00> : vector<2x32xf32>
    %484 = tpu.matmul %483, %372, %cst_237 {dimension_numbers = #tpu.dot_dimension_numbers<[1], [0], [0], [1], [0, 0, 1, 1], [], []>} : vector<2x32xbf16>, vector<32x32xbf16>, vector<2x32xf32> -> vector<2x32xf32>
    %cst_238 = arith.constant dense<0.000000e+00> : vector<2x32xf32>
    %485 = tpu.matmul %483, %374, %cst_238 {dimension_numbers = #tpu.dot_dimension_numbers<[1], [0], [0], [1], [0, 0, 1, 1], [], []>} : vector<2x32xbf16>, vector<32x32xbf16>, vector<2x32xf32> -> vector<2x32xf32>
    %cst_239 = arith.constant dense<0.000000e+00> : vector<2x32xf32>
    %486 = tpu.matmul %483, %376, %cst_239 {dimension_numbers = #tpu.dot_dimension_numbers<[1], [0], [0], [1], [0, 0, 1, 1], [], []>} : vector<2x32xbf16>, vector<32x32xbf16>, vector<2x32xf32> -> vector<2x32xf32>
    %487 = arith.index_cast %c3_i32_236 : i32 to index
    %c0_240 = arith.constant 0 : index
    %c0_241 = arith.constant 0 : index
    %488 = vector.load %arg13[%487, %c0_240, %c0_241] : memref<8x2x32xf32, #tpu.memory_space<vmem>>, vector<1x2x32xf32>
    %489 = vector.shape_cast %488 : vector<1x2x32xf32> to vector<2x32xf32>
    %490 = arith.addf %489, %484 : vector<2x32xf32>
    %491 = arith.negf %490 : vector<2x32xf32>
    %492 = math.exp %491 : vector<2x32xf32>
    %cst_242 = arith.constant 1.000000e+00 : f32
    %493 = vector.broadcast %cst_242 : f32 to vector<2x32xf32>
    %494 = arith.addf %493, %492 : vector<2x32xf32>
    %495 = arith.divf %493, %494 : vector<2x32xf32>
    %496 = arith.index_cast %c3_i32_236 : i32 to index
    %c0_243 = arith.constant 0 : index
    %c0_244 = arith.constant 0 : index
    %497 = vector.load %arg14[%496, %c0_243, %c0_244] : memref<8x2x32xf32, #tpu.memory_space<vmem>>, vector<1x2x32xf32>
    %498 = vector.shape_cast %497 : vector<1x2x32xf32> to vector<2x32xf32>
    %499 = arith.addf %498, %485 : vector<2x32xf32>
    %500 = arith.negf %499 : vector<2x32xf32>
    %501 = math.exp %500 : vector<2x32xf32>
    %cst_245 = arith.constant 1.000000e+00 : f32
    %502 = vector.broadcast %cst_245 : f32 to vector<2x32xf32>
    %503 = arith.addf %502, %501 : vector<2x32xf32>
    %504 = arith.divf %502, %503 : vector<2x32xf32>
    %505 = arith.index_cast %c3_i32_236 : i32 to index
    %c0_246 = arith.constant 0 : index
    %c0_247 = arith.constant 0 : index
    %506 = vector.load %arg15[%505, %c0_246, %c0_247] : memref<8x2x32xf32, #tpu.memory_space<vmem>>, vector<1x2x32xf32>
    %507 = vector.shape_cast %506 : vector<1x2x32xf32> to vector<2x32xf32>
    %508 = arith.addf %486, %379 : vector<2x32xf32>
    %509 = arith.mulf %495, %508 : vector<2x32xf32>
    %510 = arith.addf %507, %509 : vector<2x32xf32>
    %511 = math.tanh %510 : vector<2x32xf32>
    %cst_248 = arith.constant 1.000000e+00 : f32
    %512 = vector.broadcast %cst_248 : f32 to vector<2x32xf32>
    %513 = arith.subf %512, %504 : vector<2x32xf32>
    %514 = arith.mulf %513, %511 : vector<2x32xf32>
    %515 = arith.mulf %504, %482 : vector<2x32xf32>
    %516 = arith.addf %514, %515 : vector<2x32xf32>
    %c4_i32_249 = arith.constant 4 : i32
    %517 = arith.truncf %516 : vector<2x32xf32> to vector<2x32xbf16>
    %cst_250 = arith.constant dense<0.000000e+00> : vector<2x32xf32>
    %518 = tpu.matmul %517, %372, %cst_250 {dimension_numbers = #tpu.dot_dimension_numbers<[1], [0], [0], [1], [0, 0, 1, 1], [], []>} : vector<2x32xbf16>, vector<32x32xbf16>, vector<2x32xf32> -> vector<2x32xf32>
    %cst_251 = arith.constant dense<0.000000e+00> : vector<2x32xf32>
    %519 = tpu.matmul %517, %374, %cst_251 {dimension_numbers = #tpu.dot_dimension_numbers<[1], [0], [0], [1], [0, 0, 1, 1], [], []>} : vector<2x32xbf16>, vector<32x32xbf16>, vector<2x32xf32> -> vector<2x32xf32>
    %cst_252 = arith.constant dense<0.000000e+00> : vector<2x32xf32>
    %520 = tpu.matmul %517, %376, %cst_252 {dimension_numbers = #tpu.dot_dimension_numbers<[1], [0], [0], [1], [0, 0, 1, 1], [], []>} : vector<2x32xbf16>, vector<32x32xbf16>, vector<2x32xf32> -> vector<2x32xf32>
    %521 = arith.index_cast %c4_i32_249 : i32 to index
    %c0_253 = arith.constant 0 : index
    %c0_254 = arith.constant 0 : index
    %522 = vector.load %arg13[%521, %c0_253, %c0_254] : memref<8x2x32xf32, #tpu.memory_space<vmem>>, vector<1x2x32xf32>
    %523 = vector.shape_cast %522 : vector<1x2x32xf32> to vector<2x32xf32>
    %524 = arith.addf %523, %518 : vector<2x32xf32>
    %525 = arith.negf %524 : vector<2x32xf32>
    %526 = math.exp %525 : vector<2x32xf32>
    %cst_255 = arith.constant 1.000000e+00 : f32
    %527 = vector.broadcast %cst_255 : f32 to vector<2x32xf32>
    %528 = arith.addf %527, %526 : vector<2x32xf32>
    %529 = arith.divf %527, %528 : vector<2x32xf32>
    %530 = arith.index_cast %c4_i32_249 : i32 to index
    %c0_256 = arith.constant 0 : index
    %c0_257 = arith.constant 0 : index
    %531 = vector.load %arg14[%530, %c0_256, %c0_257] : memref<8x2x32xf32, #tpu.memory_space<vmem>>, vector<1x2x32xf32>
    %532 = vector.shape_cast %531 : vector<1x2x32xf32> to vector<2x32xf32>
    %533 = arith.addf %532, %519 : vector<2x32xf32>
    %534 = arith.negf %533 : vector<2x32xf32>
    %535 = math.exp %534 : vector<2x32xf32>
    %cst_258 = arith.constant 1.000000e+00 : f32
    %536 = vector.broadcast %cst_258 : f32 to vector<2x32xf32>
    %537 = arith.addf %536, %535 : vector<2x32xf32>
    %538 = arith.divf %536, %537 : vector<2x32xf32>
    %539 = arith.index_cast %c4_i32_249 : i32 to index
    %c0_259 = arith.constant 0 : index
    %c0_260 = arith.constant 0 : index
    %540 = vector.load %arg15[%539, %c0_259, %c0_260] : memref<8x2x32xf32, #tpu.memory_space<vmem>>, vector<1x2x32xf32>
    %541 = vector.shape_cast %540 : vector<1x2x32xf32> to vector<2x32xf32>
    %542 = arith.addf %520, %379 : vector<2x32xf32>
    %543 = arith.mulf %529, %542 : vector<2x32xf32>
    %544 = arith.addf %541, %543 : vector<2x32xf32>
    %545 = math.tanh %544 : vector<2x32xf32>
    %cst_261 = arith.constant 1.000000e+00 : f32
    %546 = vector.broadcast %cst_261 : f32 to vector<2x32xf32>
    %547 = arith.subf %546, %538 : vector<2x32xf32>
    %548 = arith.mulf %547, %545 : vector<2x32xf32>
    %549 = arith.mulf %538, %516 : vector<2x32xf32>
    %550 = arith.addf %548, %549 : vector<2x32xf32>
    %c5_i32_262 = arith.constant 5 : i32
    %551 = arith.truncf %550 : vector<2x32xf32> to vector<2x32xbf16>
    %cst_263 = arith.constant dense<0.000000e+00> : vector<2x32xf32>
    %552 = tpu.matmul %551, %372, %cst_263 {dimension_numbers = #tpu.dot_dimension_numbers<[1], [0], [0], [1], [0, 0, 1, 1], [], []>} : vector<2x32xbf16>, vector<32x32xbf16>, vector<2x32xf32> -> vector<2x32xf32>
    %cst_264 = arith.constant dense<0.000000e+00> : vector<2x32xf32>
    %553 = tpu.matmul %551, %374, %cst_264 {dimension_numbers = #tpu.dot_dimension_numbers<[1], [0], [0], [1], [0, 0, 1, 1], [], []>} : vector<2x32xbf16>, vector<32x32xbf16>, vector<2x32xf32> -> vector<2x32xf32>
    %cst_265 = arith.constant dense<0.000000e+00> : vector<2x32xf32>
    %554 = tpu.matmul %551, %376, %cst_265 {dimension_numbers = #tpu.dot_dimension_numbers<[1], [0], [0], [1], [0, 0, 1, 1], [], []>} : vector<2x32xbf16>, vector<32x32xbf16>, vector<2x32xf32> -> vector<2x32xf32>
    %555 = arith.index_cast %c5_i32_262 : i32 to index
    %c0_266 = arith.constant 0 : index
    %c0_267 = arith.constant 0 : index
    %556 = vector.load %arg13[%555, %c0_266, %c0_267] : memref<8x2x32xf32, #tpu.memory_space<vmem>>, vector<1x2x32xf32>
    %557 = vector.shape_cast %556 : vector<1x2x32xf32> to vector<2x32xf32>
    %558 = arith.addf %557, %552 : vector<2x32xf32>
    %559 = arith.negf %558 : vector<2x32xf32>
    %560 = math.exp %559 : vector<2x32xf32>
    %cst_268 = arith.constant 1.000000e+00 : f32
    %561 = vector.broadcast %cst_268 : f32 to vector<2x32xf32>
    %562 = arith.addf %561, %560 : vector<2x32xf32>
    %563 = arith.divf %561, %562 : vector<2x32xf32>
    %564 = arith.index_cast %c5_i32_262 : i32 to index
    %c0_269 = arith.constant 0 : index
    %c0_270 = arith.constant 0 : index
    %565 = vector.load %arg14[%564, %c0_269, %c0_270] : memref<8x2x32xf32, #tpu.memory_space<vmem>>, vector<1x2x32xf32>
    %566 = vector.shape_cast %565 : vector<1x2x32xf32> to vector<2x32xf32>
    %567 = arith.addf %566, %553 : vector<2x32xf32>
    %568 = arith.negf %567 : vector<2x32xf32>
    %569 = math.exp %568 : vector<2x32xf32>
    %cst_271 = arith.constant 1.000000e+00 : f32
    %570 = vector.broadcast %cst_271 : f32 to vector<2x32xf32>
    %571 = arith.addf %570, %569 : vector<2x32xf32>
    %572 = arith.divf %570, %571 : vector<2x32xf32>
    %573 = arith.index_cast %c5_i32_262 : i32 to index
    %c0_272 = arith.constant 0 : index
    %c0_273 = arith.constant 0 : index
    %574 = vector.load %arg15[%573, %c0_272, %c0_273] : memref<8x2x32xf32, #tpu.memory_space<vmem>>, vector<1x2x32xf32>
    %575 = vector.shape_cast %574 : vector<1x2x32xf32> to vector<2x32xf32>
    %576 = arith.addf %554, %379 : vector<2x32xf32>
    %577 = arith.mulf %563, %576 : vector<2x32xf32>
    %578 = arith.addf %575, %577 : vector<2x32xf32>
    %579 = math.tanh %578 : vector<2x32xf32>
    %cst_274 = arith.constant 1.000000e+00 : f32
    %580 = vector.broadcast %cst_274 : f32 to vector<2x32xf32>
    %581 = arith.subf %580, %572 : vector<2x32xf32>
    %582 = arith.mulf %581, %579 : vector<2x32xf32>
    %583 = arith.mulf %572, %550 : vector<2x32xf32>
    %584 = arith.addf %582, %583 : vector<2x32xf32>
    %c6_i32_275 = arith.constant 6 : i32
    %585 = arith.truncf %584 : vector<2x32xf32> to vector<2x32xbf16>
    %cst_276 = arith.constant dense<0.000000e+00> : vector<2x32xf32>
    %586 = tpu.matmul %585, %372, %cst_276 {dimension_numbers = #tpu.dot_dimension_numbers<[1], [0], [0], [1], [0, 0, 1, 1], [], []>} : vector<2x32xbf16>, vector<32x32xbf16>, vector<2x32xf32> -> vector<2x32xf32>
    %cst_277 = arith.constant dense<0.000000e+00> : vector<2x32xf32>
    %587 = tpu.matmul %585, %374, %cst_277 {dimension_numbers = #tpu.dot_dimension_numbers<[1], [0], [0], [1], [0, 0, 1, 1], [], []>} : vector<2x32xbf16>, vector<32x32xbf16>, vector<2x32xf32> -> vector<2x32xf32>
    %cst_278 = arith.constant dense<0.000000e+00> : vector<2x32xf32>
    %588 = tpu.matmul %585, %376, %cst_278 {dimension_numbers = #tpu.dot_dimension_numbers<[1], [0], [0], [1], [0, 0, 1, 1], [], []>} : vector<2x32xbf16>, vector<32x32xbf16>, vector<2x32xf32> -> vector<2x32xf32>
    %589 = arith.index_cast %c6_i32_275 : i32 to index
    %c0_279 = arith.constant 0 : index
    %c0_280 = arith.constant 0 : index
    %590 = vector.load %arg13[%589, %c0_279, %c0_280] : memref<8x2x32xf32, #tpu.memory_space<vmem>>, vector<1x2x32xf32>
    %591 = vector.shape_cast %590 : vector<1x2x32xf32> to vector<2x32xf32>
    %592 = arith.addf %591, %586 : vector<2x32xf32>
    %593 = arith.negf %592 : vector<2x32xf32>
    %594 = math.exp %593 : vector<2x32xf32>
    %cst_281 = arith.constant 1.000000e+00 : f32
    %595 = vector.broadcast %cst_281 : f32 to vector<2x32xf32>
    %596 = arith.addf %595, %594 : vector<2x32xf32>
    %597 = arith.divf %595, %596 : vector<2x32xf32>
    %598 = arith.index_cast %c6_i32_275 : i32 to index
    %c0_282 = arith.constant 0 : index
    %c0_283 = arith.constant 0 : index
    %599 = vector.load %arg14[%598, %c0_282, %c0_283] : memref<8x2x32xf32, #tpu.memory_space<vmem>>, vector<1x2x32xf32>
    %600 = vector.shape_cast %599 : vector<1x2x32xf32> to vector<2x32xf32>
    %601 = arith.addf %600, %587 : vector<2x32xf32>
    %602 = arith.negf %601 : vector<2x32xf32>
    %603 = math.exp %602 : vector<2x32xf32>
    %cst_284 = arith.constant 1.000000e+00 : f32
    %604 = vector.broadcast %cst_284 : f32 to vector<2x32xf32>
    %605 = arith.addf %604, %603 : vector<2x32xf32>
    %606 = arith.divf %604, %605 : vector<2x32xf32>
    %607 = arith.index_cast %c6_i32_275 : i32 to index
    %c0_285 = arith.constant 0 : index
    %c0_286 = arith.constant 0 : index
    %608 = vector.load %arg15[%607, %c0_285, %c0_286] : memref<8x2x32xf32, #tpu.memory_space<vmem>>, vector<1x2x32xf32>
    %609 = vector.shape_cast %608 : vector<1x2x32xf32> to vector<2x32xf32>
    %610 = arith.addf %588, %379 : vector<2x32xf32>
    %611 = arith.mulf %597, %610 : vector<2x32xf32>
    %612 = arith.addf %609, %611 : vector<2x32xf32>
    %613 = math.tanh %612 : vector<2x32xf32>
    %cst_287 = arith.constant 1.000000e+00 : f32
    %614 = vector.broadcast %cst_287 : f32 to vector<2x32xf32>
    %615 = arith.subf %614, %606 : vector<2x32xf32>
    %616 = arith.mulf %615, %613 : vector<2x32xf32>
    %617 = arith.mulf %606, %584 : vector<2x32xf32>
    %618 = arith.addf %616, %617 : vector<2x32xf32>
    %c7_i32_288 = arith.constant 7 : i32
    %619 = arith.truncf %618 : vector<2x32xf32> to vector<2x32xbf16>
    %cst_289 = arith.constant dense<0.000000e+00> : vector<2x32xf32>
    %620 = tpu.matmul %619, %372, %cst_289 {dimension_numbers = #tpu.dot_dimension_numbers<[1], [0], [0], [1], [0, 0, 1, 1], [], []>} : vector<2x32xbf16>, vector<32x32xbf16>, vector<2x32xf32> -> vector<2x32xf32>
    %cst_290 = arith.constant dense<0.000000e+00> : vector<2x32xf32>
    %621 = tpu.matmul %619, %374, %cst_290 {dimension_numbers = #tpu.dot_dimension_numbers<[1], [0], [0], [1], [0, 0, 1, 1], [], []>} : vector<2x32xbf16>, vector<32x32xbf16>, vector<2x32xf32> -> vector<2x32xf32>
    %cst_291 = arith.constant dense<0.000000e+00> : vector<2x32xf32>
    %622 = tpu.matmul %619, %376, %cst_291 {dimension_numbers = #tpu.dot_dimension_numbers<[1], [0], [0], [1], [0, 0, 1, 1], [], []>} : vector<2x32xbf16>, vector<32x32xbf16>, vector<2x32xf32> -> vector<2x32xf32>
    %623 = arith.index_cast %c7_i32_288 : i32 to index
    %c0_292 = arith.constant 0 : index
    %c0_293 = arith.constant 0 : index
    %624 = vector.load %arg13[%623, %c0_292, %c0_293] : memref<8x2x32xf32, #tpu.memory_space<vmem>>, vector<1x2x32xf32>
    %625 = vector.shape_cast %624 : vector<1x2x32xf32> to vector<2x32xf32>
    %626 = arith.addf %625, %620 : vector<2x32xf32>
    %627 = arith.negf %626 : vector<2x32xf32>
    %628 = math.exp %627 : vector<2x32xf32>
    %cst_294 = arith.constant 1.000000e+00 : f32
    %629 = vector.broadcast %cst_294 : f32 to vector<2x32xf32>
    %630 = arith.addf %629, %628 : vector<2x32xf32>
    %631 = arith.divf %629, %630 : vector<2x32xf32>
    %632 = arith.index_cast %c7_i32_288 : i32 to index
    %c0_295 = arith.constant 0 : index
    %c0_296 = arith.constant 0 : index
    %633 = vector.load %arg14[%632, %c0_295, %c0_296] : memref<8x2x32xf32, #tpu.memory_space<vmem>>, vector<1x2x32xf32>
    %634 = vector.shape_cast %633 : vector<1x2x32xf32> to vector<2x32xf32>
    %635 = arith.addf %634, %621 : vector<2x32xf32>
    %636 = arith.negf %635 : vector<2x32xf32>
    %637 = math.exp %636 : vector<2x32xf32>
    %cst_297 = arith.constant 1.000000e+00 : f32
    %638 = vector.broadcast %cst_297 : f32 to vector<2x32xf32>
    %639 = arith.addf %638, %637 : vector<2x32xf32>
    %640 = arith.divf %638, %639 : vector<2x32xf32>
    %641 = arith.index_cast %c7_i32_288 : i32 to index
    %c0_298 = arith.constant 0 : index
    %c0_299 = arith.constant 0 : index
    %642 = vector.load %arg15[%641, %c0_298, %c0_299] : memref<8x2x32xf32, #tpu.memory_space<vmem>>, vector<1x2x32xf32>
    %643 = vector.shape_cast %642 : vector<1x2x32xf32> to vector<2x32xf32>
    %644 = arith.addf %622, %379 : vector<2x32xf32>
    %645 = arith.mulf %631, %644 : vector<2x32xf32>
    %646 = arith.addf %643, %645 : vector<2x32xf32>
    %647 = math.tanh %646 : vector<2x32xf32>
    %cst_300 = arith.constant 1.000000e+00 : f32
    %648 = vector.broadcast %cst_300 : f32 to vector<2x32xf32>
    %649 = arith.subf %648, %640 : vector<2x32xf32>
    %650 = arith.mulf %649, %647 : vector<2x32xf32>
    %651 = arith.mulf %640, %618 : vector<2x32xf32>
    %652 = arith.addf %650, %651 : vector<2x32xf32>
    %c8_i32_301 = arith.constant 8 : i32
    %c0_302 = arith.constant 0 : index
    %c0_303 = arith.constant 0 : index
    %653 = vector.load %arg9[%c0_302, %c0_303] : memref<32x4xf32, #tpu.memory_space<vmem>>, vector<32x4xf32>
    %cst_304 = arith.constant dense<0.000000e+00> : vector<2x4xf32>
    %654 = tpu.matmul %652, %653, %cst_304 {dimension_numbers = #tpu.dot_dimension_numbers<[1], [0], [0], [1], [0, 0, 1, 1], [], []>} : vector<2x32xf32>, vector<32x4xf32>, vector<2x4xf32> -> vector<2x4xf32>
    %c0_305 = arith.constant 0 : index
    %c0_306 = arith.constant 0 : index
    %655 = vector.load %arg10[%c0_305, %c0_306] : memref<1x4xf32, #tpu.memory_space<vmem>>, vector<1x4xf32>
    %656 = vector.broadcast %655 : vector<1x4xf32> to vector<2x4xf32>
    %657 = arith.addf %654, %656 : vector<2x4xf32>
    %c0_307 = arith.constant 0 : index
    %c0_308 = arith.constant 0 : index
    %658 = vector.load %arg11[%c0_307, %c0_308] : memref<2x4xf32, #tpu.memory_space<vmem>>, vector<2x4xf32>
    tpu.vector_store %arg11[%c0_307, %c0_308], %657 {strides = array<i32>} : memref<2x4xf32, #tpu.memory_space<vmem>>, vector<2x4xf32>,
    return
  }
}

</mosaic_0001>

<llo_original>
// kernel: tpu_custom_call.1
$region0: #{tpu_custom_call.1}
  #allocation0 [shape = 'u32[]', space=smem, size = 0x4, offset = 0x4, fixed_abs, tag = 'smem constant byte address 0x4 - core index']
  #allocation1 [shape = 'u32[144,128]{1,0:T(1,128)}', space=vmem, size = 0x12000, scoped, tag = 'internal scratch']
  #allocation2 [shape = 'f32[8,2,32]{2,1,0:T(2,128)}', space=vmem, size = 0x2000, scoped, tag = 'scratch operand']
  #allocation3 [shape = 'f32[8,2,32]{2,1,0:T(2,128)}', space=vmem, size = 0x2000, scoped, tag = 'scratch operand']
  #allocation4 [shape = 'f32[8,2,32]{2,1,0:T(2,128)}', space=vmem, size = 0x2000, scoped, tag = 'scratch operand']
  #allocation5 [shape = 'f32[8,2,32]{2,1,0:T(2,128)}', space=vmem, size = 0x2000, scoped, tag = 'scratch operand']
  %s0 = inlined_call_operand.vmem [shape: f32[16,4], index: 0, kind: input, shape index: {}]
  %s1 = inlined_call_operand.hbm [shape: f32[3,4,32], index: 1, kind: input, shape index: {}]
  %s2 = inlined_call_operand.vmem [shape: bf16[3,32,32], index: 2, kind: input, shape index: {}]
  %s3 = inlined_call_operand.vmem [shape: f32[3,1,32], index: 3, kind: input, shape index: {}]
  %s4 = inlined_call_operand.vmem [shape: f32[1,32], index: 4, kind: input, shape index: {}]
  %s5 = inlined_call_operand.hbm [shape: f32[3,32,32], index: 5, kind: input, shape index: {}]
  %s6 = inlined_call_operand.hbm [shape: bf16[3,32,32], index: 6, kind: input, shape index: {}]
  %s7 = inlined_call_operand.vmem [shape: f32[3,1,32], index: 7, kind: input, shape index: {}]
  %s8 = inlined_call_operand.vmem [shape: f32[1,32], index: 8, kind: input, shape index: {}]
  %s9 = inlined_call_operand.vmem [shape: f32[32,4], index: 9, kind: input, shape index: {}]
  %s10 = inlined_call_operand.vmem [shape: f32[1,4], index: 10, kind: input, shape index: {}]
  %s11 = inlined_call_operand.hbm [shape: f32[2,4], index: 11, kind: output, shape index: {}]
  %s12 = sld [smem:[#allocation0]]
  $region66: #{tpu_custom_call.1} parent=0
    _
  %s14 = ssub.s32 1, %s12
  %s15 = scalar_select 0, %s14, %s12
  $region1: #{tpu_custom_call.1} parent=0
    #allocation6 [shape = 'u8[6144]{0}', space=vmem, size = 0x1800, scoped, tag = 'input window, operand 1, single buffered']
    #allocation7 [shape = 's32[1]{0}', space=sflag, size = 0x4, scoped, tag = 'scoped memory for tpu_custom_call.1']
    #allocation8 [shape = 's32[1]{0}', space=sflag, size = 0x4, scoped, tag = 'scoped memory for tpu_custom_call.1']
    #allocation9 [shape = 'u8[49152]{0}', space=vmem, size = 0xc000, scoped, tag = 'input window, operand 5, single buffered']
    #allocation10 [shape = 's32[1]{0}', space=sflag, size = 0x4, scoped, tag = 'scoped memory for tpu_custom_call.1']
    #allocation11 [shape = 'u8[24576]{0}', space=vmem, size = 0x6000, scoped, tag = 'input window, operand 6, single buffered']
    #allocation12 [shape = 'u8[1024]{0}', space=vmem, size = 0x400, scoped, tag = 'output window, operand 0, single buffered']
    %16 = vsyncpa [#allocation7], 0
    %17 = vsyncpa [#allocation10], 0
    %18 = vsyncpa [#allocation8], 0
    // Predicated region
    $region2: #{tpu_custom_call.1} parent=1 // pred_check
      _
    $region3: #{tpu_custom_call.1} parent=1 // pred_check_branch
      %20 = sbr.rel (0) target = $region5
    $region4: #{tpu_custom_call.1} parent=1 // pred_region
      _
    $region5: #{tpu_custom_call.1} parent=1 // pred_fallthru
      _
    // Predicated region
    $region6: #{tpu_custom_call.1} parent=1 // pred_check
      _
    $region7: #{tpu_custom_call.1} parent=1 // pred_check_branch
      %22 = sbr.rel (0) target = $region9
    $region8: #{tpu_custom_call.1} parent=1 // pred_region
      %s24 = ssub.s32 192, 192
      %25 = vsyncadd [#allocation7], %s24
      %s26 = sshll.u32 [#allocation6], 4
      %s27 = int_to_ptr.vmem [resolvable:$true] %s26
      %32 = dma.hbm_to_vmem [thread:$0]  %s1, 192, %s27, [#allocation7], 64, 64, 4
    $region9: #{tpu_custom_call.1} parent=1 // pred_fallthru
      _
    // Predicated region
    $region10: #{tpu_custom_call.1} parent=1 // pred_check
      _
    $region11: #{tpu_custom_call.1} parent=1 // pred_check_branch
      %34 = sbr.rel (0) target = $region13
    $region12: #{tpu_custom_call.1} parent=1 // pred_region
      _
    $region13: #{tpu_custom_call.1} parent=1 // pred_fallthru
      _
    // Predicated region
    $region14: #{tpu_custom_call.1} parent=1 // pred_check
      _
    $region15: #{tpu_custom_call.1} parent=1 // pred_check_branch
      %36 = sbr.rel (0) target = $region17
    $region16: #{tpu_custom_call.1} parent=1 // pred_region
      _
    $region17: #{tpu_custom_call.1} parent=1 // pred_fallthru
      _
    // Predicated region
    $region18: #{tpu_custom_call.1} parent=1 // pred_check
      _
    $region19: #{tpu_custom_call.1} parent=1 // pred_check_branch
      %38 = sbr.rel (0) target = $region21
    $region20: #{tpu_custom_call.1} parent=1 // pred_region
      _
    $region21: #{tpu_custom_call.1} parent=1 // pred_fallthru
      _
    // Predicated region
    $region22: #{tpu_custom_call.1} parent=1 // pred_check
      _
    $region23: #{tpu_custom_call.1} parent=1 // pred_check_branch
      %40 = sbr.rel (0) target = $region25
    $region24: #{tpu_custom_call.1} parent=1 // pred_region
      %s42 = ssub.s32 1536, 1536
      %43 = vsyncadd [#allocation10], %s42
      %s44 = sshll.u32 [#allocation9], 4
      %s45 = int_to_ptr.vmem [resolvable:$true] %s44
      %50 = dma.hbm_to_vmem [thread:$0]  %s5, 1536, %s45, [#allocation10], 128, 128, 8
    $region25: #{tpu_custom_call.1} parent=1 // pred_fallthru
      _
    // Predicated region
    $region26: #{tpu_custom_call.1} parent=1 // pred_check
      _
    $region27: #{tpu_custom_call.1} parent=1 // pred_check_branch
      %52 = sbr.rel (0) target = $region29
    $region28: #{tpu_custom_call.1} parent=1 // pred_region
      %s54 = ssub.s32 768, 768
      %55 = vsyncadd [#allocation10], %s54
      %s56 = sshll.u32 [#allocation11], 4
      %s57 = int_to_ptr.vmem [resolvable:$true] %s56
      %62 = dma.hbm_to_vmem [thread:$0]  %s6, 768, %s57, [#allocation10], 64, 64, 4
    $region29: #{tpu_custom_call.1} parent=1 // pred_fallthru
      _
    // Predicated region
    $region30: #{tpu_custom_call.1} parent=1 // pred_check
      _
    $region31: #{tpu_custom_call.1} parent=1 // pred_check_branch
      %64 = sbr.rel (0) target = $region33
    $region32: #{tpu_custom_call.1} parent=1 // pred_region
      _
    $region33: #{tpu_custom_call.1} parent=1 // pred_fallthru
      _
    // Predicated region
    $region34: #{tpu_custom_call.1} parent=1 // pred_check
      _
    $region35: #{tpu_custom_call.1} parent=1 // pred_check_branch
      %66 = sbr.rel (0) target = $region37
    $region36: #{tpu_custom_call.1} parent=1 // pred_region
      _
    $region37: #{tpu_custom_call.1} parent=1 // pred_fallthru
      _
    // Predicated region
    $region38: #{tpu_custom_call.1} parent=1 // pred_check
      _
    $region39: #{tpu_custom_call.1} parent=1 // pred_check_branch
      %68 = sbr.rel (0) target = $region41
    $region40: #{tpu_custom_call.1} parent=1 // pred_region
      _
    $region41: #{tpu_custom_call.1} parent=1 // pred_fallthru
      _
    // Predicated region
    $region42: #{tpu_custom_call.1} parent=1 // pred_check
      _
    $region43: #{tpu_custom_call.1} parent=1 // pred_check_branch
      %70 = sbr.rel (0) target = $region45
    $region44: #{tpu_custom_call.1} parent=1 // pred_region
      _
    $region45: #{tpu_custom_call.1} parent=1 // pred_fallthru
      _
    // Predicated region
    $region46: #{tpu_custom_call.1} parent=1 // pred_check
      _
    $region47: #{tpu_custom_call.1} parent=1 // pred_check_branch
      %72 = sbr.rel (0) target = $region49
    $region48: #{tpu_custom_call.1} parent=1 // pred_region
      %73 = dma.done [#allocation7], 192
    $region49: #{tpu_custom_call.1} parent=1 // pred_fallthru
      _
    // Predicated region
    $region50: #{tpu_custom_call.1} parent=1 // pred_check
      _
    $region51: #{tpu_custom_call.1} parent=1 // pred_check_branch
      %75 = sbr.rel (0) target = $region53
    $region52: #{tpu_custom_call.1} parent=1 // pred_region
      %76 = dma.done [#allocation10], 1536
    $region53: #{tpu_custom_call.1} parent=1 // pred_fallthru
      _
    // Predicated region
    $region54: #{tpu_custom_call.1} parent=1 // pred_check
      _
    $region55: #{tpu_custom_call.1} parent=1 // pred_check_branch
      %78 = sbr.rel (0) target = $region57
    $region56: #{tpu_custom_call.1} parent=1 // pred_region
      %79 = dma.done [#allocation10], 768
    $region57: #{tpu_custom_call.1} parent=1 // pred_fallthru
      _
    %v81 = vld [vmem:[%s0] sm:$0xff]
    %v82 = vld [vmem:[%s0 + $0x8] sm:$0xff]
    %v83 = vld [vmem:[#allocation6] sm:$0xf]
    %v84 = vld [vmem:[%s3] sm:$0x1]
    %v86 = vlaneseq
    %v87 = vshrl.u32 %v86, 7
    %v88 = vsub.s32 0, %v87
    %v89 = vrot.slane %v84, %v88
    %vm91 = vcmask 31744
    %v93 = vsel %vm91, %v81, 0
    %v96 = vsel %vm91, %v82, 0
    %vm98 = vcmask 1043456
    %v100 = vsel %vm98, %v83, 0
    %102 = vmatprep.subr.mxu0 0.0
    %103 = vmatpush1.msra.mxu0 0.0
    %104 = vmatprep.subr.mxu0 0.0
    %105 = vmatpush1.msra.mxu0 0.0
    %106 = vmatprep.subr.mxu0 0.0
    %107 = vmatpush1.msra.mxu0 0.0
    %108 = vmatprep.subr.mxu0 0.0
    %109 = vmatpush1.msra.mxu0 0.0
    %110 = vmatprep.subr.mxu0 0.0
    %111 = vmatpush1.msra.mxu0 0.0
    %112 = vmatprep.subr.mxu0 0.0
    %113 = vmatpush1.msra.mxu0 0.0
    %114 = vmatprep.subr.mxu0 0.0
    %115 = vmatpush1.msra.mxu0 0.0
    %116 = vmatprep.subr.mxu0 0.0
    %117 = vmatpush1.msra.mxu0 0.0
    %118 = vmatprep.subr.mxu0 0.0
    %119 = vmatpush1.msra.mxu0 0.0
    %120 = vmatprep.subr.mxu0 0.0
    %121 = vmatpush1.msra.mxu0 0.0
    %122 = vmatprep.subr.mxu0 0.0
    %123 = vmatpush1.msra.mxu0 0.0
    %124 = vmatprep.subr.mxu0 0.0
    %125 = vmatpush1.msra.mxu0 0.0
    %126 = vmatprep.subr.mxu0 0.0
    %127 = vmatpush1.msra.mxu0 0.0
    %128 = vmatprep.subr.mxu0 0.0
    %129 = vmatpush1.msra.mxu0 0.0
    %130 = vmatprep.subr.mxu0 0.0
    %131 = vmatpush1.msra.mxu0 0.0
    %132 = vmatprep.subr.mxu0 0.0
    %133 = vmatpush1.msra.mxu0 %v100
    %134 = vmatprep.subr.mxu0 0.0
    %135 = vmatpush2.msra.mxu0 0.0
    %136 = vmatprep.subr.mxu0 0.0
    %137 = vmatpush2.msra.mxu0 0.0
    %138 = vmatprep.subr.mxu0 0.0
    %139 = vmatpush2.msra.mxu0 0.0
    %140 = vmatprep.subr.mxu0 0.0
    %141 = vmatpush2.msra.mxu0 0.0
    %142 = vmatprep.subr.mxu0 0.0
    %143 = vmatpush2.msra.mxu0 0.0
    %144 = vmatprep.subr.mxu0 0.0
    %145 = vmatpush2.msra.mxu0 0.0
    %146 = vmatprep.subr.mxu0 0.0
    %147 = vmatpush2.msra.mxu0 0.0
    %148 = vmatprep.subr.mxu0 0.0
    %149 = vmatpush2.msra.mxu0 0.0
    %150 = vmatprep.subr.mxu0 0.0
    %151 = vmatpush2.msra.mxu0 0.0
    %152 = vmatprep.subr.mxu0 0.0
    %153 = vmatpush2.msra.mxu0 0.0
    %154 = vmatprep.subr.mxu0 0.0
    %155 = vmatpush2.msra.mxu0 0.0
    %156 = vmatprep.subr.mxu0 0.0
    %157 = vmatpush2.msra.mxu0 0.0
    %158 = vmatprep.subr.mxu0 0.0
    %159 = vmatpush2.msra.mxu0 0.0
    %160 = vmatprep.subr.mxu0 0.0
    %161 = vmatpush2.msra.mxu0 0.0
    %162 = vmatprep.subr.mxu0 0.0
    %163 = vmatpush2.msra.mxu0 0.0
    %164 = vmatprep.subr.mxu0 0.0
    %165 = vmatpush2.msra.mxu0 0.0
    %166 = vmatprep.mubr.f32.mxu0 0.0
    %167 = vmatmul.mubr.f32.gmra.mxu0 %v93
    %v168 = vpop.f32.mrf.mxu0
    %v169 = vadd.f32 %v89, %v168
    %v170 = vpop.f32.mrf.mxu0
    %171 = vmatprep.mubr.f32.mxu0 0.0
    %172 = vmatmul.mubr.f32.gmra.mxu0 %v96
    %v173 = vpop.f32.mrf.mxu0
    %v174 = vadd.f32 %v89, %v173
    %v175 = vpop.f32.mrf.mxu0
    %176 = vdwg.mxu0
    %v179 = vcombine.high %v169, %v169
    %v181 = vunpack.c.l.s4 1983009808
    %v182 = vunpack.c.0.s8 %v181
    %v183 = vlaneseq
    %v184 = vshrl.u32 %v183, 7
    %v185 = vsub.s32 %v182, %v184
    %v186 = vrot.slane %v169, %v185
    %v188 = vunpack.c.l.s4 1983009808
    %v189 = vunpack.c.0.s8 %v188
    %v190 = vlaneseq
    %v191 = vshrl.u32 %v190, 7
    %v192 = vsub.s32 %v189, %v191
    %v193 = vrot.slane %v179, %v192
    %v194 = vcombine.high %v186, %v186
    %v195 = vcombine.high %v193, %v193
    %v196 = vcombine.high %v174, %v174
    %v198 = vunpack.c.l.s4 1983009808
    %v199 = vunpack.c.0.s8 %v198
    %v200 = vlaneseq
    %v201 = vshrl.u32 %v200, 7
    %v202 = vsub.s32 %v199, %v201
    %v203 = vrot.slane %v174, %v202
    %v205 = vunpack.c.l.s4 1983009808
    %v206 = vunpack.c.0.s8 %v205
    %v207 = vlaneseq
    %v208 = vshrl.u32 %v207, 7
    %v209 = vsub.s32 %v206, %v208
    %v210 = vrot.slane %v196, %v209
    %v211 = vcombine.high %v203, %v203
    %v212 = vcombine.high %v210, %v210
    %vm221 = vcmask 254976
    %222 = vst.msk [vmem:[#allocation3] sm:$0x3] %vm221, %v186
    %223 = vst.msk [vmem:[#allocation3 + $0x2] sm:$0x3] %vm221, %v194
    %224 = vst.msk [vmem:[#allocation3 + $0x4] sm:$0x3] %vm221, %v193
    %225 = vst.msk [vmem:[#allocation3 + $0x6] sm:$0x3] %vm221, %v195
    %226 = vst.msk [vmem:[#allocation3 + $0x8] sm:$0x3] %vm221, %v203
    %227 = vst.msk [vmem:[#allocation3 + $0xa] sm:$0x3] %vm221, %v211
    %228 = vst.msk [vmem:[#allocation3 + $0xc] sm:$0x3] %vm221, %v210
    %229 = vst.msk [vmem:[#allocation3 + $0xe] sm:$0x3] %vm221, %v212
    %s230 = scalar_lea.vmem [#allocation6], 4
    %v231 = vld [vmem:[%s230] sm:$0xf]
    %s232 = scalar_lea.vmem %s3, 1
    %v233 = vld [vmem:[%s232] sm:$0x1]
    %v235 = vlaneseq
    %v236 = vshrl.u32 %v235, 7
    %v237 = vsub.s32 0, %v236
    %v238 = vrot.slane %v233, %v237
    %v241 = vsel %vm98, %v231, 0
    %243 = vmatprep.subr.mxu0 0.0
    %244 = vmatpush1.msra.mxu0 0.0
    %245 = vmatprep.subr.mxu0 0.0
    %246 = vmatpush1.msra.mxu0 0.0
    %247 = vmatprep.subr.mxu0 0.0
    %248 = vmatpush1.msra.mxu0 0.0
    %249 = vmatprep.subr.mxu0 0.0
    %250 = vmatpush1.msra.mxu0 0.0
    %251 = vmatprep.subr.mxu0 0.0
    %252 = vmatpush1.msra.mxu0 0.0
    %253 = vmatprep.subr.mxu0 0.0
    %254 = vmatpush1.msra.mxu0 0.0
    %255 = vmatprep.subr.mxu0 0.0
    %256 = vmatpush1.msra.mxu0 0.0
    %257 = vmatprep.subr.mxu0 0.0
    %258 = vmatpush1.msra.mxu0 0.0
    %259 = vmatprep.subr.mxu0 0.0
    %260 = vmatpush1.msra.mxu0 0.0
    %261 = vmatprep.subr.mxu0 0.0
    %262 = vmatpush1.msra.mxu0 0.0
    %263 = vmatprep.subr.mxu0 0.0
    %264 = vmatpush1.msra.mxu0 0.0
    %265 = vmatprep.subr.mxu0 0.0
    %266 = vmatpush1.msra.mxu0 0.0
    %267 = vmatprep.subr.mxu0 0.0
    %268 = vmatpush1.msra.mxu0 0.0
    %269 = vmatprep.subr.mxu0 0.0
    %270 = vmatpush1.msra.mxu0 0.0
    %271 = vmatprep.subr.mxu0 0.0
    %272 = vmatpush1.msra.mxu0 0.0
    %273 = vmatprep.subr.mxu0 0.0
    %274 = vmatpush1.msra.mxu0 %v241
    %275 = vmatprep.subr.mxu0 0.0
    %276 = vmatpush2.msra.mxu0 0.0
    %277 = vmatprep.subr.mxu0 0.0
    %278 = vmatpush2.msra.mxu0 0.0
    %279 = vmatprep.subr.mxu0 0.0
    %280 = vmatpush2.msra.mxu0 0.0
    %281 = vmatprep.subr.mxu0 0.0
    %282 = vmatpush2.msra.mxu0 0.0
    %283 = vmatprep.subr.mxu0 0.0
    %284 = vmatpush2.msra.mxu0 0.0
    %285 = vmatprep.subr.mxu0 0.0
    %286 = vmatpush2.msra.mxu0 0.0
    %287 = vmatprep.subr.mxu0 0.0
    %288 = vmatpush2.msra.mxu0 0.0
    %289 = vmatprep.subr.mxu0 0.0
    %290 = vmatpush2.msra.mxu0 0.0
    %291 = vmatprep.subr.mxu0 0.0
    %292 = vmatpush2.msra.mxu0 0.0
    %293 = vmatprep.subr.mxu0 0.0
    %294 = vmatpush2.msra.mxu0 0.0
    %295 = vmatprep.subr.mxu0 0.0
    %296 = vmatpush2.msra.mxu0 0.0
    %297 = vmatprep.subr.mxu0 0.0
    %298 = vmatpush2.msra.mxu0 0.0
    %299 = vmatprep.subr.mxu0 0.0
    %300 = vmatpush2.msra.mxu0 0.0
    %301 = vmatprep.subr.mxu0 0.0
    %302 = vmatpush2.msra.mxu0 0.0
    %303 = vmatprep.subr.mxu0 0.0
    %304 = vmatpush2.msra.mxu0 0.0
    %305 = vmatprep.subr.mxu0 0.0
    %306 = vmatpush2.msra.mxu0 0.0
    %307 = vmatprep.mubr.f32.mxu0 0.0
    %308 = vmatmul.mubr.f32.gmra.mxu0 %v93
    %v309 = vpop.f32.mrf.mxu0
    %v310 = vadd.f32 %v238, %v309
    %v311 = vpop.f32.mrf.mxu0
    %312 = vmatprep.mubr.f32.mxu0 0.0
    %313 = vmatmul.mubr.f32.gmra.mxu0 %v96
    %v314 = vpop.f32.mrf.mxu0
    %v315 = vadd.f32 %v238, %v314
    %v316 = vpop.f32.mrf.mxu0
    %317 = vdwg.mxu0
    %v320 = vcombine.high %v310, %v310
    %v322 = vunpack.c.l.s4 1983009808
    %v323 = vunpack.c.0.s8 %v322
    %v324 = vlaneseq
    %v325 = vshrl.u32 %v324, 7
    %v326 = vsub.s32 %v323, %v325
    %v327 = vrot.slane %v310, %v326
    %v329 = vunpack.c.l.s4 1983009808
    %v330 = vunpack.c.0.s8 %v329
    %v331 = vlaneseq
    %v332 = vshrl.u32 %v331, 7
    %v333 = vsub.s32 %v330, %v332
    %v334 = vrot.slane %v320, %v333
    %v335 = vcombine.high %v327, %v327
    %v336 = vcombine.high %v334, %v334
    %v337 = vcombine.high %v315, %v315
    %v339 = vunpack.c.l.s4 1983009808
    %v340 = vunpack.c.0.s8 %v339
    %v341 = vlaneseq
    %v342 = vshrl.u32 %v341, 7
    %v343 = vsub.s32 %v340, %v342
    %v344 = vrot.slane %v315, %v343
    %v346 = vunpack.c.l.s4 1983009808
    %v347 = vunpack.c.0.s8 %v346
    %v348 = vlaneseq
    %v349 = vshrl.u32 %v348, 7
    %v350 = vsub.s32 %v347, %v349
    %v351 = vrot.slane %v337, %v350
    %v352 = vcombine.high %v344, %v344
    %v353 = vcombine.high %v351, %v351
    %362 = vst.msk [vmem:[#allocation4] sm:$0x3] %vm221, %v327
    %363 = vst.msk [vmem:[#allocation4 + $0x2] sm:$0x3] %vm221, %v335
    %364 = vst.msk [vmem:[#allocation4 + $0x4] sm:$0x3] %vm221, %v334
    %365 = vst.msk [vmem:[#allocation4 + $0x6] sm:$0x3] %vm221, %v336
    %366 = vst.msk [vmem:[#allocation4 + $0x8] sm:$0x3] %vm221, %v344
    %367 = vst.msk [vmem:[#allocation4 + $0xa] sm:$0x3] %vm221, %v352
    %368 = vst.msk [vmem:[#allocation4 + $0xc] sm:$0x3] %vm221, %v351
    %369 = vst.msk [vmem:[#allocation4 + $0xe] sm:$0x3] %vm221, %v353
    %s370 = scalar_lea.vmem [#allocation6], 8
    %v371 = vld [vmem:[%s370] sm:$0xf]
    %s372 = scalar_lea.vmem %s3, 2
    %v373 = vld [vmem:[%s372] sm:$0x1]
    %v375 = vlaneseq
    %v376 = vshrl.u32 %v375, 7
    %v377 = vsub.s32 0, %v376
    %v378 = vrot.slane %v373, %v377
    %v381 = vsel %vm98, %v371, 0
    %383 = vmatprep.subr.mxu0 0.0
    %384 = vmatpush1.msra.mxu0 0.0
    %385 = vmatprep.subr.mxu0 0.0
    %386 = vmatpush1.msra.mxu0 0.0
    %387 = vmatprep.subr.mxu0 0.0
    %388 = vmatpush1.msra.mxu0 0.0
    %389 = vmatprep.subr.mxu0 0.0
    %390 = vmatpush1.msra.mxu0 0.0
    %391 = vmatprep.subr.mxu0 0.0
    %392 = vmatpush1.msra.mxu0 0.0
    %393 = vmatprep.subr.mxu0 0.0
    %394 = vmatpush1.msra.mxu0 0.0
    %395 = vmatprep.subr.mxu0 0.0
    %396 = vmatpush1.msra.mxu0 0.0
    %397 = vmatprep.subr.mxu0 0.0
    %398 = vmatpush1.msra.mxu0 0.0
    %399 = vmatprep.subr.mxu0 0.0
    %400 = vmatpush1.msra.mxu0 0.0
    %401 = vmatprep.subr.mxu0 0.0
    %402 = vmatpush1.msra.mxu0 0.0
    %403 = vmatprep.subr.mxu0 0.0
    %404 = vmatpush1.msra.mxu0 0.0
    %405 = vmatprep.subr.mxu0 0.0
    %406 = vmatpush1.msra.mxu0 0.0
    %407 = vmatprep.subr.mxu0 0.0
    %408 = vmatpush1.msra.mxu0 0.0
    %409 = vmatprep.subr.mxu0 0.0
    %410 = vmatpush1.msra.mxu0 0.0
    %411 = vmatprep.subr.mxu0 0.0
    %412 = vmatpush1.msra.mxu0 0.0
    %413 = vmatprep.subr.mxu0 0.0
    %414 = vmatpush1.msra.mxu0 %v381
    %415 = vmatprep.subr.mxu0 0.0
    %416 = vmatpush2.msra.mxu0 0.0
    %417 = vmatprep.subr.mxu0 0.0
    %418 = vmatpush2.msra.mxu0 0.0
    %419 = vmatprep.subr.mxu0 0.0
    %420 = vmatpush2.msra.mxu0 0.0
    %421 = vmatprep.subr.mxu0 0.0
    %422 = vmatpush2.msra.mxu0 0.0
    %423 = vmatprep.subr.mxu0 0.0
    %424 = vmatpush2.msra.mxu0 0.0
    %425 = vmatprep.subr.mxu0 0.0
    %426 = vmatpush2.msra.mxu0 0.0
    %427 = vmatprep.subr.mxu0 0.0
    %428 = vmatpush2.msra.mxu0 0.0
    %429 = vmatprep.subr.mxu0 0.0
    %430 = vmatpush2.msra.mxu0 0.0
    %431 = vmatprep.subr.mxu0 0.0
    %432 = vmatpush2.msra.mxu0 0.0
    %433 = vmatprep.subr.mxu0 0.0
    %434 = vmatpush2.msra.mxu0 0.0
    %435 = vmatprep.subr.mxu0 0.0
    %436 = vmatpush2.msra.mxu0 0.0
    %437 = vmatprep.subr.mxu0 0.0
    %438 = vmatpush2.msra.mxu0 0.0
    %439 = vmatprep.subr.mxu0 0.0
    %440 = vmatpush2.msra.mxu0 0.0
    %441 = vmatprep.subr.mxu0 0.0
    %442 = vmatpush2.msra.mxu0 0.0
    %443 = vmatprep.subr.mxu0 0.0
    %444 = vmatpush2.msra.mxu0 0.0
    %445 = vmatprep.subr.mxu0 0.0
    %446 = vmatpush2.msra.mxu0 0.0
    %447 = vmatprep.mubr.f32.mxu0 0.0
    %448 = vmatmul.mubr.f32.gmra.mxu0 %v93
    %v449 = vpop.f32.mrf.mxu0
    %v450 = vadd.f32 %v378, %v449
    %v451 = vpop.f32.mrf.mxu0
    %452 = vmatprep.mubr.f32.mxu0 0.0
    %453 = vmatmul.mubr.f32.gmra.mxu0 %v96
    %v454 = vpop.f32.mrf.mxu0
    %v455 = vadd.f32 %v378, %v454
    %v456 = vpop.f32.mrf.mxu0
    %457 = vdwg.mxu0
    %v460 = vcombine.high %v450, %v450
    %v462 = vunpack.c.l.s4 1983009808
    %v463 = vunpack.c.0.s8 %v462
    %v464 = vlaneseq
    %v465 = vshrl.u32 %v464, 7
    %v466 = vsub.s32 %v463, %v465
    %v467 = vrot.slane %v450, %v466
    %v469 = vunpack.c.l.s4 1983009808
    %v470 = vunpack.c.0.s8 %v469
    %v471 = vlaneseq
    %v472 = vshrl.u32 %v471, 7
    %v473 = vsub.s32 %v470, %v472
    %v474 = vrot.slane %v460, %v473
    %v475 = vcombine.high %v467, %v467
    %v476 = vcombine.high %v474, %v474
    %v477 = vcombine.high %v455, %v455
    %v479 = vunpack.c.l.s4 1983009808
    %v480 = vunpack.c.0.s8 %v479
    %v481 = vlaneseq
    %v482 = vshrl.u32 %v481, 7
    %v483 = vsub.s32 %v480, %v482
    %v484 = vrot.slane %v455, %v483
    %v486 = vunpack.c.l.s4 1983009808
    %v487 = vunpack.c.0.s8 %v486
    %v488 = vlaneseq
    %v489 = vshrl.u32 %v488, 7
    %v490 = vsub.s32 %v487, %v489
    %v491 = vrot.slane %v477, %v490
    %v492 = vcombine.high %v484, %v484
    %v493 = vcombine.high %v491, %v491
    %502 = vst.msk [vmem:[#allocation5] sm:$0x3] %vm221, %v467
    %503 = vst.msk [vmem:[#allocation5 + $0x2] sm:$0x3] %vm221, %v475
    %504 = vst.msk [vmem:[#allocation5 + $0x4] sm:$0x3] %vm221, %v474
    %505 = vst.msk [vmem:[#allocation5 + $0x6] sm:$0x3] %vm221, %v476
    %506 = vst.msk [vmem:[#allocation5 + $0x8] sm:$0x3] %vm221, %v484
    %507 = vst.msk [vmem:[#allocation5 + $0xa] sm:$0x3] %vm221, %v492
    %508 = vst.msk [vmem:[#allocation5 + $0xc] sm:$0x3] %vm221, %v491
    %509 = vst.msk [vmem:[#allocation5 + $0xe] sm:$0x3] %vm221, %v493
    %v510 = vld [vmem:[%s2] sm:$0xf]
    %v511 = vld [vmem:[%s2 + $0x4] sm:$0xf]
    %v512 = vld [vmem:[%s2 + $0x8] sm:$0xf]
    %v513 = vld [vmem:[%s2 + $0xc] sm:$0xf]
    %s514 = scalar_lea.vmem %s2, 16
    %v515 = vld [vmem:[%s514] sm:$0xf]
    %v516 = vld [vmem:[%s514 + $0x4] sm:$0xf]
    %v517 = vld [vmem:[%s514 + $0x8] sm:$0xf]
    %v518 = vld [vmem:[%s514 + $0xc] sm:$0xf]
    %s519 = scalar_lea.vmem %s2, 32
    %v520 = vld [vmem:[%s519] sm:$0xf]
    %v521 = vld [vmem:[%s519 + $0x4] sm:$0xf]
    %v522 = vld [vmem:[%s519 + $0x8] sm:$0xf]
    %v523 = vld [vmem:[%s519 + $0xc] sm:$0xf]
    %v524 = vld [vmem:[%s4] sm:$0x1]
    %v526 = vlaneseq
    %v527 = vshrl.u32 %v526, 7
    %v528 = vsub.s32 0, %v527
    %v529 = vrot.slane %v524, %v528
    %v535 = vunpack.c.l.b16 %v510
    %v536 = vunpack.c.l.b16 %v511
    %v537 = vunpack.c.l.b16 %v512
    %v538 = vunpack.c.l.b16 %v513
    %v539 = vpack.c.b16 %v536, %v535
    %v540 = vpack.c.b16 %v538, %v537
    %vm543 = vcmask 261120
    %v545 = vsel %vm543, 0, 0
    %547 = vmatprep.subr.bf16.mxu0 0
    %548 = vmatpush1.bf16.msra.mxu0 0
    %549 = vmatprep.subr.bf16.mxu0 0
    %550 = vmatpush1.bf16.msra.mxu0 0
    %551 = vmatprep.subr.bf16.mxu0 0
    %552 = vmatpush1.bf16.msra.mxu0 0
    %553 = vmatprep.subr.bf16.mxu0 0
    %554 = vmatpush1.bf16.msra.mxu0 0
    %555 = vmatprep.subr.bf16.mxu0 0
    %556 = vmatpush1.bf16.msra.mxu0 0
    %557 = vmatprep.subr.bf16.mxu0 0
    %558 = vmatpush1.bf16.msra.mxu0 0
    %559 = vmatprep.subr.bf16.mxu0 0
    %560 = vmatpush1.bf16.msra.mxu0 %v540
    %561 = vmatprep.subr.bf16.mxu0 0
    %562 = vmatpush1.bf16.msra.mxu0 %v539
    %563 = vmatprep.subr.bf16.mxu0 0
    %564 = vmatpush2.bf16.msra.mxu0 0
    %565 = vmatprep.subr.bf16.mxu0 0
    %566 = vmatpush2.bf16.msra.mxu0 0
    %567 = vmatprep.subr.bf16.mxu0 0
    %568 = vmatpush2.bf16.msra.mxu0 0
    %569 = vmatprep.subr.bf16.mxu0 0
    %570 = vmatpush2.bf16.msra.mxu0 0
    %571 = vmatprep.subr.bf16.mxu0 0
    %572 = vmatpush2.bf16.msra.mxu0 0
    %573 = vmatprep.subr.bf16.mxu0 0
    %574 = vmatpush2.bf16.msra.mxu0 0
    %575 = vmatprep.subr.bf16.mxu0 0
    %576 = vmatpush2.bf16.msra.mxu0 0
    %577 = vmatprep.subr.bf16.mxu0 0
    %578 = vmatpush2.bf16.msra.mxu0 0
    %579 = vmatprep.mubr.bf16.mxu0 0
    %580 = vmatmul.mubr.bf16.gmra.mxu0 %v545
    %v581 = vpop.f32.mrf.mxu0
    %v582 = vadd.f32 0.0, %v581
    %v583 = vpop.f32.mrf.mxu0
    %v584 = vpop.f32.mrf.mxu0
    %v585 = vpop.f32.mrf.mxu0
    %586 = vdwg.mxu0
    %v591 = vunpack.c.l.b16 %v515
    %v592 = vunpack.c.l.b16 %v516
    %v593 = vunpack.c.l.b16 %v517
    %v594 = vunpack.c.l.b16 %v518
    %v595 = vpack.c.b16 %v592, %v591
    %v596 = vpack.c.b16 %v594, %v593
    %599 = vmatprep.subr.bf16.mxu0 0
    %600 = vmatpush1.bf16.msra.mxu0 0
    %601 = vmatprep.subr.bf16.mxu0 0
    %602 = vmatpush1.bf16.msra.mxu0 0
    %603 = vmatprep.subr.bf16.mxu0 0
    %604 = vmatpush1.bf16.msra.mxu0 0
    %605 = vmatprep.subr.bf16.mxu0 0
    %606 = vmatpush1.bf16.msra.mxu0 0
    %607 = vmatprep.subr.bf16.mxu0 0
    %608 = vmatpush1.bf16.msra.mxu0 0
    %609 = vmatprep.subr.bf16.mxu0 0
    %610 = vmatpush1.bf16.msra.mxu0 0
    %611 = vmatprep.subr.bf16.mxu0 0
    %612 = vmatpush1.bf16.msra.mxu0 %v596
    %613 = vmatprep.subr.bf16.mxu0 0
    %614 = vmatpush1.bf16.msra.mxu0 %v595
    %615 = vmatprep.subr.bf16.mxu0 0
    %616 = vmatpush2.bf16.msra.mxu0 0
    %617 = vmatprep.subr.bf16.mxu0 0
    %618 = vmatpush2.bf16.msra.mxu0 0
    %619 = vmatprep.subr.bf16.mxu0 0
    %620 = vmatpush2.bf16.msra.mxu0 0
    %621 = vmatprep.subr.bf16.mxu0 0
    %622 = vmatpush2.bf16.msra.mxu0 0
    %623 = vmatprep.subr.bf16.mxu0 0
    %624 = vmatpush2.bf16.msra.mxu0 0
    %625 = vmatprep.subr.bf16.mxu0 0
    %626 = vmatpush2.bf16.msra.mxu0 0
    %627 = vmatprep.subr.bf16.mxu0 0
    %628 = vmatpush2.bf16.msra.mxu0 0
    %629 = vmatprep.subr.bf16.mxu0 0
    %630 = vmatpush2.bf16.msra.mxu0 0
    %631 = vmatprep.mubr.bf16.mxu0 0
    %632 = vmatmul.mubr.bf16.gmra.mxu0 %v545
    %v633 = vpop.f32.mrf.mxu0
    %v634 = vadd.f32 0.0, %v633
    %v635 = vpop.f32.mrf.mxu0
    %v636 = vpop.f32.mrf.mxu0
    %v637 = vpop.f32.mrf.mxu0
    %638 = vdwg.mxu0
    %v639 = vld [vmem:[#allocation3] sm:$0x3]
    %v640 = vadd.f32 %v639, %v582
    %v641 = vxor.u32 %v640, 2147483648
    %v642 = vmul.f32 %v641, 1.442695
    %v643 = vpow.pop %v642
    %v644 = vadd.f32 %v643, 1.0
    %v645 = vrcp.pop %v644
    %v646 = vmul.f32 1.0, %v645
    %v647 = vld [vmem:[#allocation4] sm:$0x3]
    %v648 = vadd.f32 %v647, %v634
    %v649 = vxor.u32 %v648, 2147483648
    %v650 = vmul.f32 %v649, 1.442695
    %v651 = vpow.pop %v650
    %v652 = vadd.f32 %v651, 1.0
    %v653 = vrcp.pop %v652
    %v654 = vmul.f32 1.0, %v653
    %v655 = vld [vmem:[#allocation5] sm:$0x3]
    %v660 = vunpack.c.l.b16 %v520
    %v661 = vunpack.c.l.b16 %v521
    %v662 = vunpack.c.l.b16 %v522
    %v663 = vunpack.c.l.b16 %v523
    %v664 = vpack.c.b16 %v661, %v660
    %v665 = vpack.c.b16 %v663, %v662
    %668 = vmatprep.subr.bf16.mxu0 0
    %669 = vmatpush1.bf16.msra.mxu0 0
    %670 = vmatprep.subr.bf16.mxu0 0
    %671 = vmatpush1.bf16.msra.mxu0 0
    %672 = vmatprep.subr.bf16.mxu0 0
    %673 = vmatpush1.bf16.msra.mxu0 0
    %674 = vmatprep.subr.bf16.mxu0 0
    %675 = vmatpush1.bf16.msra.mxu0 0
    %676 = vmatprep.subr.bf16.mxu0 0
    %677 = vmatpush1.bf16.msra.mxu0 0
    %678 = vmatprep.subr.bf16.mxu0 0
    %679 = vmatpush1.bf16.msra.mxu0 0
    %680 = vmatprep.subr.bf16.mxu0 0
    %681 = vmatpush1.bf16.msra.mxu0 %v665
    %682 = vmatprep.subr.bf16.mxu0 0
    %683 = vmatpush1.bf16.msra.mxu0 %v664
    %684 = vmatprep.subr.bf16.mxu0 0
    %685 = vmatpush2.bf16.msra.mxu0 0
    %686 = vmatprep.subr.bf16.mxu0 0
    %687 = vmatpush2.bf16.msra.mxu0 0
    %688 = vmatprep.subr.bf16.mxu0 0
    %689 = vmatpush2.bf16.msra.mxu0 0
    %690 = vmatprep.subr.bf16.mxu0 0
    %691 = vmatpush2.bf16.msra.mxu0 0
    %692 = vmatprep.subr.bf16.mxu0 0
    %693 = vmatpush2.bf16.msra.mxu0 0
    %694 = vmatprep.subr.bf16.mxu0 0
    %695 = vmatpush2.bf16.msra.mxu0 0
    %696 = vmatprep.subr.bf16.mxu0 0
    %697 = vmatpush2.bf16.msra.mxu0 0
    %698 = vmatprep.subr.bf16.mxu0 0
    %699 = vmatpush2.bf16.msra.mxu0 0
    %700 = vmatprep.mubr.bf16.mxu0 0
    %701 = vmatmul.mubr.bf16.gmra.mxu0 %v545
    %v702 = vpop.f32.mrf.mxu0
    %v703 = vadd.f32 %v529, %v702
    %v704 = vpop.f32.mrf.mxu0
    %v705 = vpop.f32.mrf.mxu0
    %v706 = vpop.f32.mrf.mxu0
    %707 = vdwg.mxu0
    %v708 = vmul.f32 %v646, %v703
    %v709 = vadd.f32 %v655, %v708
    %v710 = vtanh.pop %v709
    %v711 = vsub.f32 1.0, %v654
    %v712 = vmul.f32 %v711, %v710
    %v713 = vmul.f32 %v654, 0.0
    %v714 = vadd.f32 %v712, %v713
    %715 = vst.msk [vmem:[#allocation2] sm:$0x3] %vm221, %v714
    %v716 = vpack.c.bf16 %v714, %v714
    %v718 = vsel %vm543, %v716, 0
    %720 = vmatprep.subr.bf16.mxu0 0
    %721 = vmatpush1.bf16.msra.mxu0 0
    %722 = vmatprep.subr.bf16.mxu0 0
    %723 = vmatpush1.bf16.msra.mxu0 0
    %724 = vmatprep.subr.bf16.mxu0 0
    %725 = vmatpush1.bf16.msra.mxu0 0
    %726 = vmatprep.subr.bf16.mxu0 0
    %727 = vmatpush1.bf16.msra.mxu0 0
    %728 = vmatprep.subr.bf16.mxu0 0
    %729 = vmatpush1.bf16.msra.mxu0 0
    %730 = vmatprep.subr.bf16.mxu0 0
    %731 = vmatpush1.bf16.msra.mxu0 0
    %732 = vmatprep.subr.bf16.mxu0 0
    %733 = vmatpush1.bf16.msra.mxu0 %v540
    %734 = vmatprep.subr.bf16.mxu0 0
    %735 = vmatpush1.bf16.msra.mxu0 %v539
    %736 = vmatprep.subr.bf16.mxu0 0
    %737 = vmatpush2.bf16.msra.mxu0 0
    %738 = vmatprep.subr.bf16.mxu0 0
    %739 = vmatpush2.bf16.msra.mxu0 0
    %740 = vmatprep.subr.bf16.mxu0 0
    %741 = vmatpush2.bf16.msra.mxu0 0
    %742 = vmatprep.subr.bf16.mxu0 0
    %743 = vmatpush2.bf16.msra.mxu0 0
    %744 = vmatprep.subr.bf16.mxu0 0
    %745 = vmatpush2.bf16.msra.mxu0 0
    %746 = vmatprep.subr.bf16.mxu0 0
    %747 = vmatpush2.bf16.msra.mxu0 0
    %748 = vmatprep.subr.bf16.mxu0 0
    %749 = vmatpush2.bf16.msra.mxu0 0
    %750 = vmatprep.subr.bf16.mxu0 0
    %751 = vmatpush2.bf16.msra.mxu0 0
    %752 = vmatprep.mubr.bf16.mxu0 0
    %753 = vmatmul.mubr.bf16.gmra.mxu0 %v718
    %v754 = vpop.f32.mrf.mxu0
    %v755 = vadd.f32 0.0, %v754
    %v756 = vpop.f32.mrf.mxu0
    %v757 = vpop.f32.mrf.mxu0
    %v758 = vpop.f32.mrf.mxu0
    %759 = vdwg.mxu0
    %760 = vmatprep.subr.bf16.mxu0 0
    %761 = vmatpush1.bf16.msra.mxu0 0
    %762 = vmatprep.subr.bf16.mxu0 0
    %763 = vmatpush1.bf16.msra.mxu0 0
    %764 = vmatprep.subr.bf16.mxu0 0
    %765 = vmatpush1.bf16.msra.mxu0 0
    %766 = vmatprep.subr.bf16.mxu0 0
    %767 = vmatpush1.bf16.msra.mxu0 0
    %768 = vmatprep.subr.bf16.mxu0 0
    %769 = vmatpush1.bf16.msra.mxu0 0
    %770 = vmatprep.subr.bf16.mxu0 0
    %771 = vmatpush1.bf16.msra.mxu0 0
    %772 = vmatprep.subr.bf16.mxu0 0
    %773 = vmatpush1.bf16.msra.mxu0 %v596
    %774 = vmatprep.subr.bf16.mxu0 0
    %775 = vmatpush1.bf16.msra.mxu0 %v595
    %776 = vmatprep.subr.bf16.mxu0 0
    %777 = vmatpush2.bf16.msra.mxu0 0
    %778 = vmatprep.subr.bf16.mxu0 0
    %779 = vmatpush2.bf16.msra.mxu0 0
    %780 = vmatprep.subr.bf16.mxu0 0
    %781 = vmatpush2.bf16.msra.mxu0 0
    %782 = vmatprep.subr.bf16.mxu0 0
    %783 = vmatpush2.bf16.msra.mxu0 0
    %784 = vmatprep.subr.bf16.mxu0 0
    %785 = vmatpush2.bf16.msra.mxu0 0
    %786 = vmatprep.subr.bf16.mxu0 0
    %787 = vmatpush2.bf16.msra.mxu0 0
    %788 = vmatprep.subr.bf16.mxu0 0
    %789 = vmatpush2.bf16.msra.mxu0 0
    %790 = vmatprep.subr.bf16.mxu0 0
    %791 = vmatpush2.bf16.msra.mxu0 0
    %792 = vmatprep.mubr.bf16.mxu0 0
    %793 = vmatmul.mubr.bf16.gmra.mxu0 %v718
    %v794 = vpop.f32.mrf.mxu0
    %v795 = vadd.f32 0.0, %v794
    %v796 = vpop.f32.mrf.mxu0
    %v797 = vpop.f32.mrf.mxu0
    %v798 = vpop.f32.mrf.mxu0
    %799 = vdwg.mxu0
    %s800 = scalar_lea.vmem [#allocation3], 2
    %v801 = vld [vmem:[%s800] sm:$0x3]
    %v802 = vadd.f32 %v801, %v755
    %v803 = vxor.u32 %v802, 2147483648
    %v804 = vmul.f32 %v803, 1.442695
    %v805 = vpow.pop %v804
    %v806 = vadd.f32 %v805, 1.0
    %v807 = vrcp.pop %v806
    %v808 = vmul.f32 1.0, %v807
    %s809 = scalar_lea.vmem [#allocation4], 2
    %v810 = vld [vmem:[%s809] sm:$0x3]
    %v811 = vadd.f32 %v810, %v795
    %v812 = vxor.u32 %v811, 2147483648
    %v813 = vmul.f32 %v812, 1.442695
    %v814 = vpow.pop %v813
    %v815 = vadd.f32 %v814, 1.0
    %v816 = vrcp.pop %v815
    %v817 = vmul.f32 1.0, %v816
    %s818 = scalar_lea.vmem [#allocation5], 2
    %v819 = vld [vmem:[%s818] sm:$0x3]
    %820 = vmatprep.subr.bf16.mxu0 0
    %821 = vmatpush1.bf16.msra.mxu0 0
    %822 = vmatprep.subr.bf16.mxu0 0
    %823 = vmatpush1.bf16.msra.mxu0 0
    %824 = vmatprep.subr.bf16.mxu0 0
    %825 = vmatpush1.bf16.msra.mxu0 0
    %826 = vmatprep.subr.bf16.mxu0 0
    %827 = vmatpush1.bf16.msra.mxu0 0
    %828 = vmatprep.subr.bf16.mxu0 0
    %829 = vmatpush1.bf16.msra.mxu0 0
    %830 = vmatprep.subr.bf16.mxu0 0
    %831 = vmatpush1.bf16.msra.mxu0 0
    %832 = vmatprep.subr.bf16.mxu0 0
    %833 = vmatpush1.bf16.msra.mxu0 %v665
    %834 = vmatprep.subr.bf16.mxu0 0
    %835 = vmatpush1.bf16.msra.mxu0 %v664
    %836 = vmatprep.subr.bf16.mxu0 0
    %837 = vmatpush2.bf16.msra.mxu0 0
    %838 = vmatprep.subr.bf16.mxu0 0
    %839 = vmatpush2.bf16.msra.mxu0 0
    %840 = vmatprep.subr.bf16.mxu0 0
    %841 = vmatpush2.bf16.msra.mxu0 0
    %842 = vmatprep.subr.bf16.mxu0 0
    %843 = vmatpush2.bf16.msra.mxu0 0
    %844 = vmatprep.subr.bf16.mxu0 0
    %845 = vmatpush2.bf16.msra.mxu0 0
    %846 = vmatprep.subr.bf16.mxu0 0
    %847 = vmatpush2.bf16.msra.mxu0 0
    %848 = vmatprep.subr.bf16.mxu0 0
    %849 = vmatpush2.bf16.msra.mxu0 0
    %850 = vmatprep.subr.bf16.mxu0 0
    %851 = vmatpush2.bf16.msra.mxu0 0
    %852 = vmatprep.mubr.bf16.mxu0 0
    %853 = vmatmul.mubr.bf16.gmra.mxu0 %v718
    %v854 = vpop.f32.mrf.mxu0
    %v855 = vadd.f32 %v529, %v854
    %v856 = vpop.f32.mrf.mxu0
    %v857 = vpop.f32.mrf.mxu0
    %v858 = vpop.f32.mrf.mxu0
    %859 = vdwg.mxu0
    %v860 = vmul.f32 %v808, %v855
    %v861 = vadd.f32 %v819, %v860
    %v862 = vtanh.pop %v861
    %v863 = vsub.f32 1.0, %v817
    %v864 = vmul.f32 %v863, %v862
    %v865 = vmul.f32 %v817, %v714
    %v866 = vadd.f32 %v864, %v865
    %s867 = scalar_lea.vmem [#allocation2], 2
    %868 = vst.msk [vmem:[%s867] sm:$0x3] %vm221, %v866
    %v869 = vpack.c.bf16 %v866, %v866
    %v871 = vsel %vm543, %v869, 0
    %873 = vmatprep.subr.bf16.mxu0 0
    %874 = vmatpush1.bf16.msra.mxu0 0
    %875 = vmatprep.subr.bf16.mxu0 0
    %876 = vmatpush1.bf16.msra.mxu0 0
    %877 = vmatprep.subr.bf16.mxu0 0
    %878 = vmatpush1.bf16.msra.mxu0 0
    %879 = vmatprep.subr.bf16.mxu0 0
    %880 = vmatpush1.bf16.msra.mxu0 0
    %881 = vmatprep.subr.bf16.mxu0 0
    %882 = vmatpush1.bf16.msra.mxu0 0
    %883 = vmatprep.subr.bf16.mxu0 0
    %884 = vmatpush1.bf16.msra.mxu0 0
    %885 = vmatprep.subr.bf16.mxu0 0
    %886 = vmatpush1.bf16.msra.mxu0 %v540
    %887 = vmatprep.subr.bf16.mxu0 0
    %888 = vmatpush1.bf16.msra.mxu0 %v539
    %889 = vmatprep.subr.bf16.mxu0 0
    %890 = vmatpush2.bf16.msra.mxu0 0
    %891 = vmatprep.subr.bf16.mxu0 0
    %892 = vmatpush2.bf16.msra.mxu0 0
    %893 = vmatprep.subr.bf16.mxu0 0
    %894 = vmatpush2.bf16.msra.mxu0 0
    %895 = vmatprep.subr.bf16.mxu0 0
    %896 = vmatpush2.bf16.msra.mxu0 0
    %897 = vmatprep.subr.bf16.mxu0 0
    %898 = vmatpush2.bf16.msra.mxu0 0
    %899 = vmatprep.subr.bf16.mxu0 0
    %900 = vmatpush2.bf16.msra.mxu0 0
    %901 = vmatprep.subr.bf16.mxu0 0
    %902 = vmatpush2.bf16.msra.mxu0 0
    %903 = vmatprep.subr.bf16.mxu0 0
    %904 = vmatpush2.bf16.msra.mxu0 0
    %905 = vmatprep.mubr.bf16.mxu0 0
    %906 = vmatmul.mubr.bf16.gmra.mxu0 %v871
    %v907 = vpop.f32.mrf.mxu0
    %v908 = vadd.f32 0.0, %v907
    %v909 = vpop.f32.mrf.mxu0
    %v910 = vpop.f32.mrf.mxu0
    %v911 = vpop.f32.mrf.mxu0
    %912 = vdwg.mxu0
    %913 = vmatprep.subr.bf16.mxu0 0
    %914 = vmatpush1.bf16.msra.mxu0 0
    %915 = vmatprep.subr.bf16.mxu0 0
    %916 = vmatpush1.bf16.msra.mxu0 0
    %917 = vmatprep.subr.bf16.mxu0 0
    %918 = vmatpush1.bf16.msra.mxu0 0
    %919 = vmatprep.subr.bf16.mxu0 0
    %920 = vmatpush1.bf16.msra.mxu0 0
    %921 = vmatprep.subr.bf16.mxu0 0
    %922 = vmatpush1.bf16.msra.mxu0 0
    %923 = vmatprep.subr.bf16.mxu0 0
    %924 = vmatpush1.bf16.msra.mxu0 0
    %925 = vmatprep.subr.bf16.mxu0 0
    %926 = vmatpush1.bf16.msra.mxu0 %v596
    %927 = vmatprep.subr.bf16.mxu0 0
    %928 = vmatpush1.bf16.msra.mxu0 %v595
    %929 = vmatprep.subr.bf16.mxu0 0
    %930 = vmatpush2.bf16.msra.mxu0 0
    %931 = vmatprep.subr.bf16.mxu0 0
    %932 = vmatpush2.bf16.msra.mxu0 0
    %933 = vmatprep.subr.bf16.mxu0 0
    %934 = vmatpush2.bf16.msra.mxu0 0
    %935 = vmatprep.subr.bf16.mxu0 0
    %936 = vmatpush2.bf16.msra.mxu0 0
    %937 = vmatprep.subr.bf16.mxu0 0
    %938 = vmatpush2.bf16.msra.mxu0 0
    %939 = vmatprep.subr.bf16.mxu0 0
    %940 = vmatpush2.bf16.msra.mxu0 0
    %941 = vmatprep.subr.bf16.mxu0 0
    %942 = vmatpush2.bf16.msra.mxu0 0
    %943 = vmatprep.subr.bf16.mxu0 0
    %944 = vmatpush2.bf16.msra.mxu0 0
    %945 = vmatprep.mubr.bf16.mxu0 0
    %946 = vmatmul.mubr.bf16.gmra.mxu0 %v871
    %v947 = vpop.f32.mrf.mxu0
    %v948 = vadd.f32 0.0, %v947
    %v949 = vpop.f32.mrf.mxu0
    %v950 = vpop.f32.mrf.mxu0
    %v951 = vpop.f32.mrf.mxu0
    %952 = vdwg.mxu0
    %s953 = scalar_lea.vmem [#allocation3], 4
    %v954 = vld [vmem:[%s953] sm:$0x3]
    %v955 = vadd.f32 %v954, %v908
    %v956 = vxor.u32 %v955, 2147483648
    %v957 = vmul.f32 %v956, 1.442695
    %v958 = vpow.pop %v957
    %v959 = vadd.f32 %v958, 1.0
    %v960 = vrcp.pop %v959
    %v961 = vmul.f32 1.0, %v960
    %s962 = scalar_lea.vmem [#allocation4], 4
    %v963 = vld [vmem:[%s962] sm:$0x3]
    %v964 = vadd.f32 %v963, %v948
    %v965 = vxor.u32 %v964, 2147483648
    %v966 = vmul.f32 %v965, 1.442695
    %v967 = vpow.pop %v966
    %v968 = vadd.f32 %v967, 1.0
    %v969 = vrcp.pop %v968
    %v970 = vmul.f32 1.0, %v969
    %s971 = scalar_lea.vmem [#allocation5], 4
    %v972 = vld [vmem:[%s971] sm:$0x3]
    %973 = vmatprep.subr.bf16.mxu0 0
    %974 = vmatpush1.bf16.msra.mxu0 0
    %975 = vmatprep.subr.bf16.mxu0 0
    %976 = vmatpush1.bf16.msra.mxu0 0
    %977 = vmatprep.subr.bf16.mxu0 0
    %978 = vmatpush1.bf16.msra.mxu0 0
    %979 = vmatprep.subr.bf16.mxu0 0
    %980 = vmatpush1.bf16.msra.mxu0 0
    %981 = vmatprep.subr.bf16.mxu0 0
    %982 = vmatpush1.bf16.msra.mxu0 0
    %983 = vmatprep.subr.bf16.mxu0 0
    %984 = vmatpush1.bf16.msra.mxu0 0
    %985 = vmatprep.subr.bf16.mxu0 0
    %986 = vmatpush1.bf16.msra.mxu0 %v665
    %987 = vmatprep.subr.bf16.mxu0 0
    %988 = vmatpush1.bf16.msra.mxu0 %v664
    %989 = vmatprep.subr.bf16.mxu0 0
    %990 = vmatpush2.bf16.msra.mxu0 0
    %991 = vmatprep.subr.bf16.mxu0 0
    %992 = vmatpush2.bf16.msra.mxu0 0
    %993 = vmatprep.subr.bf16.mxu0 0
    %994 = vmatpush2.bf16.msra.mxu0 0
    %995 = vmatprep.subr.bf16.mxu0 0
    %996 = vmatpush2.bf16.msra.mxu0 0
    %997 = vmatprep.subr.bf16.mxu0 0
    %998 = vmatpush2.bf16.msra.mxu0 0
    %999 = vmatprep.subr.bf16.mxu0 0
    %1000 = vmatpush2.bf16.msra.mxu0 0
    %1001 = vmatprep.subr.bf16.mxu0 0
    %1002 = vmatpush2.bf16.msra.mxu0 0
    %1003 = vmatprep.subr.bf16.mxu0 0
    %1004 = vmatpush2.bf16.msra.mxu0 0
    %1005 = vmatprep.mubr.bf16.mxu0 0
    %1006 = vmatmul.mubr.bf16.gmra.mxu0 %v871
    %v1007 = vpop.f32.mrf.mxu0
    %v1008 = vadd.f32 %v529, %v1007
    %v1009 = vpop.f32.mrf.mxu0
    %v1010 = vpop.f32.mrf.mxu0
    %v1011 = vpop.f32.mrf.mxu0
    %1012 = vdwg.mxu0
    %v1013 = vmul.f32 %v961, %v1008
    %v1014 = vadd.f32 %v972, %v1013
    %v1015 = vtanh.pop %v1014
    %v1016 = vsub.f32 1.0, %v970
    %v1017 = vmul.f32 %v1016, %v1015
    %v1018 = vmul.f32 %v970, %v866
    %v1019 = vadd.f32 %v1017, %v1018
    %s1020 = scalar_lea.vmem [#allocation2], 4
    %1021 = vst.msk [vmem:[%s1020] sm:$0x3] %vm221, %v1019
    %v1022 = vpack.c.bf16 %v1019, %v1019
    %v1024 = vsel %vm543, %v1022, 0
    %1026 = vmatprep.subr.bf16.mxu0 0
    %1027 = vmatpush1.bf16.msra.mxu0 0
    %1028 = vmatprep.subr.bf16.mxu0 0
    %1029 = vmatpush1.bf16.msra.mxu0 0
    %1030 = vmatprep.subr.bf16.mxu0 0
    %1031 = vmatpush1.bf16.msra.mxu0 0
    %1032 = vmatprep.subr.bf16.mxu0 0
    %1033 = vmatpush1.bf16.msra.mxu0 0
    %1034 = vmatprep.subr.bf16.mxu0 0
    %1035 = vmatpush1.bf16.msra.mxu0 0
    %1036 = vmatprep.subr.bf16.mxu0 0
    %1037 = vmatpush1.bf16.msra.mxu0 0
    %1038 = vmatprep.subr.bf16.mxu0 0
    %1039 = vmatpush1.bf16.msra.mxu0 %v540
    %1040 = vmatprep.subr.bf16.mxu0 0
    %1041 = vmatpush1.bf16.msra.mxu0 %v539
    %1042 = vmatprep.subr.bf16.mxu0 0
    %1043 = vmatpush2.bf16.msra.mxu0 0
    %1044 = vmatprep.subr.bf16.mxu0 0
    %1045 = vmatpush2.bf16.msra.mxu0 0
    %1046 = vmatprep.subr.bf16.mxu0 0
    %1047 = vmatpush2.bf16.msra.mxu0 0
    %1048 = vmatprep.subr.bf16.mxu0 0
    %1049 = vmatpush2.bf16.msra.mxu0 0
    %1050 = vmatprep.subr.bf16.mxu0 0
    %1051 = vmatpush2.bf16.msra.mxu0 0
    %1052 = vmatprep.subr.bf16.mxu0 0
    %1053 = vmatpush2.bf16.msra.mxu0 0
    %1054 = vmatprep.subr.bf16.mxu0 0
    %1055 = vmatpush2.bf16.msra.mxu0 0
    %1056 = vmatprep.subr.bf16.mxu0 0
    %1057 = vmatpush2.bf16.msra.mxu0 0
    %1058 = vmatprep.mubr.bf16.mxu0 0
    %1059 = vmatmul.mubr.bf16.gmra.mxu0 %v1024
    %v1060 = vpop.f32.mrf.mxu0
    %v1061 = vadd.f32 0.0, %v1060
    %v1062 = vpop.f32.mrf.mxu0
    %v1063 = vpop.f32.mrf.mxu0
    %v1064 = vpop.f32.mrf.mxu0
    %1065 = vdwg.mxu0
    %1066 = vmatprep.subr.bf16.mxu0 0
    %1067 = vmatpush1.bf16.msra.mxu0 0
    %1068 = vmatprep.subr.bf16.mxu0 0
    %1069 = vmatpush1.bf16.msra.mxu0 0
    %1070 = vmatprep.subr.bf16.mxu0 0
    %1071 = vmatpush1.bf16.msra.mxu0 0
    %1072 = vmatprep.subr.bf16.mxu0 0
    %1073 = vmatpush1.bf16.msra.mxu0 0
    %1074 = vmatprep.subr.bf16.mxu0 0
    %1075 = vmatpush1.bf16.msra.mxu0 0
    %1076 = vmatprep.subr.bf16.mxu0 0
    %1077 = vmatpush1.bf16.msra.mxu0 0
    %1078 = vmatprep.subr.bf16.mxu0 0
    %1079 = vmatpush1.bf16.msra.mxu0 %v596
    %1080 = vmatprep.subr.bf16.mxu0 0
    %1081 = vmatpush1.bf16.msra.mxu0 %v595
    %1082 = vmatprep.subr.bf16.mxu0 0
    %1083 = vmatpush2.bf16.msra.mxu0 0
    %1084 = vmatprep.subr.bf16.mxu0 0
    %1085 = vmatpush2.bf16.msra.mxu0 0
    %1086 = vmatprep.subr.bf16.mxu0 0
    %1087 = vmatpush2.bf16.msra.mxu0 0
    %1088 = vmatprep.subr.bf16.mxu0 0
    %1089 = vmatpush2.bf16.msra.mxu0 0
    %1090 = vmatprep.subr.bf16.mxu0 0
    %1091 = vmatpush2.bf16.msra.mxu0 0
    %1092 = vmatprep.subr.bf16.mxu0 0
    %1093 = vmatpush2.bf16.msra.mxu0 0
    %1094 = vmatprep.subr.bf16.mxu0 0
    %1095 = vmatpush2.bf16.msra.mxu0 0
    %1096 = vmatprep.subr.bf16.mxu0 0
    %1097 = vmatpush2.bf16.msra.mxu0 0
    %1098 = vmatprep.mubr.bf16.mxu0 0
    %1099 = vmatmul.mubr.bf16.gmra.mxu0 %v1024
    %v1100 = vpop.f32.mrf.mxu0
    %v1101 = vadd.f32 0.0, %v1100
    %v1102 = vpop.f32.mrf.mxu0
    %v1103 = vpop.f32.mrf.mxu0
    %v1104 = vpop.f32.mrf.mxu0
    %1105 = vdwg.mxu0
    %s1106 = scalar_lea.vmem [#allocation3], 6
    %v1107 = vld [vmem:[%s1106] sm:$0x3]
    %v1108 = vadd.f32 %v1107, %v1061
    %v1109 = vxor.u32 %v1108, 2147483648
    %v1110 = vmul.f32 %v1109, 1.442695
    %v1111 = vpow.pop %v1110
    %v1112 = vadd.f32 %v1111, 1.0
    %v1113 = vrcp.pop %v1112
    %v1114 = vmul.f32 1.0, %v1113
    %s1115 = scalar_lea.vmem [#allocation4], 6
    %v1116 = vld [vmem:[%s1115] sm:$0x3]
    %v1117 = vadd.f32 %v1116, %v1101
    %v1118 = vxor.u32 %v1117, 2147483648
    %v1119 = vmul.f32 %v1118, 1.442695
    %v1120 = vpow.pop %v1119
    %v1121 = vadd.f32 %v1120, 1.0
    %v1122 = vrcp.pop %v1121
    %v1123 = vmul.f32 1.0, %v1122
    %s1124 = scalar_lea.vmem [#allocation5], 6
    %v1125 = vld [vmem:[%s1124] sm:$0x3]
    %1126 = vmatprep.subr.bf16.mxu0 0
    %1127 = vmatpush1.bf16.msra.mxu0 0
    %1128 = vmatprep.subr.bf16.mxu0 0
    %1129 = vmatpush1.bf16.msra.mxu0 0
    %1130 = vmatprep.subr.bf16.mxu0 0
    %1131 = vmatpush1.bf16.msra.mxu0 0
    %1132 = vmatprep.subr.bf16.mxu0 0
    %1133 = vmatpush1.bf16.msra.mxu0 0
    %1134 = vmatprep.subr.bf16.mxu0 0
    %1135 = vmatpush1.bf16.msra.mxu0 0
    %1136 = vmatprep.subr.bf16.mxu0 0
    %1137 = vmatpush1.bf16.msra.mxu0 0
    %1138 = vmatprep.subr.bf16.mxu0 0
    %1139 = vmatpush1.bf16.msra.mxu0 %v665
    %1140 = vmatprep.subr.bf16.mxu0 0
    %1141 = vmatpush1.bf16.msra.mxu0 %v664
    %1142 = vmatprep.subr.bf16.mxu0 0
    %1143 = vmatpush2.bf16.msra.mxu0 0
    %1144 = vmatprep.subr.bf16.mxu0 0
    %1145 = vmatpush2.bf16.msra.mxu0 0
    %1146 = vmatprep.subr.bf16.mxu0 0
    %1147 = vmatpush2.bf16.msra.mxu0 0
    %1148 = vmatprep.subr.bf16.mxu0 0
    %1149 = vmatpush2.bf16.msra.mxu0 0
    %1150 = vmatprep.subr.bf16.mxu0 0
    %1151 = vmatpush2.bf16.msra.mxu0 0
    %1152 = vmatprep.subr.bf16.mxu0 0
    %1153 = vmatpush2.bf16.msra.mxu0 0
    %1154 = vmatprep.subr.bf16.mxu0 0
    %1155 = vmatpush2.bf16.msra.mxu0 0
    %1156 = vmatprep.subr.bf16.mxu0 0
    %1157 = vmatpush2.bf16.msra.mxu0 0
    %1158 = vmatprep.mubr.bf16.mxu0 0
    %1159 = vmatmul.mubr.bf16.gmra.mxu0 %v1024
    %v1160 = vpop.f32.mrf.mxu0
    %v1161 = vadd.f32 %v529, %v1160
    %v1162 = vpop.f32.mrf.mxu0
    %v1163 = vpop.f32.mrf.mxu0
    %v1164 = vpop.f32.mrf.mxu0
    %1165 = vdwg.mxu0
    %v1166 = vmul.f32 %v1114, %v1161
    %v1167 = vadd.f32 %v1125, %v1166
    %v1168 = vtanh.pop %v1167
    %v1169 = vsub.f32 1.0, %v1123
    %v1170 = vmul.f32 %v1169, %v1168
    %v1171 = vmul.f32 %v1123, %v1019
    %v1172 = vadd.f32 %v1170, %v1171
    %s1173 = scalar_lea.vmem [#allocation2], 6
    %1174 = vst.msk [vmem:[%s1173] sm:$0x3] %vm221, %v1172
    %v1175 = vpack.c.bf16 %v1172, %v1172
    %v1177 = vsel %vm543, %v1175, 0
    %1179 = vmatprep.subr.bf16.mxu0 0
    %1180 = vmatpush1.bf16.msra.mxu0 0
    %1181 = vmatprep.subr.bf16.mxu0 0
    %1182 = vmatpush1.bf16.msra.mxu0 0
    %1183 = vmatprep.subr.bf16.mxu0 0
    %1184 = vmatpush1.bf16.msra.mxu0 0
    %1185 = vmatprep.subr.bf16.mxu0 0
    %1186 = vmatpush1.bf16.msra.mxu0 0
    %1187 = vmatprep.subr.bf16.mxu0 0
    %1188 = vmatpush1.bf16.msra.mxu0 0
    %1189 = vmatprep.subr.bf16.mxu0 0
    %1190 = vmatpush1.bf16.msra.mxu0 0
    %1191 = vmatprep.subr.bf16.mxu0 0
    %1192 = vmatpush1.bf16.msra.mxu0 %v540
    %1193 = vmatprep.subr.bf16.mxu0 0
    %1194 = vmatpush1.bf16.msra.mxu0 %v539
    %1195 = vmatprep.subr.bf16.mxu0 0
    %1196 = vmatpush2.bf16.msra.mxu0 0
    %1197 = vmatprep.subr.bf16.mxu0 0
    %1198 = vmatpush2.bf16.msra.mxu0 0
    %1199 = vmatprep.subr.bf16.mxu0 0
    %1200 = vmatpush2.bf16.msra.mxu0 0
    %1201 = vmatprep.subr.bf16.mxu0 0
    %1202 = vmatpush2.bf16.msra.mxu0 0
    %1203 = vmatprep.subr.bf16.mxu0 0
    %1204 = vmatpush2.bf16.msra.mxu0 0
    %1205 = vmatprep.subr.bf16.mxu0 0
    %1206 = vmatpush2.bf16.msra.mxu0 0
    %1207 = vmatprep.subr.bf16.mxu0 0
    %1208 = vmatpush2.bf16.msra.mxu0 0
    %1209 = vmatprep.subr.bf16.mxu0 0
    %1210 = vmatpush2.bf16.msra.mxu0 0
    %1211 = vmatprep.mubr.bf16.mxu0 0
    %1212 = vmatmul.mubr.bf16.gmra.mxu0 %v1177
    %v1213 = vpop.f32.mrf.mxu0
    %v1214 = vadd.f32 0.0, %v1213
    %v1215 = vpop.f32.mrf.mxu0
    %v1216 = vpop.f32.mrf.mxu0
    %v1217 = vpop.f32.mrf.mxu0
    %1218 = vdwg.mxu0
    %1219 = vmatprep.subr.bf16.mxu0 0
    %1220 = vmatpush1.bf16.msra.mxu0 0
    %1221 = vmatprep.subr.bf16.mxu0 0
    %1222 = vmatpush1.bf16.msra.mxu0 0
    %1223 = vmatprep.subr.bf16.mxu0 0
    %1224 = vmatpush1.bf16.msra.mxu0 0
    %1225 = vmatprep.subr.bf16.mxu0 0
    %1226 = vmatpush1.bf16.msra.mxu0 0
    %1227 = vmatprep.subr.bf16.mxu0 0
    %1228 = vmatpush1.bf16.msra.mxu0 0
    %1229 = vmatprep.subr.bf16.mxu0 0
    %1230 = vmatpush1.bf16.msra.mxu0 0
    %1231 = vmatprep.subr.bf16.mxu0 0
    %1232 = vmatpush1.bf16.msra.mxu0 %v596
    %1233 = vmatprep.subr.bf16.mxu0 0
    %1234 = vmatpush1.bf16.msra.mxu0 %v595
    %1235 = vmatprep.subr.bf16.mxu0 0
    %1236 = vmatpush2.bf16.msra.mxu0 0
    %1237 = vmatprep.subr.bf16.mxu0 0
    %1238 = vmatpush2.bf16.msra.mxu0 0
    %1239 = vmatprep.subr.bf16.mxu0 0
    %1240 = vmatpush2.bf16.msra.mxu0 0
    %1241 = vmatprep.subr.bf16.mxu0 0
    %1242 = vmatpush2.bf16.msra.mxu0 0
    %1243 = vmatprep.subr.bf16.mxu0 0
    %1244 = vmatpush2.bf16.msra.mxu0 0
    %1245 = vmatprep.subr.bf16.mxu0 0
    %1246 = vmatpush2.bf16.msra.mxu0 0
    %1247 = vmatprep.subr.bf16.mxu0 0
    %1248 = vmatpush2.bf16.msra.mxu0 0
    %1249 = vmatprep.subr.bf16.mxu0 0
    %1250 = vmatpush2.bf16.msra.mxu0 0
    %1251 = vmatprep.mubr.bf16.mxu0 0
    %1252 = vmatmul.mubr.bf16.gmra.mxu0 %v1177
    %v1253 = vpop.f32.mrf.mxu0
    %v1254 = vadd.f32 0.0, %v1253
    %v1255 = vpop.f32.mrf.mxu0
    %v1256 = vpop.f32.mrf.mxu0
    %v1257 = vpop.f32.mrf.mxu0
    %1258 = vdwg.mxu0
    %s1259 = scalar_lea.vmem [#allocation3], 8
    %v1260 = vld [vmem:[%s1259] sm:$0x3]
    %v1261 = vadd.f32 %v1260, %v1214
    %v1262 = vxor.u32 %v1261, 2147483648
    %v1263 = vmul.f32 %v1262, 1.442695
    %v1264 = vpow.pop %v1263
    %v1265 = vadd.f32 %v1264, 1.0
    %v1266 = vrcp.pop %v1265
    %v1267 = vmul.f32 1.0, %v1266
    %s1268 = scalar_lea.vmem [#allocation4], 8
    %v1269 = vld [vmem:[%s1268] sm:$0x3]
    %v1270 = vadd.f32 %v1269, %v1254
    %v1271 = vxor.u32 %v1270, 2147483648
    %v1272 = vmul.f32 %v1271, 1.442695
    %v1273 = vpow.pop %v1272
    %v1274 = vadd.f32 %v1273, 1.0
    %v1275 = vrcp.pop %v1274
    %v1276 = vmul.f32 1.0, %v1275
    %s1277 = scalar_lea.vmem [#allocation5], 8
    %v1278 = vld [vmem:[%s1277] sm:$0x3]
    %1279 = vmatprep.subr.bf16.mxu0 0
    %1280 = vmatpush1.bf16.msra.mxu0 0
    %1281 = vmatprep.subr.bf16.mxu0 0
    %1282 = vmatpush1.bf16.msra.mxu0 0
    %1283 = vmatprep.subr.bf16.mxu0 0
    %1284 = vmatpush1.bf16.msra.mxu0 0
    %1285 = vmatprep.subr.bf16.mxu0 0
    %1286 = vmatpush1.bf16.msra.mxu0 0
    %1287 = vmatprep.subr.bf16.mxu0 0
    %1288 = vmatpush1.bf16.msra.mxu0 0
    %1289 = vmatprep.subr.bf16.mxu0 0
    %1290 = vmatpush1.bf16.msra.mxu0 0
    %1291 = vmatprep.subr.bf16.mxu0 0
    %1292 = vmatpush1.bf16.msra.mxu0 %v665
    %1293 = vmatprep.subr.bf16.mxu0 0
    %1294 = vmatpush1.bf16.msra.mxu0 %v664
    %1295 = vmatprep.subr.bf16.mxu0 0
    %1296 = vmatpush2.bf16.msra.mxu0 0
    %1297 = vmatprep.subr.bf16.mxu0 0
    %1298 = vmatpush2.bf16.msra.mxu0 0
    %1299 = vmatprep.subr.bf16.mxu0 0
    %1300 = vmatpush2.bf16.msra.mxu0 0
    %1301 = vmatprep.subr.bf16.mxu0 0
    %1302 = vmatpush2.bf16.msra.mxu0 0
    %1303 = vmatprep.subr.bf16.mxu0 0
    %1304 = vmatpush2.bf16.msra.mxu0 0
    %1305 = vmatprep.subr.bf16.mxu0 0
    %1306 = vmatpush2.bf16.msra.mxu0 0
    %1307 = vmatprep.subr.bf16.mxu0 0
    %1308 = vmatpush2.bf16.msra.mxu0 0
    %1309 = vmatprep.subr.bf16.mxu0 0
    %1310 = vmatpush2.bf16.msra.mxu0 0
    %1311 = vmatprep.mubr.bf16.mxu0 0
    %1312 = vmatmul.mubr.bf16.gmra.mxu0 %v1177
    %v1313 = vpop.f32.mrf.mxu0
    %v1314 = vadd.f32 %v529, %v1313
    %v1315 = vpop.f32.mrf.mxu0
    %v1316 = vpop.f32.mrf.mxu0
    %v1317 = vpop.f32.mrf.mxu0
    %1318 = vdwg.mxu0
    %v1319 = vmul.f32 %v1267, %v1314
    %v1320 = vadd.f32 %v1278, %v1319
    %v1321 = vtanh.pop %v1320
    %v1322 = vsub.f32 1.0, %v1276
    %v1323 = vmul.f32 %v1322, %v1321
    %v1324 = vmul.f32 %v1276, %v1172
    %v1325 = vadd.f32 %v1323, %v1324
    %s1326 = scalar_lea.vmem [#allocation2], 8
    %1327 = vst.msk [vmem:[%s1326] sm:$0x3] %vm221, %v1325
    %v1328 = vpack.c.bf16 %v1325, %v1325
    %v1330 = vsel %vm543, %v1328, 0
    %1332 = vmatprep.subr.bf16.mxu0 0
    %1333 = vmatpush1.bf16.msra.mxu0 0
    %1334 = vmatprep.subr.bf16.mxu0 0
    %1335 = vmatpush1.bf16.msra.mxu0 0
    %1336 = vmatprep.subr.bf16.mxu0 0
    %1337 = vmatpush1.bf16.msra.mxu0 0
    %1338 = vmatprep.subr.bf16.mxu0 0
    %1339 = vmatpush1.bf16.msra.mxu0 0
    %1340 = vmatprep.subr.bf16.mxu0 0
    %1341 = vmatpush1.bf16.msra.mxu0 0
    %1342 = vmatprep.subr.bf16.mxu0 0
    %1343 = vmatpush1.bf16.msra.mxu0 0
    %1344 = vmatprep.subr.bf16.mxu0 0
    %1345 = vmatpush1.bf16.msra.mxu0 %v540
    %1346 = vmatprep.subr.bf16.mxu0 0
    %1347 = vmatpush1.bf16.msra.mxu0 %v539
    %1348 = vmatprep.subr.bf16.mxu0 0
    %1349 = vmatpush2.bf16.msra.mxu0 0
    %1350 = vmatprep.subr.bf16.mxu0 0
    %1351 = vmatpush2.bf16.msra.mxu0 0
    %1352 = vmatprep.subr.bf16.mxu0 0
    %1353 = vmatpush2.bf16.msra.mxu0 0
    %1354 = vmatprep.subr.bf16.mxu0 0
    %1355 = vmatpush2.bf16.msra.mxu0 0
    %1356 = vmatprep.subr.bf16.mxu0 0
    %1357 = vmatpush2.bf16.msra.mxu0 0
    %1358 = vmatprep.subr.bf16.mxu0 0
    %1359 = vmatpush2.bf16.msra.mxu0 0
    %1360 = vmatprep.subr.bf16.mxu0 0
    %1361 = vmatpush2.bf16.msra.mxu0 0
    %1362 = vmatprep.subr.bf16.mxu0 0
    %1363 = vmatpush2.bf16.msra.mxu0 0
    %1364 = vmatprep.mubr.bf16.mxu0 0
    %1365 = vmatmul.mubr.bf16.gmra.mxu0 %v1330
    %v1366 = vpop.f32.mrf.mxu0
    %v1367 = vadd.f32 0.0, %v1366
    %v1368 = vpop.f32.mrf.mxu0
    %v1369 = vpop.f32.mrf.mxu0
    %v1370 = vpop.f32.mrf.mxu0
    %1371 = vdwg.mxu0
    %1372 = vmatprep.subr.bf16.mxu0 0
    %1373 = vmatpush1.bf16.msra.mxu0 0
    %1374 = vmatprep.subr.bf16.mxu0 0
    %1375 = vmatpush1.bf16.msra.mxu0 0
    %1376 = vmatprep.subr.bf16.mxu0 0
    %1377 = vmatpush1.bf16.msra.mxu0 0
    %1378 = vmatprep.subr.bf16.mxu0 0
    %1379 = vmatpush1.bf16.msra.mxu0 0
    %1380 = vmatprep.subr.bf16.mxu0 0
    %1381 = vmatpush1.bf16.msra.mxu0 0
    %1382 = vmatprep.subr.bf16.mxu0 0
    %1383 = vmatpush1.bf16.msra.mxu0 0
    %1384 = vmatprep.subr.bf16.mxu0 0
    %1385 = vmatpush1.bf16.msra.mxu0 %v596
    %1386 = vmatprep.subr.bf16.mxu0 0
    %1387 = vmatpush1.bf16.msra.mxu0 %v595
    %1388 = vmatprep.subr.bf16.mxu0 0
    %1389 = vmatpush2.bf16.msra.mxu0 0
    %1390 = vmatprep.subr.bf16.mxu0 0
    %1391 = vmatpush2.bf16.msra.mxu0 0
    %1392 = vmatprep.subr.bf16.mxu0 0
    %1393 = vmatpush2.bf16.msra.mxu0 0
    %1394 = vmatprep.subr.bf16.mxu0 0
    %1395 = vmatpush2.bf16.msra.mxu0 0
    %1396 = vmatprep.subr.bf16.mxu0 0
    %1397 = vmatpush2.bf16.msra.mxu0 0
    %1398 = vmatprep.subr.bf16.mxu0 0
    %1399 = vmatpush2.bf16.msra.mxu0 0
    %1400 = vmatprep.subr.bf16.mxu0 0
    %1401 = vmatpush2.bf16.msra.mxu0 0
    %1402 = vmatprep.subr.bf16.mxu0 0
    %1403 = vmatpush2.bf16.msra.mxu0 0
    %1404 = vmatprep.mubr.bf16.mxu0 0
    %1405 = vmatmul.mubr.bf16.gmra.mxu0 %v1330
    %v1406 = vpop.f32.mrf.mxu0
    %v1407 = vadd.f32 0.0, %v1406
    %v1408 = vpop.f32.mrf.mxu0
    %v1409 = vpop.f32.mrf.mxu0
    %v1410 = vpop.f32.mrf.mxu0
    %1411 = vdwg.mxu0
    %s1412 = scalar_lea.vmem [#allocation3], 10
    %v1413 = vld [vmem:[%s1412] sm:$0x3]
    %v1414 = vadd.f32 %v1413, %v1367
    %v1415 = vxor.u32 %v1414, 2147483648
    %v1416 = vmul.f32 %v1415, 1.442695
    %v1417 = vpow.pop %v1416
    %v1418 = vadd.f32 %v1417, 1.0
    %v1419 = vrcp.pop %v1418
    %v1420 = vmul.f32 1.0, %v1419
    %s1421 = scalar_lea.vmem [#allocation4], 10
    %v1422 = vld [vmem:[%s1421] sm:$0x3]
    %v1423 = vadd.f32 %v1422, %v1407
    %v1424 = vxor.u32 %v1423, 2147483648
    %v1425 = vmul.f32 %v1424, 1.442695
    %v1426 = vpow.pop %v1425
    %v1427 = vadd.f32 %v1426, 1.0
    %v1428 = vrcp.pop %v1427
    %v1429 = vmul.f32 1.0, %v1428
    %s1430 = scalar_lea.vmem [#allocation5], 10
    %v1431 = vld [vmem:[%s1430] sm:$0x3]
    %1432 = vmatprep.subr.bf16.mxu0 0
    %1433 = vmatpush1.bf16.msra.mxu0 0
    %1434 = vmatprep.subr.bf16.mxu0 0
    %1435 = vmatpush1.bf16.msra.mxu0 0
    %1436 = vmatprep.subr.bf16.mxu0 0
    %1437 = vmatpush1.bf16.msra.mxu0 0
    %1438 = vmatprep.subr.bf16.mxu0 0
    %1439 = vmatpush1.bf16.msra.mxu0 0
    %1440 = vmatprep.subr.bf16.mxu0 0
    %1441 = vmatpush1.bf16.msra.mxu0 0
    %1442 = vmatprep.subr.bf16.mxu0 0
    %1443 = vmatpush1.bf16.msra.mxu0 0
    %1444 = vmatprep.subr.bf16.mxu0 0
    %1445 = vmatpush1.bf16.msra.mxu0 %v665
    %1446 = vmatprep.subr.bf16.mxu0 0
    %1447 = vmatpush1.bf16.msra.mxu0 %v664
    %1448 = vmatprep.subr.bf16.mxu0 0
    %1449 = vmatpush2.bf16.msra.mxu0 0
    %1450 = vmatprep.subr.bf16.mxu0 0
    %1451 = vmatpush2.bf16.msra.mxu0 0
    %1452 = vmatprep.subr.bf16.mxu0 0
    %1453 = vmatpush2.bf16.msra.mxu0 0
    %1454 = vmatprep.subr.bf16.mxu0 0
    %1455 = vmatpush2.bf16.msra.mxu0 0
    %1456 = vmatprep.subr.bf16.mxu0 0
    %1457 = vmatpush2.bf16.msra.mxu0 0
    %1458 = vmatprep.subr.bf16.mxu0 0
    %1459 = vmatpush2.bf16.msra.mxu0 0
    %1460 = vmatprep.subr.bf16.mxu0 0
    %1461 = vmatpush2.bf16.msra.mxu0 0
    %1462 = vmatprep.subr.bf16.mxu0 0
    %1463 = vmatpush2.bf16.msra.mxu0 0
    %1464 = vmatprep.mubr.bf16.mxu0 0
    %1465 = vmatmul.mubr.bf16.gmra.mxu0 %v1330
    %v1466 = vpop.f32.mrf.mxu0
    %v1467 = vadd.f32 %v529, %v1466
    %v1468 = vpop.f32.mrf.mxu0
    %v1469 = vpop.f32.mrf.mxu0
    %v1470 = vpop.f32.mrf.mxu0
    %1471 = vdwg.mxu0
    %v1472 = vmul.f32 %v1420, %v1467
    %v1473 = vadd.f32 %v1431, %v1472
    %v1474 = vtanh.pop %v1473
    %v1475 = vsub.f32 1.0, %v1429
    %v1476 = vmul.f32 %v1475, %v1474
    %v1477 = vmul.f32 %v1429, %v1325
    %v1478 = vadd.f32 %v1476, %v1477
    %s1479 = scalar_lea.vmem [#allocation2], 10
    %1480 = vst.msk [vmem:[%s1479] sm:$0x3] %vm221, %v1478
    %v1481 = vpack.c.bf16 %v1478, %v1478
    %v1483 = vsel %vm543, %v1481, 0
    %1485 = vmatprep.subr.bf16.mxu0 0
    %1486 = vmatpush1.bf16.msra.mxu0 0
    %1487 = vmatprep.subr.bf16.mxu0 0
    %1488 = vmatpush1.bf16.msra.mxu0 0
    %1489 = vmatprep.subr.bf16.mxu0 0
    %1490 = vmatpush1.bf16.msra.mxu0 0
    %1491 = vmatprep.subr.bf16.mxu0 0
    %1492 = vmatpush1.bf16.msra.mxu0 0
    %1493 = vmatprep.subr.bf16.mxu0 0
    %1494 = vmatpush1.bf16.msra.mxu0 0
    %1495 = vmatprep.subr.bf16.mxu0 0
    %1496 = vmatpush1.bf16.msra.mxu0 0
    %1497 = vmatprep.subr.bf16.mxu0 0
    %1498 = vmatpush1.bf16.msra.mxu0 %v540
    %1499 = vmatprep.subr.bf16.mxu0 0
    %1500 = vmatpush1.bf16.msra.mxu0 %v539
    %1501 = vmatprep.subr.bf16.mxu0 0
    %1502 = vmatpush2.bf16.msra.mxu0 0
    %1503 = vmatprep.subr.bf16.mxu0 0
    %1504 = vmatpush2.bf16.msra.mxu0 0
    %1505 = vmatprep.subr.bf16.mxu0 0
    %1506 = vmatpush2.bf16.msra.mxu0 0
    %1507 = vmatprep.subr.bf16.mxu0 0
    %1508 = vmatpush2.bf16.msra.mxu0 0
    %1509 = vmatprep.subr.bf16.mxu0 0
    %1510 = vmatpush2.bf16.msra.mxu0 0
    %1511 = vmatprep.subr.bf16.mxu0 0
    %1512 = vmatpush2.bf16.msra.mxu0 0
    %1513 = vmatprep.subr.bf16.mxu0 0
    %1514 = vmatpush2.bf16.msra.mxu0 0
    %1515 = vmatprep.subr.bf16.mxu0 0
    %1516 = vmatpush2.bf16.msra.mxu0 0
    %1517 = vmatprep.mubr.bf16.mxu0 0
    %1518 = vmatmul.mubr.bf16.gmra.mxu0 %v1483
    %v1519 = vpop.f32.mrf.mxu0
    %v1520 = vadd.f32 0.0, %v1519
    %v1521 = vpop.f32.mrf.mxu0
    %v1522 = vpop.f32.mrf.mxu0
    %v1523 = vpop.f32.mrf.mxu0
    %1524 = vdwg.mxu0
    %1525 = vmatprep.subr.bf16.mxu0 0
    %1526 = vmatpush1.bf16.msra.mxu0 0
    %1527 = vmatprep.subr.bf16.mxu0 0
    %1528 = vmatpush1.bf16.msra.mxu0 0
    %1529 = vmatprep.subr.bf16.mxu0 0
    %1530 = vmatpush1.bf16.msra.mxu0 0
    %1531 = vmatprep.subr.bf16.mxu0 0
    %1532 = vmatpush1.bf16.msra.mxu0 0
    %1533 = vmatprep.subr.bf16.mxu0 0
    %1534 = vmatpush1.bf16.msra.mxu0 0
    %1535 = vmatprep.subr.bf16.mxu0 0
    %1536 = vmatpush1.bf16.msra.mxu0 0
    %1537 = vmatprep.subr.bf16.mxu0 0
    %1538 = vmatpush1.bf16.msra.mxu0 %v596
    %1539 = vmatprep.subr.bf16.mxu0 0
    %1540 = vmatpush1.bf16.msra.mxu0 %v595
    %1541 = vmatprep.subr.bf16.mxu0 0
    %1542 = vmatpush2.bf16.msra.mxu0 0
    %1543 = vmatprep.subr.bf16.mxu0 0
    %1544 = vmatpush2.bf16.msra.mxu0 0
    %1545 = vmatprep.subr.bf16.mxu0 0
    %1546 = vmatpush2.bf16.msra.mxu0 0
    %1547 = vmatprep.subr.bf16.mxu0 0
    %1548 = vmatpush2.bf16.msra.mxu0 0
    %1549 = vmatprep.subr.bf16.mxu0 0
    %1550 = vmatpush2.bf16.msra.mxu0 0
    %1551 = vmatprep.subr.bf16.mxu0 0
    %1552 = vmatpush2.bf16.msra.mxu0 0
    %1553 = vmatprep.subr.bf16.mxu0 0
    %1554 = vmatpush2.bf16.msra.mxu0 0
    %1555 = vmatprep.subr.bf16.mxu0 0
    %1556 = vmatpush2.bf16.msra.mxu0 0
    %1557 = vmatprep.mubr.bf16.mxu0 0
    %1558 = vmatmul.mubr.bf16.gmra.mxu0 %v1483
    %v1559 = vpop.f32.mrf.mxu0
    %v1560 = vadd.f32 0.0, %v1559
    %v1561 = vpop.f32.mrf.mxu0
    %v1562 = vpop.f32.mrf.mxu0
    %v1563 = vpop.f32.mrf.mxu0
    %1564 = vdwg.mxu0
    %s1565 = scalar_lea.vmem [#allocation3], 12
    %v1566 = vld [vmem:[%s1565] sm:$0x3]
    %v1567 = vadd.f32 %v1566, %v1520
    %v1568 = vxor.u32 %v1567, 2147483648
    %v1569 = vmul.f32 %v1568, 1.442695
    %v1570 = vpow.pop %v1569
    %v1571 = vadd.f32 %v1570, 1.0
    %v1572 = vrcp.pop %v1571
    %v1573 = vmul.f32 1.0, %v1572
    %s1574 = scalar_lea.vmem [#allocation4], 12
    %v1575 = vld [vmem:[%s1574] sm:$0x3]
    %v1576 = vadd.f32 %v1575, %v1560
    %v1577 = vxor.u32 %v1576, 2147483648
    %v1578 = vmul.f32 %v1577, 1.442695
    %v1579 = vpow.pop %v1578
    %v1580 = vadd.f32 %v1579, 1.0
    %v1581 = vrcp.pop %v1580
    %v1582 = vmul.f32 1.0, %v1581
    %s1583 = scalar_lea.vmem [#allocation5], 12
    %v1584 = vld [vmem:[%s1583] sm:$0x3]
    %1585 = vmatprep.subr.bf16.mxu0 0
    %1586 = vmatpush1.bf16.msra.mxu0 0
    %1587 = vmatprep.subr.bf16.mxu0 0
    %1588 = vmatpush1.bf16.msra.mxu0 0
    %1589 = vmatprep.subr.bf16.mxu0 0
    %1590 = vmatpush1.bf16.msra.mxu0 0
    %1591 = vmatprep.subr.bf16.mxu0 0
    %1592 = vmatpush1.bf16.msra.mxu0 0
    %1593 = vmatprep.subr.bf16.mxu0 0
    %1594 = vmatpush1.bf16.msra.mxu0 0
    %1595 = vmatprep.subr.bf16.mxu0 0
    %1596 = vmatpush1.bf16.msra.mxu0 0
    %1597 = vmatprep.subr.bf16.mxu0 0
    %1598 = vmatpush1.bf16.msra.mxu0 %v665
    %1599 = vmatprep.subr.bf16.mxu0 0
    %1600 = vmatpush1.bf16.msra.mxu0 %v664
    %1601 = vmatprep.subr.bf16.mxu0 0
    %1602 = vmatpush2.bf16.msra.mxu0 0
    %1603 = vmatprep.subr.bf16.mxu0 0
    %1604 = vmatpush2.bf16.msra.mxu0 0
    %1605 = vmatprep.subr.bf16.mxu0 0
    %1606 = vmatpush2.bf16.msra.mxu0 0
    %1607 = vmatprep.subr.bf16.mxu0 0
    %1608 = vmatpush2.bf16.msra.mxu0 0
    %1609 = vmatprep.subr.bf16.mxu0 0
    %1610 = vmatpush2.bf16.msra.mxu0 0
    %1611 = vmatprep.subr.bf16.mxu0 0
    %1612 = vmatpush2.bf16.msra.mxu0 0
    %1613 = vmatprep.subr.bf16.mxu0 0
    %1614 = vmatpush2.bf16.msra.mxu0 0
    %1615 = vmatprep.subr.bf16.mxu0 0
    %1616 = vmatpush2.bf16.msra.mxu0 0
    %1617 = vmatprep.mubr.bf16.mxu0 0
    %1618 = vmatmul.mubr.bf16.gmra.mxu0 %v1483
    %v1619 = vpop.f32.mrf.mxu0
    %v1620 = vadd.f32 %v529, %v1619
    %v1621 = vpop.f32.mrf.mxu0
    %v1622 = vpop.f32.mrf.mxu0
    %v1623 = vpop.f32.mrf.mxu0
    %1624 = vdwg.mxu0
    %v1625 = vmul.f32 %v1573, %v1620
    %v1626 = vadd.f32 %v1584, %v1625
    %v1627 = vtanh.pop %v1626
    %v1628 = vsub.f32 1.0, %v1582
    %v1629 = vmul.f32 %v1628, %v1627
    %v1630 = vmul.f32 %v1582, %v1478
    %v1631 = vadd.f32 %v1629, %v1630
    %s1632 = scalar_lea.vmem [#allocation2], 12
    %1633 = vst.msk [vmem:[%s1632] sm:$0x3] %vm221, %v1631
    %v1634 = vpack.c.bf16 %v1631, %v1631
    %v1636 = vsel %vm543, %v1634, 0
    %1638 = vmatprep.subr.bf16.mxu0 0
    %1639 = vmatpush1.bf16.msra.mxu0 0
    %1640 = vmatprep.subr.bf16.mxu0 0
    %1641 = vmatpush1.bf16.msra.mxu0 0
    %1642 = vmatprep.subr.bf16.mxu0 0
    %1643 = vmatpush1.bf16.msra.mxu0 0
    %1644 = vmatprep.subr.bf16.mxu0 0
    %1645 = vmatpush1.bf16.msra.mxu0 0
    %1646 = vmatprep.subr.bf16.mxu0 0
    %1647 = vmatpush1.bf16.msra.mxu0 0
    %1648 = vmatprep.subr.bf16.mxu0 0
    %1649 = vmatpush1.bf16.msra.mxu0 0
    %1650 = vmatprep.subr.bf16.mxu0 0
    %1651 = vmatpush1.bf16.msra.mxu0 %v540
    %1652 = vmatprep.subr.bf16.mxu0 0
    %1653 = vmatpush1.bf16.msra.mxu0 %v539
    %1654 = vmatprep.subr.bf16.mxu0 0
    %1655 = vmatpush2.bf16.msra.mxu0 0
    %1656 = vmatprep.subr.bf16.mxu0 0
    %1657 = vmatpush2.bf16.msra.mxu0 0
    %1658 = vmatprep.subr.bf16.mxu0 0
    %1659 = vmatpush2.bf16.msra.mxu0 0
    %1660 = vmatprep.subr.bf16.mxu0 0
    %1661 = vmatpush2.bf16.msra.mxu0 0
    %1662 = vmatprep.subr.bf16.mxu0 0
    %1663 = vmatpush2.bf16.msra.mxu0 0
    %1664 = vmatprep.subr.bf16.mxu0 0
    %1665 = vmatpush2.bf16.msra.mxu0 0
    %1666 = vmatprep.subr.bf16.mxu0 0
    %1667 = vmatpush2.bf16.msra.mxu0 0
    %1668 = vmatprep.subr.bf16.mxu0 0
    %1669 = vmatpush2.bf16.msra.mxu0 0
    %1670 = vmatprep.mubr.bf16.mxu0 0
    %1671 = vmatmul.mubr.bf16.gmra.mxu0 %v1636
    %v1672 = vpop.f32.mrf.mxu0
    %v1673 = vadd.f32 0.0, %v1672
    %v1674 = vpop.f32.mrf.mxu0
    %v1675 = vpop.f32.mrf.mxu0
    %v1676 = vpop.f32.mrf.mxu0
    %1677 = vdwg.mxu0
    %1678 = vmatprep.subr.bf16.mxu0 0
    %1679 = vmatpush1.bf16.msra.mxu0 0
    %1680 = vmatprep.subr.bf16.mxu0 0
    %1681 = vmatpush1.bf16.msra.mxu0 0
    %1682 = vmatprep.subr.bf16.mxu0 0
    %1683 = vmatpush1.bf16.msra.mxu0 0
    %1684 = vmatprep.subr.bf16.mxu0 0
    %1685 = vmatpush1.bf16.msra.mxu0 0
    %1686 = vmatprep.subr.bf16.mxu0 0
    %1687 = vmatpush1.bf16.msra.mxu0 0
    %1688 = vmatprep.subr.bf16.mxu0 0
    %1689 = vmatpush1.bf16.msra.mxu0 0
    %1690 = vmatprep.subr.bf16.mxu0 0
    %1691 = vmatpush1.bf16.msra.mxu0 %v596
    %1692 = vmatprep.subr.bf16.mxu0 0
    %1693 = vmatpush1.bf16.msra.mxu0 %v595
    %1694 = vmatprep.subr.bf16.mxu0 0
    %1695 = vmatpush2.bf16.msra.mxu0 0
    %1696 = vmatprep.subr.bf16.mxu0 0
    %1697 = vmatpush2.bf16.msra.mxu0 0
    %1698 = vmatprep.subr.bf16.mxu0 0
    %1699 = vmatpush2.bf16.msra.mxu0 0
    %1700 = vmatprep.subr.bf16.mxu0 0
    %1701 = vmatpush2.bf16.msra.mxu0 0
    %1702 = vmatprep.subr.bf16.mxu0 0
    %1703 = vmatpush2.bf16.msra.mxu0 0
    %1704 = vmatprep.subr.bf16.mxu0 0
    %1705 = vmatpush2.bf16.msra.mxu0 0
    %1706 = vmatprep.subr.bf16.mxu0 0
    %1707 = vmatpush2.bf16.msra.mxu0 0
    %1708 = vmatprep.subr.bf16.mxu0 0
    %1709 = vmatpush2.bf16.msra.mxu0 0
    %1710 = vmatprep.mubr.bf16.mxu0 0
    %1711 = vmatmul.mubr.bf16.gmra.mxu0 %v1636
    %v1712 = vpop.f32.mrf.mxu0
    %v1713 = vadd.f32 0.0, %v1712
    %v1714 = vpop.f32.mrf.mxu0
    %v1715 = vpop.f32.mrf.mxu0
    %v1716 = vpop.f32.mrf.mxu0
    %1717 = vdwg.mxu0
    %s1718 = scalar_lea.vmem [#allocation3], 14
    %v1719 = vld [vmem:[%s1718] sm:$0x3]
    %v1720 = vadd.f32 %v1719, %v1673
    %v1721 = vxor.u32 %v1720, 2147483648
    %v1722 = vmul.f32 %v1721, 1.442695
    %v1723 = vpow.pop %v1722
    %v1724 = vadd.f32 %v1723, 1.0
    %v1725 = vrcp.pop %v1724
    %v1726 = vmul.f32 1.0, %v1725
    %s1727 = scalar_lea.vmem [#allocation4], 14
    %v1728 = vld [vmem:[%s1727] sm:$0x3]
    %v1729 = vadd.f32 %v1728, %v1713
    %v1730 = vxor.u32 %v1729, 2147483648
    %v1731 = vmul.f32 %v1730, 1.442695
    %v1732 = vpow.pop %v1731
    %v1733 = vadd.f32 %v1732, 1.0
    %v1734 = vrcp.pop %v1733
    %v1735 = vmul.f32 1.0, %v1734
    %s1736 = scalar_lea.vmem [#allocation5], 14
    %v1737 = vld [vmem:[%s1736] sm:$0x3]
    %1738 = vmatprep.subr.bf16.mxu0 0
    %1739 = vmatpush1.bf16.msra.mxu0 0
    %1740 = vmatprep.subr.bf16.mxu0 0
    %1741 = vmatpush1.bf16.msra.mxu0 0
    %1742 = vmatprep.subr.bf16.mxu0 0
    %1743 = vmatpush1.bf16.msra.mxu0 0
    %1744 = vmatprep.subr.bf16.mxu0 0
    %1745 = vmatpush1.bf16.msra.mxu0 0
    %1746 = vmatprep.subr.bf16.mxu0 0
    %1747 = vmatpush1.bf16.msra.mxu0 0
    %1748 = vmatprep.subr.bf16.mxu0 0
    %1749 = vmatpush1.bf16.msra.mxu0 0
    %1750 = vmatprep.subr.bf16.mxu0 0
    %1751 = vmatpush1.bf16.msra.mxu0 %v665
    %1752 = vmatprep.subr.bf16.mxu0 0
    %1753 = vmatpush1.bf16.msra.mxu0 %v664
    %1754 = vmatprep.subr.bf16.mxu0 0
    %1755 = vmatpush2.bf16.msra.mxu0 0
    %1756 = vmatprep.subr.bf16.mxu0 0
    %1757 = vmatpush2.bf16.msra.mxu0 0
    %1758 = vmatprep.subr.bf16.mxu0 0
    %1759 = vmatpush2.bf16.msra.mxu0 0
    %1760 = vmatprep.subr.bf16.mxu0 0
    %1761 = vmatpush2.bf16.msra.mxu0 0
    %1762 = vmatprep.subr.bf16.mxu0 0
    %1763 = vmatpush2.bf16.msra.mxu0 0
    %1764 = vmatprep.subr.bf16.mxu0 0
    %1765 = vmatpush2.bf16.msra.mxu0 0
    %1766 = vmatprep.subr.bf16.mxu0 0
    %1767 = vmatpush2.bf16.msra.mxu0 0
    %1768 = vmatprep.subr.bf16.mxu0 0
    %1769 = vmatpush2.bf16.msra.mxu0 0
    %1770 = vmatprep.mubr.bf16.mxu0 0
    %1771 = vmatmul.mubr.bf16.gmra.mxu0 %v1636
    %v1772 = vpop.f32.mrf.mxu0
    %v1773 = vadd.f32 %v529, %v1772
    %v1774 = vpop.f32.mrf.mxu0
    %v1775 = vpop.f32.mrf.mxu0
    %v1776 = vpop.f32.mrf.mxu0
    %1777 = vdwg.mxu0
    %v1778 = vmul.f32 %v1726, %v1773
    %v1779 = vadd.f32 %v1737, %v1778
    %v1780 = vtanh.pop %v1779
    %v1781 = vsub.f32 1.0, %v1735
    %v1782 = vmul.f32 %v1781, %v1780
    %v1783 = vmul.f32 %v1735, %v1631
    %v1784 = vadd.f32 %v1782, %v1783
    %s1785 = scalar_lea.vmem [#allocation2], 14
    %1786 = vst.msk [vmem:[%s1785] sm:$0x3] %vm221, %v1784
    %v1787 = vld [vmem:[#allocation2] sm:$0x3]
    %v1788 = vld [vmem:[#allocation2 + $0x2] sm:$0x3]
    %v1789 = vld [vmem:[#allocation2 + $0x4] sm:$0x3]
    %v1790 = vld [vmem:[#allocation2 + $0x6] sm:$0x3]
    %v1791 = vld [vmem:[#allocation2 + $0x8] sm:$0x3]
    %v1792 = vld [vmem:[#allocation2 + $0xa] sm:$0x3]
    %v1793 = vld [vmem:[#allocation2 + $0xc] sm:$0x3]
    %v1794 = vld [vmem:[#allocation2 + $0xe] sm:$0x3]
    %v1795 = vld [vmem:[#allocation9] sm:$0xff]
    %v1796 = vld [vmem:[#allocation9 + $0x8] sm:$0xff]
    %v1797 = vld [vmem:[#allocation9 + $0x10] sm:$0xff]
    %v1798 = vld [vmem:[#allocation9 + $0x18] sm:$0xff]
    %v1799 = vld [vmem:[%s7] sm:$0x1]
    %v1801 = vlaneseq
    %v1802 = vshrl.u32 %v1801, 7
    %v1803 = vsub.s32 0, %v1802
    %v1804 = vrot.slane %v1799, %v1803
    %v1814 = vcombine.low %v1787, %v1788
    %v1815 = vcombine.low %v1789, %v1790
    %v1817 = vunpack.c.l.s4 1983009808
    %v1818 = vunpack.c.0.s8 %v1817
    %v1819 = vlaneseq
    %v1820 = vshrl.u32 %v1819, 7
    %v1821 = vsub.s32 %v1818, %v1820
    %v1822 = vrot.slane %v1814, %v1821
    %v1824 = vunpack.c.l.s4 1983009808
    %v1825 = vunpack.c.0.s8 %v1824
    %v1826 = vlaneseq
    %v1827 = vshrl.u32 %v1826, 7
    %v1828 = vsub.s32 %v1825, %v1827
    %v1829 = vrot.slane %v1815, %v1828
    %v1830 = vcombine.low %v1822, %v1829
    %v1831 = vcombine.low %v1791, %v1792
    %v1832 = vcombine.low %v1793, %v1794
    %v1834 = vunpack.c.l.s4 1983009808
    %v1835 = vunpack.c.0.s8 %v1834
    %v1836 = vlaneseq
    %v1837 = vshrl.u32 %v1836, 7
    %v1838 = vsub.s32 %v1835, %v1837
    %v1839 = vrot.slane %v1831, %v1838
    %v1841 = vunpack.c.l.s4 1983009808
    %v1842 = vunpack.c.0.s8 %v1841
    %v1843 = vlaneseq
    %v1844 = vshrl.u32 %v1843, 7
    %v1845 = vsub.s32 %v1842, %v1844
    %v1846 = vrot.slane %v1832, %v1845
    %v1847 = vcombine.low %v1839, %v1846
    %v1848 = vsel %vm543, %v1830, 0
    %v1850 = vsel %vm543, %v1847, 0
    %1852 = vmatprep.subr.mxu0 0.0
    %1853 = vmatpush1.msra.mxu0 0.0
    %1854 = vmatprep.subr.mxu0 0.0
    %1855 = vmatpush1.msra.mxu0 0.0
    %1856 = vmatprep.subr.mxu0 0.0
    %1857 = vmatpush1.msra.mxu0 0.0
    %1858 = vmatprep.subr.mxu0 0.0
    %1859 = vmatpush1.msra.mxu0 0.0
    %1860 = vmatprep.subr.mxu0 0.0
    %1861 = vmatpush1.msra.mxu0 0.0
    %1862 = vmatprep.subr.mxu0 0.0
    %1863 = vmatpush1.msra.mxu0 0.0
    %1864 = vmatprep.subr.mxu0 0.0
    %1865 = vmatpush1.msra.mxu0 0.0
    %1866 = vmatprep.subr.mxu0 0.0
    %1867 = vmatpush1.msra.mxu0 0.0
    %1868 = vmatprep.subr.mxu0 0.0
    %1869 = vmatpush1.msra.mxu0 0.0
    %1870 = vmatprep.subr.mxu0 0.0
    %1871 = vmatpush1.msra.mxu0 0.0
    %1872 = vmatprep.subr.mxu0 0.0
    %1873 = vmatpush1.msra.mxu0 0.0
    %1874 = vmatprep.subr.mxu0 0.0
    %1875 = vmatpush1.msra.mxu0 0.0
    %1876 = vmatprep.subr.mxu0 0.0
    %1877 = vmatpush1.msra.mxu0 %v1798
    %1878 = vmatprep.subr.mxu0 0.0
    %1879 = vmatpush1.msra.mxu0 %v1797
    %1880 = vmatprep.subr.mxu0 0.0
    %1881 = vmatpush1.msra.mxu0 %v1796
    %1882 = vmatprep.subr.mxu0 0.0
    %1883 = vmatpush1.msra.mxu0 %v1795
    %1884 = vmatprep.subr.mxu0 0.0
    %1885 = vmatpush2.msra.mxu0 0.0
    %1886 = vmatprep.subr.mxu0 0.0
    %1887 = vmatpush2.msra.mxu0 0.0
    %1888 = vmatprep.subr.mxu0 0.0
    %1889 = vmatpush2.msra.mxu0 0.0
    %1890 = vmatprep.subr.mxu0 0.0
    %1891 = vmatpush2.msra.mxu0 0.0
    %1892 = vmatprep.subr.mxu0 0.0
    %1893 = vmatpush2.msra.mxu0 0.0
    %1894 = vmatprep.subr.mxu0 0.0
    %1895 = vmatpush2.msra.mxu0 0.0
    %1896 = vmatprep.subr.mxu0 0.0
    %1897 = vmatpush2.msra.mxu0 0.0
    %1898 = vmatprep.subr.mxu0 0.0
    %1899 = vmatpush2.msra.mxu0 0.0
    %1900 = vmatprep.subr.mxu0 0.0
    %1901 = vmatpush2.msra.mxu0 0.0
    %1902 = vmatprep.subr.mxu0 0.0
    %1903 = vmatpush2.msra.mxu0 0.0
    %1904 = vmatprep.subr.mxu0 0.0
    %1905 = vmatpush2.msra.mxu0 0.0
    %1906 = vmatprep.subr.mxu0 0.0
    %1907 = vmatpush2.msra.mxu0 0.0
    %1908 = vmatprep.subr.mxu0 0.0
    %1909 = vmatpush2.msra.mxu0 0.0
    %1910 = vmatprep.subr.mxu0 0.0
    %1911 = vmatpush2.msra.mxu0 0.0
    %1912 = vmatprep.subr.mxu0 0.0
    %1913 = vmatpush2.msra.mxu0 0.0
    %1914 = vmatprep.subr.mxu0 0.0
    %1915 = vmatpush2.msra.mxu0 0.0
    %1916 = vmatprep.mubr.f32.mxu0 0.0
    %1917 = vmatmul.mubr.f32.gmra.mxu0 %v1848
    %v1918 = vpop.f32.mrf.mxu0
    %v1919 = vadd.f32 %v1804, %v1918
    %v1920 = vpop.f32.mrf.mxu0
    %1921 = vmatprep.mubr.f32.mxu0 0.0
    %1922 = vmatmul.mubr.f32.gmra.mxu0 %v1850
    %v1923 = vpop.f32.mrf.mxu0
    %v1924 = vadd.f32 %v1804, %v1923
    %v1925 = vpop.f32.mrf.mxu0
    %1926 = vdwg.mxu0
    %v1929 = vcombine.high %v1919, %v1919
    %v1931 = vunpack.c.l.s4 1983009808
    %v1932 = vunpack.c.0.s8 %v1931
    %v1933 = vlaneseq
    %v1934 = vshrl.u32 %v1933, 7
    %v1935 = vsub.s32 %v1932, %v1934
    %v1936 = vrot.slane %v1919, %v1935
    %v1938 = vunpack.c.l.s4 1983009808
    %v1939 = vunpack.c.0.s8 %v1938
    %v1940 = vlaneseq
    %v1941 = vshrl.u32 %v1940, 7
    %v1942 = vsub.s32 %v1939, %v1941
    %v1943 = vrot.slane %v1929, %v1942
    %v1944 = vcombine.high %v1936, %v1936
    %v1945 = vcombine.high %v1943, %v1943
    %v1946 = vcombine.high %v1924, %v1924
    %v1948 = vunpack.c.l.s4 1983009808
    %v1949 = vunpack.c.0.s8 %v1948
    %v1950 = vlaneseq
    %v1951 = vshrl.u32 %v1950, 7
    %v1952 = vsub.s32 %v1949, %v1951
    %v1953 = vrot.slane %v1924, %v1952
    %v1955 = vunpack.c.l.s4 1983009808
    %v1956 = vunpack.c.0.s8 %v1955
    %v1957 = vlaneseq
    %v1958 = vshrl.u32 %v1957, 7
    %v1959 = vsub.s32 %v1956, %v1958
    %v1960 = vrot.slane %v1946, %v1959
    %v1961 = vcombine.high %v1953, %v1953
    %v1962 = vcombine.high %v1960, %v1960
    %1971 = vst.msk [vmem:[#allocation3] sm:$0x3] %vm221, %v1936
    %1972 = vst.msk [vmem:[#allocation3 + $0x2] sm:$0x3] %vm221, %v1944
    %1973 = vst.msk [vmem:[#allocation3 + $0x4] sm:$0x3] %vm221, %v1943
    %1974 = vst.msk [vmem:[#allocation3 + $0x6] sm:$0x3] %vm221, %v1945
    %1975 = vst.msk [vmem:[#allocation3 + $0x8] sm:$0x3] %vm221, %v1953
    %1976 = vst.msk [vmem:[#allocation3 + $0xa] sm:$0x3] %vm221, %v1961
    %1977 = vst.msk [vmem:[#allocation3 + $0xc] sm:$0x3] %vm221, %v1960
    %1978 = vst.msk [vmem:[#allocation3 + $0xe] sm:$0x3] %vm221, %v1962
    %s1979 = scalar_lea.vmem [#allocation9], 32
    %v1980 = vld [vmem:[%s1979] sm:$0xff]
    %v1981 = vld [vmem:[%s1979 + $0x8] sm:$0xff]
    %v1982 = vld [vmem:[%s1979 + $0x10] sm:$0xff]
    %v1983 = vld [vmem:[%s1979 + $0x18] sm:$0xff]
    %s1984 = scalar_lea.vmem %s7, 1
    %v1985 = vld [vmem:[%s1984] sm:$0x1]
    %v1987 = vlaneseq
    %v1988 = vshrl.u32 %v1987, 7
    %v1989 = vsub.s32 0, %v1988
    %v1990 = vrot.slane %v1985, %v1989
    %1992 = vmatprep.subr.mxu0 0.0
    %1993 = vmatpush1.msra.mxu0 0.0
    %1994 = vmatprep.subr.mxu0 0.0
    %1995 = vmatpush1.msra.mxu0 0.0
    %1996 = vmatprep.subr.mxu0 0.0
    %1997 = vmatpush1.msra.mxu0 0.0
    %1998 = vmatprep.subr.mxu0 0.0
    %1999 = vmatpush1.msra.mxu0 0.0
    %2000 = vmatprep.subr.mxu0 0.0
    %2001 = vmatpush1.msra.mxu0 0.0
    %2002 = vmatprep.subr.mxu0 0.0
    %2003 = vmatpush1.msra.mxu0 0.0
    %2004 = vmatprep.subr.mxu0 0.0
    %2005 = vmatpush1.msra.mxu0 0.0
    %2006 = vmatprep.subr.mxu0 0.0
    %2007 = vmatpush1.msra.mxu0 0.0
    %2008 = vmatprep.subr.mxu0 0.0
    %2009 = vmatpush1.msra.mxu0 0.0
    %2010 = vmatprep.subr.mxu0 0.0
    %2011 = vmatpush1.msra.mxu0 0.0
    %2012 = vmatprep.subr.mxu0 0.0
    %2013 = vmatpush1.msra.mxu0 0.0
    %2014 = vmatprep.subr.mxu0 0.0
    %2015 = vmatpush1.msra.mxu0 0.0
    %2016 = vmatprep.subr.mxu0 0.0
    %2017 = vmatpush1.msra.mxu0 %v1983
    %2018 = vmatprep.subr.mxu0 0.0
    %2019 = vmatpush1.msra.mxu0 %v1982
    %2020 = vmatprep.subr.mxu0 0.0
    %2021 = vmatpush1.msra.mxu0 %v1981
    %2022 = vmatprep.subr.mxu0 0.0
    %2023 = vmatpush1.msra.mxu0 %v1980
    %2024 = vmatprep.subr.mxu0 0.0
    %2025 = vmatpush2.msra.mxu0 0.0
    %2026 = vmatprep.subr.mxu0 0.0
    %2027 = vmatpush2.msra.mxu0 0.0
    %2028 = vmatprep.subr.mxu0 0.0
    %2029 = vmatpush2.msra.mxu0 0.0
    %2030 = vmatprep.subr.mxu0 0.0
    %2031 = vmatpush2.msra.mxu0 0.0
    %2032 = vmatprep.subr.mxu0 0.0
    %2033 = vmatpush2.msra.mxu0 0.0
    %2034 = vmatprep.subr.mxu0 0.0
    %2035 = vmatpush2.msra.mxu0 0.0
    %2036 = vmatprep.subr.mxu0 0.0
    %2037 = vmatpush2.msra.mxu0 0.0
    %2038 = vmatprep.subr.mxu0 0.0
    %2039 = vmatpush2.msra.mxu0 0.0
    %2040 = vmatprep.subr.mxu0 0.0
    %2041 = vmatpush2.msra.mxu0 0.0
    %2042 = vmatprep.subr.mxu0 0.0
    %2043 = vmatpush2.msra.mxu0 0.0
    %2044 = vmatprep.subr.mxu0 0.0
    %2045 = vmatpush2.msra.mxu0 0.0
    %2046 = vmatprep.subr.mxu0 0.0
    %2047 = vmatpush2.msra.mxu0 0.0
    %2048 = vmatprep.subr.mxu0 0.0
    %2049 = vmatpush2.msra.mxu0 0.0
    %2050 = vmatprep.subr.mxu0 0.0
    %2051 = vmatpush2.msra.mxu0 0.0
    %2052 = vmatprep.subr.mxu0 0.0
    %2053 = vmatpush2.msra.mxu0 0.0
    %2054 = vmatprep.subr.mxu0 0.0
    %2055 = vmatpush2.msra.mxu0 0.0
    %2056 = vmatprep.mubr.f32.mxu0 0.0
    %2057 = vmatmul.mubr.f32.gmra.mxu0 %v1848
    %v2058 = vpop.f32.mrf.mxu0
    %v2059 = vadd.f32 %v1990, %v2058
    %v2060 = vpop.f32.mrf.mxu0
    %2061 = vmatprep.mubr.f32.mxu0 0.0
    %2062 = vmatmul.mubr.f32.gmra.mxu0 %v1850
    %v2063 = vpop.f32.mrf.mxu0
    %v2064 = vadd.f32 %v1990, %v2063
    %v2065 = vpop.f32.mrf.mxu0
    %2066 = vdwg.mxu0
    %v2069 = vcombine.high %v2059, %v2059
    %v2071 = vunpack.c.l.s4 1983009808
    %v2072 = vunpack.c.0.s8 %v2071
    %v2073 = vlaneseq
    %v2074 = vshrl.u32 %v2073, 7
    %v2075 = vsub.s32 %v2072, %v2074
    %v2076 = vrot.slane %v2059, %v2075
    %v2078 = vunpack.c.l.s4 1983009808
    %v2079 = vunpack.c.0.s8 %v2078
    %v2080 = vlaneseq
    %v2081 = vshrl.u32 %v2080, 7
    %v2082 = vsub.s32 %v2079, %v2081
    %v2083 = vrot.slane %v2069, %v2082
    %v2084 = vcombine.high %v2076, %v2076
    %v2085 = vcombine.high %v2083, %v2083
    %v2086 = vcombine.high %v2064, %v2064
    %v2088 = vunpack.c.l.s4 1983009808
    %v2089 = vunpack.c.0.s8 %v2088
    %v2090 = vlaneseq
    %v2091 = vshrl.u32 %v2090, 7
    %v2092 = vsub.s32 %v2089, %v2091
    %v2093 = vrot.slane %v2064, %v2092
    %v2095 = vunpack.c.l.s4 1983009808
    %v2096 = vunpack.c.0.s8 %v2095
    %v2097 = vlaneseq
    %v2098 = vshrl.u32 %v2097, 7
    %v2099 = vsub.s32 %v2096, %v2098
    %v2100 = vrot.slane %v2086, %v2099
    %v2101 = vcombine.high %v2093, %v2093
    %v2102 = vcombine.high %v2100, %v2100
    %2111 = vst.msk [vmem:[#allocation4] sm:$0x3] %vm221, %v2076
    %2112 = vst.msk [vmem:[#allocation4 + $0x2] sm:$0x3] %vm221, %v2084
    %2113 = vst.msk [vmem:[#allocation4 + $0x4] sm:$0x3] %vm221, %v2083
    %2114 = vst.msk [vmem:[#allocation4 + $0x6] sm:$0x3] %vm221, %v2085
    %2115 = vst.msk [vmem:[#allocation4 + $0x8] sm:$0x3] %vm221, %v2093
    %2116 = vst.msk [vmem:[#allocation4 + $0xa] sm:$0x3] %vm221, %v2101
    %2117 = vst.msk [vmem:[#allocation4 + $0xc] sm:$0x3] %vm221, %v2100
    %2118 = vst.msk [vmem:[#allocation4 + $0xe] sm:$0x3] %vm221, %v2102
    %s2119 = scalar_lea.vmem [#allocation9], 64
    %v2120 = vld [vmem:[%s2119] sm:$0xff]
    %v2121 = vld [vmem:[%s2119 + $0x8] sm:$0xff]
    %v2122 = vld [vmem:[%s2119 + $0x10] sm:$0xff]
    %v2123 = vld [vmem:[%s2119 + $0x18] sm:$0xff]
    %s2124 = scalar_lea.vmem %s7, 2
    %v2125 = vld [vmem:[%s2124] sm:$0x1]
    %v2127 = vlaneseq
    %v2128 = vshrl.u32 %v2127, 7
    %v2129 = vsub.s32 0, %v2128
    %v2130 = vrot.slane %v2125, %v2129
    %2132 = vmatprep.subr.mxu0 0.0
    %2133 = vmatpush1.msra.mxu0 0.0
    %2134 = vmatprep.subr.mxu0 0.0
    %2135 = vmatpush1.msra.mxu0 0.0
    %2136 = vmatprep.subr.mxu0 0.0
    %2137 = vmatpush1.msra.mxu0 0.0
    %2138 = vmatprep.subr.mxu0 0.0
    %2139 = vmatpush1.msra.mxu0 0.0
    %2140 = vmatprep.subr.mxu0 0.0
    %2141 = vmatpush1.msra.mxu0 0.0
    %2142 = vmatprep.subr.mxu0 0.0
    %2143 = vmatpush1.msra.mxu0 0.0
    %2144 = vmatprep.subr.mxu0 0.0
    %2145 = vmatpush1.msra.mxu0 0.0
    %2146 = vmatprep.subr.mxu0 0.0
    %2147 = vmatpush1.msra.mxu0 0.0
    %2148 = vmatprep.subr.mxu0 0.0
    %2149 = vmatpush1.msra.mxu0 0.0
    %2150 = vmatprep.subr.mxu0 0.0
    %2151 = vmatpush1.msra.mxu0 0.0
    %2152 = vmatprep.subr.mxu0 0.0
    %2153 = vmatpush1.msra.mxu0 0.0
    %2154 = vmatprep.subr.mxu0 0.0
    %2155 = vmatpush1.msra.mxu0 0.0
    %2156 = vmatprep.subr.mxu0 0.0
    %2157 = vmatpush1.msra.mxu0 %v2123
    %2158 = vmatprep.subr.mxu0 0.0
    %2159 = vmatpush1.msra.mxu0 %v2122
    %2160 = vmatprep.subr.mxu0 0.0
    %2161 = vmatpush1.msra.mxu0 %v2121
    %2162 = vmatprep.subr.mxu0 0.0
    %2163 = vmatpush1.msra.mxu0 %v2120
    %2164 = vmatprep.subr.mxu0 0.0
    %2165 = vmatpush2.msra.mxu0 0.0
    %2166 = vmatprep.subr.mxu0 0.0
    %2167 = vmatpush2.msra.mxu0 0.0
    %2168 = vmatprep.subr.mxu0 0.0
    %2169 = vmatpush2.msra.mxu0 0.0
    %2170 = vmatprep.subr.mxu0 0.0
    %2171 = vmatpush2.msra.mxu0 0.0
    %2172 = vmatprep.subr.mxu0 0.0
    %2173 = vmatpush2.msra.mxu0 0.0
    %2174 = vmatprep.subr.mxu0 0.0
    %2175 = vmatpush2.msra.mxu0 0.0
    %2176 = vmatprep.subr.mxu0 0.0
    %2177 = vmatpush2.msra.mxu0 0.0
    %2178 = vmatprep.subr.mxu0 0.0
    %2179 = vmatpush2.msra.mxu0 0.0
    %2180 = vmatprep.subr.mxu0 0.0
    %2181 = vmatpush2.msra.mxu0 0.0
    %2182 = vmatprep.subr.mxu0 0.0
    %2183 = vmatpush2.msra.mxu0 0.0
    %2184 = vmatprep.subr.mxu0 0.0
    %2185 = vmatpush2.msra.mxu0 0.0
    %2186 = vmatprep.subr.mxu0 0.0
    %2187 = vmatpush2.msra.mxu0 0.0
    %2188 = vmatprep.subr.mxu0 0.0
    %2189 = vmatpush2.msra.mxu0 0.0
    %2190 = vmatprep.subr.mxu0 0.0
    %2191 = vmatpush2.msra.mxu0 0.0
    %2192 = vmatprep.subr.mxu0 0.0
    %2193 = vmatpush2.msra.mxu0 0.0
    %2194 = vmatprep.subr.mxu0 0.0
    %2195 = vmatpush2.msra.mxu0 0.0
    %2196 = vmatprep.mubr.f32.mxu0 0.0
    %2197 = vmatmul.mubr.f32.gmra.mxu0 %v1848
    %v2198 = vpop.f32.mrf.mxu0
    %v2199 = vadd.f32 %v2130, %v2198
    %v2200 = vpop.f32.mrf.mxu0
    %2201 = vmatprep.mubr.f32.mxu0 0.0
    %2202 = vmatmul.mubr.f32.gmra.mxu0 %v1850
    %v2203 = vpop.f32.mrf.mxu0
    %v2204 = vadd.f32 %v2130, %v2203
    %v2205 = vpop.f32.mrf.mxu0
    %2206 = vdwg.mxu0
    %v2209 = vcombine.high %v2199, %v2199
    %v2211 = vunpack.c.l.s4 1983009808
    %v2212 = vunpack.c.0.s8 %v2211
    %v2213 = vlaneseq
    %v2214 = vshrl.u32 %v2213, 7
    %v2215 = vsub.s32 %v2212, %v2214
    %v2216 = vrot.slane %v2199, %v2215
    %v2218 = vunpack.c.l.s4 1983009808
    %v2219 = vunpack.c.0.s8 %v2218
    %v2220 = vlaneseq
    %v2221 = vshrl.u32 %v2220, 7
    %v2222 = vsub.s32 %v2219, %v2221
    %v2223 = vrot.slane %v2209, %v2222
    %v2224 = vcombine.high %v2216, %v2216
    %v2225 = vcombine.high %v2223, %v2223
    %v2226 = vcombine.high %v2204, %v2204
    %v2228 = vunpack.c.l.s4 1983009808
    %v2229 = vunpack.c.0.s8 %v2228
    %v2230 = vlaneseq
    %v2231 = vshrl.u32 %v2230, 7
    %v2232 = vsub.s32 %v2229, %v2231
    %v2233 = vrot.slane %v2204, %v2232
    %v2235 = vunpack.c.l.s4 1983009808
    %v2236 = vunpack.c.0.s8 %v2235
    %v2237 = vlaneseq
    %v2238 = vshrl.u32 %v2237, 7
    %v2239 = vsub.s32 %v2236, %v2238
    %v2240 = vrot.slane %v2226, %v2239
    %v2241 = vcombine.high %v2233, %v2233
    %v2242 = vcombine.high %v2240, %v2240
    %2251 = vst.msk [vmem:[#allocation5] sm:$0x3] %vm221, %v2216
    %2252 = vst.msk [vmem:[#allocation5 + $0x2] sm:$0x3] %vm221, %v2224
    %2253 = vst.msk [vmem:[#allocation5 + $0x4] sm:$0x3] %vm221, %v2223
    %2254 = vst.msk [vmem:[#allocation5 + $0x6] sm:$0x3] %vm221, %v2225
    %2255 = vst.msk [vmem:[#allocation5 + $0x8] sm:$0x3] %vm221, %v2233
    %2256 = vst.msk [vmem:[#allocation5 + $0xa] sm:$0x3] %vm221, %v2241
    %2257 = vst.msk [vmem:[#allocation5 + $0xc] sm:$0x3] %vm221, %v2240
    %2258 = vst.msk [vmem:[#allocation5 + $0xe] sm:$0x3] %vm221, %v2242
    %v2259 = vld [vmem:[#allocation11] sm:$0xf]
    %v2260 = vld [vmem:[#allocation11 + $0x4] sm:$0xf]
    %v2261 = vld [vmem:[#allocation11 + $0x8] sm:$0xf]
    %v2262 = vld [vmem:[#allocation11 + $0xc] sm:$0xf]
    %s2263 = scalar_lea.vmem [#allocation11], 16
    %v2264 = vld [vmem:[%s2263] sm:$0xf]
    %v2265 = vld [vmem:[%s2263 + $0x4] sm:$0xf]
    %v2266 = vld [vmem:[%s2263 + $0x8] sm:$0xf]
    %v2267 = vld [vmem:[%s2263 + $0xc] sm:$0xf]
    %s2268 = scalar_lea.vmem [#allocation11], 32
    %v2269 = vld [vmem:[%s2268] sm:$0xf]
    %v2270 = vld [vmem:[%s2268 + $0x4] sm:$0xf]
    %v2271 = vld [vmem:[%s2268 + $0x8] sm:$0xf]
    %v2272 = vld [vmem:[%s2268 + $0xc] sm:$0xf]
    %v2273 = vld [vmem:[%s8] sm:$0x1]
    %v2275 = vlaneseq
    %v2276 = vshrl.u32 %v2275, 7
    %v2277 = vsub.s32 0, %v2276
    %v2278 = vrot.slane %v2273, %v2277
    %v2284 = vunpack.c.l.b16 %v2259
    %v2285 = vunpack.c.l.b16 %v2260
    %v2286 = vunpack.c.l.b16 %v2261
    %v2287 = vunpack.c.l.b16 %v2262
    %v2288 = vpack.c.b16 %v2285, %v2284
    %v2289 = vpack.c.b16 %v2287, %v2286
    %2292 = vmatprep.subr.bf16.mxu0 0
    %2293 = vmatpush1.bf16.msra.mxu0 0
    %2294 = vmatprep.subr.bf16.mxu0 0
    %2295 = vmatpush1.bf16.msra.mxu0 0
    %2296 = vmatprep.subr.bf16.mxu0 0
    %2297 = vmatpush1.bf16.msra.mxu0 0
    %2298 = vmatprep.subr.bf16.mxu0 0
    %2299 = vmatpush1.bf16.msra.mxu0 0
    %2300 = vmatprep.subr.bf16.mxu0 0
    %2301 = vmatpush1.bf16.msra.mxu0 0
    %2302 = vmatprep.subr.bf16.mxu0 0
    %2303 = vmatpush1.bf16.msra.mxu0 0
    %2304 = vmatprep.subr.bf16.mxu0 0
    %2305 = vmatpush1.bf16.msra.mxu0 %v2289
    %2306 = vmatprep.subr.bf16.mxu0 0
    %2307 = vmatpush1.bf16.msra.mxu0 %v2288
    %2308 = vmatprep.subr.bf16.mxu0 0
    %2309 = vmatpush2.bf16.msra.mxu0 0
    %2310 = vmatprep.subr.bf16.mxu0 0
    %2311 = vmatpush2.bf16.msra.mxu0 0
    %2312 = vmatprep.subr.bf16.mxu0 0
    %2313 = vmatpush2.bf16.msra.mxu0 0
    %2314 = vmatprep.subr.bf16.mxu0 0
    %2315 = vmatpush2.bf16.msra.mxu0 0
    %2316 = vmatprep.subr.bf16.mxu0 0
    %2317 = vmatpush2.bf16.msra.mxu0 0
    %2318 = vmatprep.subr.bf16.mxu0 0
    %2319 = vmatpush2.bf16.msra.mxu0 0
    %2320 = vmatprep.subr.bf16.mxu0 0
    %2321 = vmatpush2.bf16.msra.mxu0 0
    %2322 = vmatprep.subr.bf16.mxu0 0
    %2323 = vmatpush2.bf16.msra.mxu0 0
    %2324 = vmatprep.mubr.bf16.mxu0 0
    %2325 = vmatmul.mubr.bf16.gmra.mxu0 %v545
    %v2326 = vpop.f32.mrf.mxu0
    %v2327 = vadd.f32 0.0, %v2326
    %v2328 = vpop.f32.mrf.mxu0
    %v2329 = vpop.f32.mrf.mxu0
    %v2330 = vpop.f32.mrf.mxu0
    %2331 = vdwg.mxu0
    %v2336 = vunpack.c.l.b16 %v2264
    %v2337 = vunpack.c.l.b16 %v2265
    %v2338 = vunpack.c.l.b16 %v2266
    %v2339 = vunpack.c.l.b16 %v2267
    %v2340 = vpack.c.b16 %v2337, %v2336
    %v2341 = vpack.c.b16 %v2339, %v2338
    %2344 = vmatprep.subr.bf16.mxu0 0
    %2345 = vmatpush1.bf16.msra.mxu0 0
    %2346 = vmatprep.subr.bf16.mxu0 0
    %2347 = vmatpush1.bf16.msra.mxu0 0
    %2348 = vmatprep.subr.bf16.mxu0 0
    %2349 = vmatpush1.bf16.msra.mxu0 0
    %2350 = vmatprep.subr.bf16.mxu0 0
    %2351 = vmatpush1.bf16.msra.mxu0 0
    %2352 = vmatprep.subr.bf16.mxu0 0
    %2353 = vmatpush1.bf16.msra.mxu0 0
    %2354 = vmatprep.subr.bf16.mxu0 0
    %2355 = vmatpush1.bf16.msra.mxu0 0
    %2356 = vmatprep.subr.bf16.mxu0 0
    %2357 = vmatpush1.bf16.msra.mxu0 %v2341
    %2358 = vmatprep.subr.bf16.mxu0 0
    %2359 = vmatpush1.bf16.msra.mxu0 %v2340
    %2360 = vmatprep.subr.bf16.mxu0 0
    %2361 = vmatpush2.bf16.msra.mxu0 0
    %2362 = vmatprep.subr.bf16.mxu0 0
    %2363 = vmatpush2.bf16.msra.mxu0 0
    %2364 = vmatprep.subr.bf16.mxu0 0
    %2365 = vmatpush2.bf16.msra.mxu0 0
    %2366 = vmatprep.subr.bf16.mxu0 0
    %2367 = vmatpush2.bf16.msra.mxu0 0
    %2368 = vmatprep.subr.bf16.mxu0 0
    %2369 = vmatpush2.bf16.msra.mxu0 0
    %2370 = vmatprep.subr.bf16.mxu0 0
    %2371 = vmatpush2.bf16.msra.mxu0 0
    %2372 = vmatprep.subr.bf16.mxu0 0
    %2373 = vmatpush2.bf16.msra.mxu0 0
    %2374 = vmatprep.subr.bf16.mxu0 0
    %2375 = vmatpush2.bf16.msra.mxu0 0
    %2376 = vmatprep.mubr.bf16.mxu0 0
    %2377 = vmatmul.mubr.bf16.gmra.mxu0 %v545
    %v2378 = vpop.f32.mrf.mxu0
    %v2379 = vadd.f32 0.0, %v2378
    %v2380 = vpop.f32.mrf.mxu0
    %v2381 = vpop.f32.mrf.mxu0
    %v2382 = vpop.f32.mrf.mxu0
    %2383 = vdwg.mxu0
    %v2384 = vld [vmem:[#allocation3] sm:$0x3]
    %v2385 = vadd.f32 %v2384, %v2327
    %v2386 = vxor.u32 %v2385, 2147483648
    %v2387 = vmul.f32 %v2386, 1.442695
    %v2388 = vpow.pop %v2387
    %v2389 = vadd.f32 %v2388, 1.0
    %v2390 = vrcp.pop %v2389
    %v2391 = vmul.f32 1.0, %v2390
    %v2392 = vld [vmem:[#allocation4] sm:$0x3]
    %v2393 = vadd.f32 %v2392, %v2379
    %v2394 = vxor.u32 %v2393, 2147483648
    %v2395 = vmul.f32 %v2394, 1.442695
    %v2396 = vpow.pop %v2395
    %v2397 = vadd.f32 %v2396, 1.0
    %v2398 = vrcp.pop %v2397
    %v2399 = vmul.f32 1.0, %v2398
    %v2400 = vld [vmem:[#allocation5] sm:$0x3]
    %v2405 = vunpack.c.l.b16 %v2269
    %v2406 = vunpack.c.l.b16 %v2270
    %v2407 = vunpack.c.l.b16 %v2271
    %v2408 = vunpack.c.l.b16 %v2272
    %v2409 = vpack.c.b16 %v2406, %v2405
    %v2410 = vpack.c.b16 %v2408, %v2407
    %2413 = vmatprep.subr.bf16.mxu0 0
    %2414 = vmatpush1.bf16.msra.mxu0 0
    %2415 = vmatprep.subr.bf16.mxu0 0
    %2416 = vmatpush1.bf16.msra.mxu0 0
    %2417 = vmatprep.subr.bf16.mxu0 0
    %2418 = vmatpush1.bf16.msra.mxu0 0
    %2419 = vmatprep.subr.bf16.mxu0 0
    %2420 = vmatpush1.bf16.msra.mxu0 0
    %2421 = vmatprep.subr.bf16.mxu0 0
    %2422 = vmatpush1.bf16.msra.mxu0 0
    %2423 = vmatprep.subr.bf16.mxu0 0
    %2424 = vmatpush1.bf16.msra.mxu0 0
    %2425 = vmatprep.subr.bf16.mxu0 0
    %2426 = vmatpush1.bf16.msra.mxu0 %v2410
    %2427 = vmatprep.subr.bf16.mxu0 0
    %2428 = vmatpush1.bf16.msra.mxu0 %v2409
    %2429 = vmatprep.subr.bf16.mxu0 0
    %2430 = vmatpush2.bf16.msra.mxu0 0
    %2431 = vmatprep.subr.bf16.mxu0 0
    %2432 = vmatpush2.bf16.msra.mxu0 0
    %2433 = vmatprep.subr.bf16.mxu0 0
    %2434 = vmatpush2.bf16.msra.mxu0 0
    %2435 = vmatprep.subr.bf16.mxu0 0
    %2436 = vmatpush2.bf16.msra.mxu0 0
    %2437 = vmatprep.subr.bf16.mxu0 0
    %2438 = vmatpush2.bf16.msra.mxu0 0
    %2439 = vmatprep.subr.bf16.mxu0 0
    %2440 = vmatpush2.bf16.msra.mxu0 0
    %2441 = vmatprep.subr.bf16.mxu0 0
    %2442 = vmatpush2.bf16.msra.mxu0 0
    %2443 = vmatprep.subr.bf16.mxu0 0
    %2444 = vmatpush2.bf16.msra.mxu0 0
    %2445 = vmatprep.mubr.bf16.mxu0 0
    %2446 = vmatmul.mubr.bf16.gmra.mxu0 %v545
    %v2447 = vpop.f32.mrf.mxu0
    %v2448 = vadd.f32 %v2278, %v2447
    %v2449 = vpop.f32.mrf.mxu0
    %v2450 = vpop.f32.mrf.mxu0
    %v2451 = vpop.f32.mrf.mxu0
    %2452 = vdwg.mxu0
    %v2453 = vmul.f32 %v2391, %v2448
    %v2454 = vadd.f32 %v2400, %v2453
    %v2455 = vtanh.pop %v2454
    %v2456 = vsub.f32 1.0, %v2399
    %v2457 = vmul.f32 %v2456, %v2455
    %v2458 = vmul.f32 %v2399, 0.0
    %v2459 = vadd.f32 %v2457, %v2458
    %v2460 = vpack.c.bf16 %v2459, %v2459
    %v2462 = vsel %vm543, %v2460, 0
    %2464 = vmatprep.subr.bf16.mxu0 0
    %2465 = vmatpush1.bf16.msra.mxu0 0
    %2466 = vmatprep.subr.bf16.mxu0 0
    %2467 = vmatpush1.bf16.msra.mxu0 0
    %2468 = vmatprep.subr.bf16.mxu0 0
    %2469 = vmatpush1.bf16.msra.mxu0 0
    %2470 = vmatprep.subr.bf16.mxu0 0
    %2471 = vmatpush1.bf16.msra.mxu0 0
    %2472 = vmatprep.subr.bf16.mxu0 0
    %2473 = vmatpush1.bf16.msra.mxu0 0
    %2474 = vmatprep.subr.bf16.mxu0 0
    %2475 = vmatpush1.bf16.msra.mxu0 0
    %2476 = vmatprep.subr.bf16.mxu0 0
    %2477 = vmatpush1.bf16.msra.mxu0 %v2289
    %2478 = vmatprep.subr.bf16.mxu0 0
    %2479 = vmatpush1.bf16.msra.mxu0 %v2288
    %2480 = vmatprep.subr.bf16.mxu0 0
    %2481 = vmatpush2.bf16.msra.mxu0 0
    %2482 = vmatprep.subr.bf16.mxu0 0
    %2483 = vmatpush2.bf16.msra.mxu0 0
    %2484 = vmatprep.subr.bf16.mxu0 0
    %2485 = vmatpush2.bf16.msra.mxu0 0
    %2486 = vmatprep.subr.bf16.mxu0 0
    %2487 = vmatpush2.bf16.msra.mxu0 0
    %2488 = vmatprep.subr.bf16.mxu0 0
    %2489 = vmatpush2.bf16.msra.mxu0 0
    %2490 = vmatprep.subr.bf16.mxu0 0
    %2491 = vmatpush2.bf16.msra.mxu0 0
    %2492 = vmatprep.subr.bf16.mxu0 0
    %2493 = vmatpush2.bf16.msra.mxu0 0
    %2494 = vmatprep.subr.bf16.mxu0 0
    %2495 = vmatpush2.bf16.msra.mxu0 0
    %2496 = vmatprep.mubr.bf16.mxu0 0
    %2497 = vmatmul.mubr.bf16.gmra.mxu0 %v2462
    %v2498 = vpop.f32.mrf.mxu0
    %v2499 = vadd.f32 0.0, %v2498
    %v2500 = vpop.f32.mrf.mxu0
    %v2501 = vpop.f32.mrf.mxu0
    %v2502 = vpop.f32.mrf.mxu0
    %2503 = vdwg.mxu0
    %2504 = vmatprep.subr.bf16.mxu0 0
    %2505 = vmatpush1.bf16.msra.mxu0 0
    %2506 = vmatprep.subr.bf16.mxu0 0
    %2507 = vmatpush1.bf16.msra.mxu0 0
    %2508 = vmatprep.subr.bf16.mxu0 0
    %2509 = vmatpush1.bf16.msra.mxu0 0
    %2510 = vmatprep.subr.bf16.mxu0 0
    %2511 = vmatpush1.bf16.msra.mxu0 0
    %2512 = vmatprep.subr.bf16.mxu0 0
    %2513 = vmatpush1.bf16.msra.mxu0 0
    %2514 = vmatprep.subr.bf16.mxu0 0
    %2515 = vmatpush1.bf16.msra.mxu0 0
    %2516 = vmatprep.subr.bf16.mxu0 0
    %2517 = vmatpush1.bf16.msra.mxu0 %v2341
    %2518 = vmatprep.subr.bf16.mxu0 0
    %2519 = vmatpush1.bf16.msra.mxu0 %v2340
    %2520 = vmatprep.subr.bf16.mxu0 0
    %2521 = vmatpush2.bf16.msra.mxu0 0
    %2522 = vmatprep.subr.bf16.mxu0 0
    %2523 = vmatpush2.bf16.msra.mxu0 0
    %2524 = vmatprep.subr.bf16.mxu0 0
    %2525 = vmatpush2.bf16.msra.mxu0 0
    %2526 = vmatprep.subr.bf16.mxu0 0
    %2527 = vmatpush2.bf16.msra.mxu0 0
    %2528 = vmatprep.subr.bf16.mxu0 0
    %2529 = vmatpush2.bf16.msra.mxu0 0
    %2530 = vmatprep.subr.bf16.mxu0 0
    %2531 = vmatpush2.bf16.msra.mxu0 0
    %2532 = vmatprep.subr.bf16.mxu0 0
    %2533 = vmatpush2.bf16.msra.mxu0 0
    %2534 = vmatprep.subr.bf16.mxu0 0
    %2535 = vmatpush2.bf16.msra.mxu0 0
    %2536 = vmatprep.mubr.bf16.mxu0 0
    %2537 = vmatmul.mubr.bf16.gmra.mxu0 %v2462
    %v2538 = vpop.f32.mrf.mxu0
    %v2539 = vadd.f32 0.0, %v2538
    %v2540 = vpop.f32.mrf.mxu0
    %v2541 = vpop.f32.mrf.mxu0
    %v2542 = vpop.f32.mrf.mxu0
    %2543 = vdwg.mxu0
    %v2544 = vld [vmem:[%s800] sm:$0x3]
    %v2545 = vadd.f32 %v2544, %v2499
    %v2546 = vxor.u32 %v2545, 2147483648
    %v2547 = vmul.f32 %v2546, 1.442695
    %v2548 = vpow.pop %v2547
    %v2549 = vadd.f32 %v2548, 1.0
    %v2550 = vrcp.pop %v2549
    %v2551 = vmul.f32 1.0, %v2550
    %v2552 = vld [vmem:[%s809] sm:$0x3]
    %v2553 = vadd.f32 %v2552, %v2539
    %v2554 = vxor.u32 %v2553, 2147483648
    %v2555 = vmul.f32 %v2554, 1.442695
    %v2556 = vpow.pop %v2555
    %v2557 = vadd.f32 %v2556, 1.0
    %v2558 = vrcp.pop %v2557
    %v2559 = vmul.f32 1.0, %v2558
    %v2560 = vld [vmem:[%s818] sm:$0x3]
    %2561 = vmatprep.subr.bf16.mxu0 0
    %2562 = vmatpush1.bf16.msra.mxu0 0
    %2563 = vmatprep.subr.bf16.mxu0 0
    %2564 = vmatpush1.bf16.msra.mxu0 0
    %2565 = vmatprep.subr.bf16.mxu0 0
    %2566 = vmatpush1.bf16.msra.mxu0 0
    %2567 = vmatprep.subr.bf16.mxu0 0
    %2568 = vmatpush1.bf16.msra.mxu0 0
    %2569 = vmatprep.subr.bf16.mxu0 0
    %2570 = vmatpush1.bf16.msra.mxu0 0
    %2571 = vmatprep.subr.bf16.mxu0 0
    %2572 = vmatpush1.bf16.msra.mxu0 0
    %2573 = vmatprep.subr.bf16.mxu0 0
    %2574 = vmatpush1.bf16.msra.mxu0 %v2410
    %2575 = vmatprep.subr.bf16.mxu0 0
    %2576 = vmatpush1.bf16.msra.mxu0 %v2409
    %2577 = vmatprep.subr.bf16.mxu0 0
    %2578 = vmatpush2.bf16.msra.mxu0 0
    %2579 = vmatprep.subr.bf16.mxu0 0
    %2580 = vmatpush2.bf16.msra.mxu0 0
    %2581 = vmatprep.subr.bf16.mxu0 0
    %2582 = vmatpush2.bf16.msra.mxu0 0
    %2583 = vmatprep.subr.bf16.mxu0 0
    %2584 = vmatpush2.bf16.msra.mxu0 0
    %2585 = vmatprep.subr.bf16.mxu0 0
    %2586 = vmatpush2.bf16.msra.mxu0 0
    %2587 = vmatprep.subr.bf16.mxu0 0
    %2588 = vmatpush2.bf16.msra.mxu0 0
    %2589 = vmatprep.subr.bf16.mxu0 0
    %2590 = vmatpush2.bf16.msra.mxu0 0
    %2591 = vmatprep.subr.bf16.mxu0 0
    %2592 = vmatpush2.bf16.msra.mxu0 0
    %2593 = vmatprep.mubr.bf16.mxu0 0
    %2594 = vmatmul.mubr.bf16.gmra.mxu0 %v2462
    %v2595 = vpop.f32.mrf.mxu0
    %v2596 = vadd.f32 %v2278, %v2595
    %v2597 = vpop.f32.mrf.mxu0
    %v2598 = vpop.f32.mrf.mxu0
    %v2599 = vpop.f32.mrf.mxu0
    %2600 = vdwg.mxu0
    %v2601 = vmul.f32 %v2551, %v2596
    %v2602 = vadd.f32 %v2560, %v2601
    %v2603 = vtanh.pop %v2602
    %v2604 = vsub.f32 1.0, %v2559
    %v2605 = vmul.f32 %v2604, %v2603
    %v2606 = vmul.f32 %v2559, %v2459
    %v2607 = vadd.f32 %v2605, %v2606
    %v2608 = vpack.c.bf16 %v2607, %v2607
    %v2610 = vsel %vm543, %v2608, 0
    %2612 = vmatprep.subr.bf16.mxu0 0
    %2613 = vmatpush1.bf16.msra.mxu0 0
    %2614 = vmatprep.subr.bf16.mxu0 0
    %2615 = vmatpush1.bf16.msra.mxu0 0
    %2616 = vmatprep.subr.bf16.mxu0 0
    %2617 = vmatpush1.bf16.msra.mxu0 0
    %2618 = vmatprep.subr.bf16.mxu0 0
    %2619 = vmatpush1.bf16.msra.mxu0 0
    %2620 = vmatprep.subr.bf16.mxu0 0
    %2621 = vmatpush1.bf16.msra.mxu0 0
    %2622 = vmatprep.subr.bf16.mxu0 0
    %2623 = vmatpush1.bf16.msra.mxu0 0
    %2624 = vmatprep.subr.bf16.mxu0 0
    %2625 = vmatpush1.bf16.msra.mxu0 %v2289
    %2626 = vmatprep.subr.bf16.mxu0 0
    %2627 = vmatpush1.bf16.msra.mxu0 %v2288
    %2628 = vmatprep.subr.bf16.mxu0 0
    %2629 = vmatpush2.bf16.msra.mxu0 0
    %2630 = vmatprep.subr.bf16.mxu0 0
    %2631 = vmatpush2.bf16.msra.mxu0 0
    %2632 = vmatprep.subr.bf16.mxu0 0
    %2633 = vmatpush2.bf16.msra.mxu0 0
    %2634 = vmatprep.subr.bf16.mxu0 0
    %2635 = vmatpush2.bf16.msra.mxu0 0
    %2636 = vmatprep.subr.bf16.mxu0 0
    %2637 = vmatpush2.bf16.msra.mxu0 0
    %2638 = vmatprep.subr.bf16.mxu0 0
    %2639 = vmatpush2.bf16.msra.mxu0 0
    %2640 = vmatprep.subr.bf16.mxu0 0
    %2641 = vmatpush2.bf16.msra.mxu0 0
    %2642 = vmatprep.subr.bf16.mxu0 0
    %2643 = vmatpush2.bf16.msra.mxu0 0
    %2644 = vmatprep.mubr.bf16.mxu0 0
    %2645 = vmatmul.mubr.bf16.gmra.mxu0 %v2610
    %v2646 = vpop.f32.mrf.mxu0
    %v2647 = vadd.f32 0.0, %v2646
    %v2648 = vpop.f32.mrf.mxu0
    %v2649 = vpop.f32.mrf.mxu0
    %v2650 = vpop.f32.mrf.mxu0
    %2651 = vdwg.mxu0
    %2652 = vmatprep.subr.bf16.mxu0 0
    %2653 = vmatpush1.bf16.msra.mxu0 0
    %2654 = vmatprep.subr.bf16.mxu0 0
    %2655 = vmatpush1.bf16.msra.mxu0 0
    %2656 = vmatprep.subr.bf16.mxu0 0
    %2657 = vmatpush1.bf16.msra.mxu0 0
    %2658 = vmatprep.subr.bf16.mxu0 0
    %2659 = vmatpush1.bf16.msra.mxu0 0
    %2660 = vmatprep.subr.bf16.mxu0 0
    %2661 = vmatpush1.bf16.msra.mxu0 0
    %2662 = vmatprep.subr.bf16.mxu0 0
    %2663 = vmatpush1.bf16.msra.mxu0 0
    %2664 = vmatprep.subr.bf16.mxu0 0
    %2665 = vmatpush1.bf16.msra.mxu0 %v2341
    %2666 = vmatprep.subr.bf16.mxu0 0
    %2667 = vmatpush1.bf16.msra.mxu0 %v2340
    %2668 = vmatprep.subr.bf16.mxu0 0
    %2669 = vmatpush2.bf16.msra.mxu0 0
    %2670 = vmatprep.subr.bf16.mxu0 0
    %2671 = vmatpush2.bf16.msra.mxu0 0
    %2672 = vmatprep.subr.bf16.mxu0 0
    %2673 = vmatpush2.bf16.msra.mxu0 0
    %2674 = vmatprep.subr.bf16.mxu0 0
    %2675 = vmatpush2.bf16.msra.mxu0 0
    %2676 = vmatprep.subr.bf16.mxu0 0
    %2677 = vmatpush2.bf16.msra.mxu0 0
    %2678 = vmatprep.subr.bf16.mxu0 0
    %2679 = vmatpush2.bf16.msra.mxu0 0
    %2680 = vmatprep.subr.bf16.mxu0 0
    %2681 = vmatpush2.bf16.msra.mxu0 0
    %2682 = vmatprep.subr.bf16.mxu0 0
    %2683 = vmatpush2.bf16.msra.mxu0 0
    %2684 = vmatprep.mubr.bf16.mxu0 0
    %2685 = vmatmul.mubr.bf16.gmra.mxu0 %v2610
    %v2686 = vpop.f32.mrf.mxu0
    %v2687 = vadd.f32 0.0, %v2686
    %v2688 = vpop.f32.mrf.mxu0
    %v2689 = vpop.f32.mrf.mxu0
    %v2690 = vpop.f32.mrf.mxu0
    %2691 = vdwg.mxu0
    %v2692 = vld [vmem:[%s953] sm:$0x3]
    %v2693 = vadd.f32 %v2692, %v2647
    %v2694 = vxor.u32 %v2693, 2147483648
    %v2695 = vmul.f32 %v2694, 1.442695
    %v2696 = vpow.pop %v2695
    %v2697 = vadd.f32 %v2696, 1.0
    %v2698 = vrcp.pop %v2697
    %v2699 = vmul.f32 1.0, %v2698
    %v2700 = vld [vmem:[%s962] sm:$0x3]
    %v2701 = vadd.f32 %v2700, %v2687
    %v2702 = vxor.u32 %v2701, 2147483648
    %v2703 = vmul.f32 %v2702, 1.442695
    %v2704 = vpow.pop %v2703
    %v2705 = vadd.f32 %v2704, 1.0
    %v2706 = vrcp.pop %v2705
    %v2707 = vmul.f32 1.0, %v2706
    %v2708 = vld [vmem:[%s971] sm:$0x3]
    %2709 = vmatprep.subr.bf16.mxu0 0
    %2710 = vmatpush1.bf16.msra.mxu0 0
    %2711 = vmatprep.subr.bf16.mxu0 0
    %2712 = vmatpush1.bf16.msra.mxu0 0
    %2713 = vmatprep.subr.bf16.mxu0 0
    %2714 = vmatpush1.bf16.msra.mxu0 0
    %2715 = vmatprep.subr.bf16.mxu0 0
    %2716 = vmatpush1.bf16.msra.mxu0 0
    %2717 = vmatprep.subr.bf16.mxu0 0
    %2718 = vmatpush1.bf16.msra.mxu0 0
    %2719 = vmatprep.subr.bf16.mxu0 0
    %2720 = vmatpush1.bf16.msra.mxu0 0
    %2721 = vmatprep.subr.bf16.mxu0 0
    %2722 = vmatpush1.bf16.msra.mxu0 %v2410
    %2723 = vmatprep.subr.bf16.mxu0 0
    %2724 = vmatpush1.bf16.msra.mxu0 %v2409
    %2725 = vmatprep.subr.bf16.mxu0 0
    %2726 = vmatpush2.bf16.msra.mxu0 0
    %2727 = vmatprep.subr.bf16.mxu0 0
    %2728 = vmatpush2.bf16.msra.mxu0 0
    %2729 = vmatprep.subr.bf16.mxu0 0
    %2730 = vmatpush2.bf16.msra.mxu0 0
    %2731 = vmatprep.subr.bf16.mxu0 0
    %2732 = vmatpush2.bf16.msra.mxu0 0
    %2733 = vmatprep.subr.bf16.mxu0 0
    %2734 = vmatpush2.bf16.msra.mxu0 0
    %2735 = vmatprep.subr.bf16.mxu0 0
    %2736 = vmatpush2.bf16.msra.mxu0 0
    %2737 = vmatprep.subr.bf16.mxu0 0
    %2738 = vmatpush2.bf16.msra.mxu0 0
    %2739 = vmatprep.subr.bf16.mxu0 0
    %2740 = vmatpush2.bf16.msra.mxu0 0
    %2741 = vmatprep.mubr.bf16.mxu0 0
    %2742 = vmatmul.mubr.bf16.gmra.mxu0 %v2610
    %v2743 = vpop.f32.mrf.mxu0
    %v2744 = vadd.f32 %v2278, %v2743
    %v2745 = vpop.f32.mrf.mxu0
    %v2746 = vpop.f32.mrf.mxu0
    %v2747 = vpop.f32.mrf.mxu0
    %2748 = vdwg.mxu0
    %v2749 = vmul.f32 %v2699, %v2744
    %v2750 = vadd.f32 %v2708, %v2749
    %v2751 = vtanh.pop %v2750
    %v2752 = vsub.f32 1.0, %v2707
    %v2753 = vmul.f32 %v2752, %v2751
    %v2754 = vmul.f32 %v2707, %v2607
    %v2755 = vadd.f32 %v2753, %v2754
    %v2756 = vpack.c.bf16 %v2755, %v2755
    %v2758 = vsel %vm543, %v2756, 0
    %2760 = vmatprep.subr.bf16.mxu0 0
    %2761 = vmatpush1.bf16.msra.mxu0 0
    %2762 = vmatprep.subr.bf16.mxu0 0
    %2763 = vmatpush1.bf16.msra.mxu0 0
    %2764 = vmatprep.subr.bf16.mxu0 0
    %2765 = vmatpush1.bf16.msra.mxu0 0
    %2766 = vmatprep.subr.bf16.mxu0 0
    %2767 = vmatpush1.bf16.msra.mxu0 0
    %2768 = vmatprep.subr.bf16.mxu0 0
    %2769 = vmatpush1.bf16.msra.mxu0 0
    %2770 = vmatprep.subr.bf16.mxu0 0
    %2771 = vmatpush1.bf16.msra.mxu0 0
    %2772 = vmatprep.subr.bf16.mxu0 0
    %2773 = vmatpush1.bf16.msra.mxu0 %v2289
    %2774 = vmatprep.subr.bf16.mxu0 0
    %2775 = vmatpush1.bf16.msra.mxu0 %v2288
    %2776 = vmatprep.subr.bf16.mxu0 0
    %2777 = vmatpush2.bf16.msra.mxu0 0
    %2778 = vmatprep.subr.bf16.mxu0 0
    %2779 = vmatpush2.bf16.msra.mxu0 0
    %2780 = vmatprep.subr.bf16.mxu0 0
    %2781 = vmatpush2.bf16.msra.mxu0 0
    %2782 = vmatprep.subr.bf16.mxu0 0
    %2783 = vmatpush2.bf16.msra.mxu0 0
    %2784 = vmatprep.subr.bf16.mxu0 0
    %2785 = vmatpush2.bf16.msra.mxu0 0
    %2786 = vmatprep.subr.bf16.mxu0 0
    %2787 = vmatpush2.bf16.msra.mxu0 0
    %2788 = vmatprep.subr.bf16.mxu0 0
    %2789 = vmatpush2.bf16.msra.mxu0 0
    %2790 = vmatprep.subr.bf16.mxu0 0
    %2791 = vmatpush2.bf16.msra.mxu0 0
    %2792 = vmatprep.mubr.bf16.mxu0 0
    %2793 = vmatmul.mubr.bf16.gmra.mxu0 %v2758
    %v2794 = vpop.f32.mrf.mxu0
    %v2795 = vadd.f32 0.0, %v2794
    %v2796 = vpop.f32.mrf.mxu0
    %v2797 = vpop.f32.mrf.mxu0
    %v2798 = vpop.f32.mrf.mxu0
    %2799 = vdwg.mxu0
    %2800 = vmatprep.subr.bf16.mxu0 0
    %2801 = vmatpush1.bf16.msra.mxu0 0
    %2802 = vmatprep.subr.bf16.mxu0 0
    %2803 = vmatpush1.bf16.msra.mxu0 0
    %2804 = vmatprep.subr.bf16.mxu0 0
    %2805 = vmatpush1.bf16.msra.mxu0 0
    %2806 = vmatprep.subr.bf16.mxu0 0
    %2807 = vmatpush1.bf16.msra.mxu0 0
    %2808 = vmatprep.subr.bf16.mxu0 0
    %2809 = vmatpush1.bf16.msra.mxu0 0
    %2810 = vmatprep.subr.bf16.mxu0 0
    %2811 = vmatpush1.bf16.msra.mxu0 0
    %2812 = vmatprep.subr.bf16.mxu0 0
    %2813 = vmatpush1.bf16.msra.mxu0 %v2341
    %2814 = vmatprep.subr.bf16.mxu0 0
    %2815 = vmatpush1.bf16.msra.mxu0 %v2340
    %2816 = vmatprep.subr.bf16.mxu0 0
    %2817 = vmatpush2.bf16.msra.mxu0 0
    %2818 = vmatprep.subr.bf16.mxu0 0
    %2819 = vmatpush2.bf16.msra.mxu0 0
    %2820 = vmatprep.subr.bf16.mxu0 0
    %2821 = vmatpush2.bf16.msra.mxu0 0
    %2822 = vmatprep.subr.bf16.mxu0 0
    %2823 = vmatpush2.bf16.msra.mxu0 0
    %2824 = vmatprep.subr.bf16.mxu0 0
    %2825 = vmatpush2.bf16.msra.mxu0 0
    %2826 = vmatprep.subr.bf16.mxu0 0
    %2827 = vmatpush2.bf16.msra.mxu0 0
    %2828 = vmatprep.subr.bf16.mxu0 0
    %2829 = vmatpush2.bf16.msra.mxu0 0
    %2830 = vmatprep.subr.bf16.mxu0 0
    %2831 = vmatpush2.bf16.msra.mxu0 0
    %2832 = vmatprep.mubr.bf16.mxu0 0
    %2833 = vmatmul.mubr.bf16.gmra.mxu0 %v2758
    %v2834 = vpop.f32.mrf.mxu0
    %v2835 = vadd.f32 0.0, %v2834
    %v2836 = vpop.f32.mrf.mxu0
    %v2837 = vpop.f32.mrf.mxu0
    %v2838 = vpop.f32.mrf.mxu0
    %2839 = vdwg.mxu0
    %v2840 = vld [vmem:[%s1106] sm:$0x3]
    %v2841 = vadd.f32 %v2840, %v2795
    %v2842 = vxor.u32 %v2841, 2147483648
    %v2843 = vmul.f32 %v2842, 1.442695
    %v2844 = vpow.pop %v2843
    %v2845 = vadd.f32 %v2844, 1.0
    %v2846 = vrcp.pop %v2845
    %v2847 = vmul.f32 1.0, %v2846
    %v2848 = vld [vmem:[%s1115] sm:$0x3]
    %v2849 = vadd.f32 %v2848, %v2835
    %v2850 = vxor.u32 %v2849, 2147483648
    %v2851 = vmul.f32 %v2850, 1.442695
    %v2852 = vpow.pop %v2851
    %v2853 = vadd.f32 %v2852, 1.0
    %v2854 = vrcp.pop %v2853
    %v2855 = vmul.f32 1.0, %v2854
    %v2856 = vld [vmem:[%s1124] sm:$0x3]
    %2857 = vmatprep.subr.bf16.mxu0 0
    %2858 = vmatpush1.bf16.msra.mxu0 0
    %2859 = vmatprep.subr.bf16.mxu0 0
    %2860 = vmatpush1.bf16.msra.mxu0 0
    %2861 = vmatprep.subr.bf16.mxu0 0
    %2862 = vmatpush1.bf16.msra.mxu0 0
    %2863 = vmatprep.subr.bf16.mxu0 0
    %2864 = vmatpush1.bf16.msra.mxu0 0
    %2865 = vmatprep.subr.bf16.mxu0 0
    %2866 = vmatpush1.bf16.msra.mxu0 0
    %2867 = vmatprep.subr.bf16.mxu0 0
    %2868 = vmatpush1.bf16.msra.mxu0 0
    %2869 = vmatprep.subr.bf16.mxu0 0
    %2870 = vmatpush1.bf16.msra.mxu0 %v2410
    %2871 = vmatprep.subr.bf16.mxu0 0
    %2872 = vmatpush1.bf16.msra.mxu0 %v2409
    %2873 = vmatprep.subr.bf16.mxu0 0
    %2874 = vmatpush2.bf16.msra.mxu0 0
    %2875 = vmatprep.subr.bf16.mxu0 0
    %2876 = vmatpush2.bf16.msra.mxu0 0
    %2877 = vmatprep.subr.bf16.mxu0 0
    %2878 = vmatpush2.bf16.msra.mxu0 0
    %2879 = vmatprep.subr.bf16.mxu0 0
    %2880 = vmatpush2.bf16.msra.mxu0 0
    %2881 = vmatprep.subr.bf16.mxu0 0
    %2882 = vmatpush2.bf16.msra.mxu0 0
    %2883 = vmatprep.subr.bf16.mxu0 0
    %2884 = vmatpush2.bf16.msra.mxu0 0
    %2885 = vmatprep.subr.bf16.mxu0 0
    %2886 = vmatpush2.bf16.msra.mxu0 0
    %2887 = vmatprep.subr.bf16.mxu0 0
    %2888 = vmatpush2.bf16.msra.mxu0 0
    %2889 = vmatprep.mubr.bf16.mxu0 0
    %2890 = vmatmul.mubr.bf16.gmra.mxu0 %v2758
    %v2891 = vpop.f32.mrf.mxu0
    %v2892 = vadd.f32 %v2278, %v2891
    %v2893 = vpop.f32.mrf.mxu0
    %v2894 = vpop.f32.mrf.mxu0
    %v2895 = vpop.f32.mrf.mxu0
    %2896 = vdwg.mxu0
    %v2897 = vmul.f32 %v2847, %v2892
    %v2898 = vadd.f32 %v2856, %v2897
    %v2899 = vtanh.pop %v2898
    %v2900 = vsub.f32 1.0, %v2855
    %v2901 = vmul.f32 %v2900, %v2899
    %v2902 = vmul.f32 %v2855, %v2755
    %v2903 = vadd.f32 %v2901, %v2902
    %v2904 = vpack.c.bf16 %v2903, %v2903
    %v2906 = vsel %vm543, %v2904, 0
    %2908 = vmatprep.subr.bf16.mxu0 0
    %2909 = vmatpush1.bf16.msra.mxu0 0
    %2910 = vmatprep.subr.bf16.mxu0 0
    %2911 = vmatpush1.bf16.msra.mxu0 0
    %2912 = vmatprep.subr.bf16.mxu0 0
    %2913 = vmatpush1.bf16.msra.mxu0 0
    %2914 = vmatprep.subr.bf16.mxu0 0
    %2915 = vmatpush1.bf16.msra.mxu0 0
    %2916 = vmatprep.subr.bf16.mxu0 0
    %2917 = vmatpush1.bf16.msra.mxu0 0
    %2918 = vmatprep.subr.bf16.mxu0 0
    %2919 = vmatpush1.bf16.msra.mxu0 0
    %2920 = vmatprep.subr.bf16.mxu0 0
    %2921 = vmatpush1.bf16.msra.mxu0 %v2289
    %2922 = vmatprep.subr.bf16.mxu0 0
    %2923 = vmatpush1.bf16.msra.mxu0 %v2288
    %2924 = vmatprep.subr.bf16.mxu0 0
    %2925 = vmatpush2.bf16.msra.mxu0 0
    %2926 = vmatprep.subr.bf16.mxu0 0
    %2927 = vmatpush2.bf16.msra.mxu0 0
    %2928 = vmatprep.subr.bf16.mxu0 0
    %2929 = vmatpush2.bf16.msra.mxu0 0
    %2930 = vmatprep.subr.bf16.mxu0 0
    %2931 = vmatpush2.bf16.msra.mxu0 0
    %2932 = vmatprep.subr.bf16.mxu0 0
    %2933 = vmatpush2.bf16.msra.mxu0 0
    %2934 = vmatprep.subr.bf16.mxu0 0
    %2935 = vmatpush2.bf16.msra.mxu0 0
    %2936 = vmatprep.subr.bf16.mxu0 0
    %2937 = vmatpush2.bf16.msra.mxu0 0
    %2938 = vmatprep.subr.bf16.mxu0 0
    %2939 = vmatpush2.bf16.msra.mxu0 0
    %2940 = vmatprep.mubr.bf16.mxu0 0
    %2941 = vmatmul.mubr.bf16.gmra.mxu0 %v2906
    %v2942 = vpop.f32.mrf.mxu0
    %v2943 = vadd.f32 0.0, %v2942
    %v2944 = vpop.f32.mrf.mxu0
    %v2945 = vpop.f32.mrf.mxu0
    %v2946 = vpop.f32.mrf.mxu0
    %2947 = vdwg.mxu0
    %2948 = vmatprep.subr.bf16.mxu0 0
    %2949 = vmatpush1.bf16.msra.mxu0 0
    %2950 = vmatprep.subr.bf16.mxu0 0
    %2951 = vmatpush1.bf16.msra.mxu0 0
    %2952 = vmatprep.subr.bf16.mxu0 0
    %2953 = vmatpush1.bf16.msra.mxu0 0
    %2954 = vmatprep.subr.bf16.mxu0 0
    %2955 = vmatpush1.bf16.msra.mxu0 0
    %2956 = vmatprep.subr.bf16.mxu0 0
    %2957 = vmatpush1.bf16.msra.mxu0 0
    %2958 = vmatprep.subr.bf16.mxu0 0
    %2959 = vmatpush1.bf16.msra.mxu0 0
    %2960 = vmatprep.subr.bf16.mxu0 0
    %2961 = vmatpush1.bf16.msra.mxu0 %v2341
    %2962 = vmatprep.subr.bf16.mxu0 0
    %2963 = vmatpush1.bf16.msra.mxu0 %v2340
    %2964 = vmatprep.subr.bf16.mxu0 0
    %2965 = vmatpush2.bf16.msra.mxu0 0
    %2966 = vmatprep.subr.bf16.mxu0 0
    %2967 = vmatpush2.bf16.msra.mxu0 0
    %2968 = vmatprep.subr.bf16.mxu0 0
    %2969 = vmatpush2.bf16.msra.mxu0 0
    %2970 = vmatprep.subr.bf16.mxu0 0
    %2971 = vmatpush2.bf16.msra.mxu0 0
    %2972 = vmatprep.subr.bf16.mxu0 0
    %2973 = vmatpush2.bf16.msra.mxu0 0
    %2974 = vmatprep.subr.bf16.mxu0 0
    %2975 = vmatpush2.bf16.msra.mxu0 0
    %2976 = vmatprep.subr.bf16.mxu0 0
    %2977 = vmatpush2.bf16.msra.mxu0 0
    %2978 = vmatprep.subr.bf16.mxu0 0
    %2979 = vmatpush2.bf16.msra.mxu0 0
    %2980 = vmatprep.mubr.bf16.mxu0 0
    %2981 = vmatmul.mubr.bf16.gmra.mxu0 %v2906
    %v2982 = vpop.f32.mrf.mxu0
    %v2983 = vadd.f32 0.0, %v2982
    %v2984 = vpop.f32.mrf.mxu0
    %v2985 = vpop.f32.mrf.mxu0
    %v2986 = vpop.f32.mrf.mxu0
    %2987 = vdwg.mxu0
    %v2988 = vld [vmem:[%s1259] sm:$0x3]
    %v2989 = vadd.f32 %v2988, %v2943
    %v2990 = vxor.u32 %v2989, 2147483648
    %v2991 = vmul.f32 %v2990, 1.442695
    %v2992 = vpow.pop %v2991
    %v2993 = vadd.f32 %v2992, 1.0
    %v2994 = vrcp.pop %v2993
    %v2995 = vmul.f32 1.0, %v2994
    %v2996 = vld [vmem:[%s1268] sm:$0x3]
    %v2997 = vadd.f32 %v2996, %v2983
    %v2998 = vxor.u32 %v2997, 2147483648
    %v2999 = vmul.f32 %v2998, 1.442695
    %v3000 = vpow.pop %v2999
    %v3001 = vadd.f32 %v3000, 1.0
    %v3002 = vrcp.pop %v3001
    %v3003 = vmul.f32 1.0, %v3002
    %v3004 = vld [vmem:[%s1277] sm:$0x3]
    %3005 = vmatprep.subr.bf16.mxu0 0
    %3006 = vmatpush1.bf16.msra.mxu0 0
    %3007 = vmatprep.subr.bf16.mxu0 0
    %3008 = vmatpush1.bf16.msra.mxu0 0
    %3009 = vmatprep.subr.bf16.mxu0 0
    %3010 = vmatpush1.bf16.msra.mxu0 0
    %3011 = vmatprep.subr.bf16.mxu0 0
    %3012 = vmatpush1.bf16.msra.mxu0 0
    %3013 = vmatprep.subr.bf16.mxu0 0
    %3014 = vmatpush1.bf16.msra.mxu0 0
    %3015 = vmatprep.subr.bf16.mxu0 0
    %3016 = vmatpush1.bf16.msra.mxu0 0
    %3017 = vmatprep.subr.bf16.mxu0 0
    %3018 = vmatpush1.bf16.msra.mxu0 %v2410
    %3019 = vmatprep.subr.bf16.mxu0 0
    %3020 = vmatpush1.bf16.msra.mxu0 %v2409
    %3021 = vmatprep.subr.bf16.mxu0 0
    %3022 = vmatpush2.bf16.msra.mxu0 0
    %3023 = vmatprep.subr.bf16.mxu0 0
    %3024 = vmatpush2.bf16.msra.mxu0 0
    %3025 = vmatprep.subr.bf16.mxu0 0
    %3026 = vmatpush2.bf16.msra.mxu0 0
    %3027 = vmatprep.subr.bf16.mxu0 0
    %3028 = vmatpush2.bf16.msra.mxu0 0
    %3029 = vmatprep.subr.bf16.mxu0 0
    %3030 = vmatpush2.bf16.msra.mxu0 0
    %3031 = vmatprep.subr.bf16.mxu0 0
    %3032 = vmatpush2.bf16.msra.mxu0 0
    %3033 = vmatprep.subr.bf16.mxu0 0
    %3034 = vmatpush2.bf16.msra.mxu0 0
    %3035 = vmatprep.subr.bf16.mxu0 0
    %3036 = vmatpush2.bf16.msra.mxu0 0
    %3037 = vmatprep.mubr.bf16.mxu0 0
    %3038 = vmatmul.mubr.bf16.gmra.mxu0 %v2906
    %v3039 = vpop.f32.mrf.mxu0
    %v3040 = vadd.f32 %v2278, %v3039
    %v3041 = vpop.f32.mrf.mxu0
    %v3042 = vpop.f32.mrf.mxu0
    %v3043 = vpop.f32.mrf.mxu0
    %3044 = vdwg.mxu0
    %v3045 = vmul.f32 %v2995, %v3040
    %v3046 = vadd.f32 %v3004, %v3045
    %v3047 = vtanh.pop %v3046
    %v3048 = vsub.f32 1.0, %v3003
    %v3049 = vmul.f32 %v3048, %v3047
    %v3050 = vmul.f32 %v3003, %v2903
    %v3051 = vadd.f32 %v3049, %v3050
    %v3052 = vpack.c.bf16 %v3051, %v3051
    %v3054 = vsel %vm543, %v3052, 0
    %3056 = vmatprep.subr.bf16.mxu0 0
    %3057 = vmatpush1.bf16.msra.mxu0 0
    %3058 = vmatprep.subr.bf16.mxu0 0
    %3059 = vmatpush1.bf16.msra.mxu0 0
    %3060 = vmatprep.subr.bf16.mxu0 0
    %3061 = vmatpush1.bf16.msra.mxu0 0
    %3062 = vmatprep.subr.bf16.mxu0 0
    %3063 = vmatpush1.bf16.msra.mxu0 0
    %3064 = vmatprep.subr.bf16.mxu0 0
    %3065 = vmatpush1.bf16.msra.mxu0 0
    %3066 = vmatprep.subr.bf16.mxu0 0
    %3067 = vmatpush1.bf16.msra.mxu0 0
    %3068 = vmatprep.subr.bf16.mxu0 0
    %3069 = vmatpush1.bf16.msra.mxu0 %v2289
    %3070 = vmatprep.subr.bf16.mxu0 0
    %3071 = vmatpush1.bf16.msra.mxu0 %v2288
    %3072 = vmatprep.subr.bf16.mxu0 0
    %3073 = vmatpush2.bf16.msra.mxu0 0
    %3074 = vmatprep.subr.bf16.mxu0 0
    %3075 = vmatpush2.bf16.msra.mxu0 0
    %3076 = vmatprep.subr.bf16.mxu0 0
    %3077 = vmatpush2.bf16.msra.mxu0 0
    %3078 = vmatprep.subr.bf16.mxu0 0
    %3079 = vmatpush2.bf16.msra.mxu0 0
    %3080 = vmatprep.subr.bf16.mxu0 0
    %3081 = vmatpush2.bf16.msra.mxu0 0
    %3082 = vmatprep.subr.bf16.mxu0 0
    %3083 = vmatpush2.bf16.msra.mxu0 0
    %3084 = vmatprep.subr.bf16.mxu0 0
    %3085 = vmatpush2.bf16.msra.mxu0 0
    %3086 = vmatprep.subr.bf16.mxu0 0
    %3087 = vmatpush2.bf16.msra.mxu0 0
    %3088 = vmatprep.mubr.bf16.mxu0 0
    %3089 = vmatmul.mubr.bf16.gmra.mxu0 %v3054
    %v3090 = vpop.f32.mrf.mxu0
    %v3091 = vadd.f32 0.0, %v3090
    %v3092 = vpop.f32.mrf.mxu0
    %v3093 = vpop.f32.mrf.mxu0
    %v3094 = vpop.f32.mrf.mxu0
    %3095 = vdwg.mxu0
    %3096 = vmatprep.subr.bf16.mxu0 0
    %3097 = vmatpush1.bf16.msra.mxu0 0
    %3098 = vmatprep.subr.bf16.mxu0 0
    %3099 = vmatpush1.bf16.msra.mxu0 0
    %3100 = vmatprep.subr.bf16.mxu0 0
    %3101 = vmatpush1.bf16.msra.mxu0 0
    %3102 = vmatprep.subr.bf16.mxu0 0
    %3103 = vmatpush1.bf16.msra.mxu0 0
    %3104 = vmatprep.subr.bf16.mxu0 0
    %3105 = vmatpush1.bf16.msra.mxu0 0
    %3106 = vmatprep.subr.bf16.mxu0 0
    %3107 = vmatpush1.bf16.msra.mxu0 0
    %3108 = vmatprep.subr.bf16.mxu0 0
    %3109 = vmatpush1.bf16.msra.mxu0 %v2341
    %3110 = vmatprep.subr.bf16.mxu0 0
    %3111 = vmatpush1.bf16.msra.mxu0 %v2340
    %3112 = vmatprep.subr.bf16.mxu0 0
    %3113 = vmatpush2.bf16.msra.mxu0 0
    %3114 = vmatprep.subr.bf16.mxu0 0
    %3115 = vmatpush2.bf16.msra.mxu0 0
    %3116 = vmatprep.subr.bf16.mxu0 0
    %3117 = vmatpush2.bf16.msra.mxu0 0
    %3118 = vmatprep.subr.bf16.mxu0 0
    %3119 = vmatpush2.bf16.msra.mxu0 0
    %3120 = vmatprep.subr.bf16.mxu0 0
    %3121 = vmatpush2.bf16.msra.mxu0 0
    %3122 = vmatprep.subr.bf16.mxu0 0
    %3123 = vmatpush2.bf16.msra.mxu0 0
    %3124 = vmatprep.subr.bf16.mxu0 0
    %3125 = vmatpush2.bf16.msra.mxu0 0
    %3126 = vmatprep.subr.bf16.mxu0 0
    %3127 = vmatpush2.bf16.msra.mxu0 0
    %3128 = vmatprep.mubr.bf16.mxu0 0
    %3129 = vmatmul.mubr.bf16.gmra.mxu0 %v3054
    %v3130 = vpop.f32.mrf.mxu0
    %v3131 = vadd.f32 0.0, %v3130
    %v3132 = vpop.f32.mrf.mxu0
    %v3133 = vpop.f32.mrf.mxu0
    %v3134 = vpop.f32.mrf.mxu0
    %3135 = vdwg.mxu0
    %v3136 = vld [vmem:[%s1412] sm:$0x3]
    %v3137 = vadd.f32 %v3136, %v3091
    %v3138 = vxor.u32 %v3137, 2147483648
    %v3139 = vmul.f32 %v3138, 1.442695
    %v3140 = vpow.pop %v3139
    %v3141 = vadd.f32 %v3140, 1.0
    %v3142 = vrcp.pop %v3141
    %v3143 = vmul.f32 1.0, %v3142
    %v3144 = vld [vmem:[%s1421] sm:$0x3]
    %v3145 = vadd.f32 %v3144, %v3131
    %v3146 = vxor.u32 %v3145, 2147483648
    %v3147 = vmul.f32 %v3146, 1.442695
    %v3148 = vpow.pop %v3147
    %v3149 = vadd.f32 %v3148, 1.0
    %v3150 = vrcp.pop %v3149
    %v3151 = vmul.f32 1.0, %v3150
    %v3152 = vld [vmem:[%s1430] sm:$0x3]
    %3153 = vmatprep.subr.bf16.mxu0 0
    %3154 = vmatpush1.bf16.msra.mxu0 0
    %3155 = vmatprep.subr.bf16.mxu0 0
    %3156 = vmatpush1.bf16.msra.mxu0 0
    %3157 = vmatprep.subr.bf16.mxu0 0
    %3158 = vmatpush1.bf16.msra.mxu0 0
    %3159 = vmatprep.subr.bf16.mxu0 0
    %3160 = vmatpush1.bf16.msra.mxu0 0
    %3161 = vmatprep.subr.bf16.mxu0 0
    %3162 = vmatpush1.bf16.msra.mxu0 0
    %3163 = vmatprep.subr.bf16.mxu0 0
    %3164 = vmatpush1.bf16.msra.mxu0 0
    %3165 = vmatprep.subr.bf16.mxu0 0
    %3166 = vmatpush1.bf16.msra.mxu0 %v2410
    %3167 = vmatprep.subr.bf16.mxu0 0
    %3168 = vmatpush1.bf16.msra.mxu0 %v2409
    %3169 = vmatprep.subr.bf16.mxu0 0
    %3170 = vmatpush2.bf16.msra.mxu0 0
    %3171 = vmatprep.subr.bf16.mxu0 0
    %3172 = vmatpush2.bf16.msra.mxu0 0
    %3173 = vmatprep.subr.bf16.mxu0 0
    %3174 = vmatpush2.bf16.msra.mxu0 0
    %3175 = vmatprep.subr.bf16.mxu0 0
    %3176 = vmatpush2.bf16.msra.mxu0 0
    %3177 = vmatprep.subr.bf16.mxu0 0
    %3178 = vmatpush2.bf16.msra.mxu0 0
    %3179 = vmatprep.subr.bf16.mxu0 0
    %3180 = vmatpush2.bf16.msra.mxu0 0
    %3181 = vmatprep.subr.bf16.mxu0 0
    %3182 = vmatpush2.bf16.msra.mxu0 0
    %3183 = vmatprep.subr.bf16.mxu0 0
    %3184 = vmatpush2.bf16.msra.mxu0 0
    %3185 = vmatprep.mubr.bf16.mxu0 0
    %3186 = vmatmul.mubr.bf16.gmra.mxu0 %v3054
    %v3187 = vpop.f32.mrf.mxu0
    %v3188 = vadd.f32 %v2278, %v3187
    %v3189 = vpop.f32.mrf.mxu0
    %v3190 = vpop.f32.mrf.mxu0
    %v3191 = vpop.f32.mrf.mxu0
    %3192 = vdwg.mxu0
    %v3193 = vmul.f32 %v3143, %v3188
    %v3194 = vadd.f32 %v3152, %v3193
    %v3195 = vtanh.pop %v3194
    %v3196 = vsub.f32 1.0, %v3151
    %v3197 = vmul.f32 %v3196, %v3195
    %v3198 = vmul.f32 %v3151, %v3051
    %v3199 = vadd.f32 %v3197, %v3198
    %v3200 = vpack.c.bf16 %v3199, %v3199
    %v3202 = vsel %vm543, %v3200, 0
    %3204 = vmatprep.subr.bf16.mxu0 0
    %3205 = vmatpush1.bf16.msra.mxu0 0
    %3206 = vmatprep.subr.bf16.mxu0 0
    %3207 = vmatpush1.bf16.msra.mxu0 0
    %3208 = vmatprep.subr.bf16.mxu0 0
    %3209 = vmatpush1.bf16.msra.mxu0 0
    %3210 = vmatprep.subr.bf16.mxu0 0
    %3211 = vmatpush1.bf16.msra.mxu0 0
    %3212 = vmatprep.subr.bf16.mxu0 0
    %3213 = vmatpush1.bf16.msra.mxu0 0
    %3214 = vmatprep.subr.bf16.mxu0 0
    %3215 = vmatpush1.bf16.msra.mxu0 0
    %3216 = vmatprep.subr.bf16.mxu0 0
    %3217 = vmatpush1.bf16.msra.mxu0 %v2289
    %3218 = vmatprep.subr.bf16.mxu0 0
    %3219 = vmatpush1.bf16.msra.mxu0 %v2288
    %3220 = vmatprep.subr.bf16.mxu0 0
    %3221 = vmatpush2.bf16.msra.mxu0 0
    %3222 = vmatprep.subr.bf16.mxu0 0
    %3223 = vmatpush2.bf16.msra.mxu0 0
    %3224 = vmatprep.subr.bf16.mxu0 0
    %3225 = vmatpush2.bf16.msra.mxu0 0
    %3226 = vmatprep.subr.bf16.mxu0 0
    %3227 = vmatpush2.bf16.msra.mxu0 0
    %3228 = vmatprep.subr.bf16.mxu0 0
    %3229 = vmatpush2.bf16.msra.mxu0 0
    %3230 = vmatprep.subr.bf16.mxu0 0
    %3231 = vmatpush2.bf16.msra.mxu0 0
    %3232 = vmatprep.subr.bf16.mxu0 0
    %3233 = vmatpush2.bf16.msra.mxu0 0
    %3234 = vmatprep.subr.bf16.mxu0 0
    %3235 = vmatpush2.bf16.msra.mxu0 0
    %3236 = vmatprep.mubr.bf16.mxu0 0
    %3237 = vmatmul.mubr.bf16.gmra.mxu0 %v3202
    %v3238 = vpop.f32.mrf.mxu0
    %v3239 = vadd.f32 0.0, %v3238
    %v3240 = vpop.f32.mrf.mxu0
    %v3241 = vpop.f32.mrf.mxu0
    %v3242 = vpop.f32.mrf.mxu0
    %3243 = vdwg.mxu0
    %3244 = vmatprep.subr.bf16.mxu0 0
    %3245 = vmatpush1.bf16.msra.mxu0 0
    %3246 = vmatprep.subr.bf16.mxu0 0
    %3247 = vmatpush1.bf16.msra.mxu0 0
    %3248 = vmatprep.subr.bf16.mxu0 0
    %3249 = vmatpush1.bf16.msra.mxu0 0
    %3250 = vmatprep.subr.bf16.mxu0 0
    %3251 = vmatpush1.bf16.msra.mxu0 0
    %3252 = vmatprep.subr.bf16.mxu0 0
    %3253 = vmatpush1.bf16.msra.mxu0 0
    %3254 = vmatprep.subr.bf16.mxu0 0
    %3255 = vmatpush1.bf16.msra.mxu0 0
    %3256 = vmatprep.subr.bf16.mxu0 0
    %3257 = vmatpush1.bf16.msra.mxu0 %v2341
    %3258 = vmatprep.subr.bf16.mxu0 0
    %3259 = vmatpush1.bf16.msra.mxu0 %v2340
    %3260 = vmatprep.subr.bf16.mxu0 0
    %3261 = vmatpush2.bf16.msra.mxu0 0
    %3262 = vmatprep.subr.bf16.mxu0 0
    %3263 = vmatpush2.bf16.msra.mxu0 0
    %3264 = vmatprep.subr.bf16.mxu0 0
    %3265 = vmatpush2.bf16.msra.mxu0 0
    %3266 = vmatprep.subr.bf16.mxu0 0
    %3267 = vmatpush2.bf16.msra.mxu0 0
    %3268 = vmatprep.subr.bf16.mxu0 0
    %3269 = vmatpush2.bf16.msra.mxu0 0
    %3270 = vmatprep.subr.bf16.mxu0 0
    %3271 = vmatpush2.bf16.msra.mxu0 0
    %3272 = vmatprep.subr.bf16.mxu0 0
    %3273 = vmatpush2.bf16.msra.mxu0 0
    %3274 = vmatprep.subr.bf16.mxu0 0
    %3275 = vmatpush2.bf16.msra.mxu0 0
    %3276 = vmatprep.mubr.bf16.mxu0 0
    %3277 = vmatmul.mubr.bf16.gmra.mxu0 %v3202
    %v3278 = vpop.f32.mrf.mxu0
    %v3279 = vadd.f32 0.0, %v3278
    %v3280 = vpop.f32.mrf.mxu0
    %v3281 = vpop.f32.mrf.mxu0
    %v3282 = vpop.f32.mrf.mxu0
    %3283 = vdwg.mxu0
    %v3284 = vld [vmem:[%s1565] sm:$0x3]
    %v3285 = vadd.f32 %v3284, %v3239
    %v3286 = vxor.u32 %v3285, 2147483648
    %v3287 = vmul.f32 %v3286, 1.442695
    %v3288 = vpow.pop %v3287
    %v3289 = vadd.f32 %v3288, 1.0
    %v3290 = vrcp.pop %v3289
    %v3291 = vmul.f32 1.0, %v3290
    %v3292 = vld [vmem:[%s1574] sm:$0x3]
    %v3293 = vadd.f32 %v3292, %v3279
    %v3294 = vxor.u32 %v3293, 2147483648
    %v3295 = vmul.f32 %v3294, 1.442695
    %v3296 = vpow.pop %v3295
    %v3297 = vadd.f32 %v3296, 1.0
    %v3298 = vrcp.pop %v3297
    %v3299 = vmul.f32 1.0, %v3298
    %v3300 = vld [vmem:[%s1583] sm:$0x3]
    %3301 = vmatprep.subr.bf16.mxu0 0
    %3302 = vmatpush1.bf16.msra.mxu0 0
    %3303 = vmatprep.subr.bf16.mxu0 0
    %3304 = vmatpush1.bf16.msra.mxu0 0
    %3305 = vmatprep.subr.bf16.mxu0 0
    %3306 = vmatpush1.bf16.msra.mxu0 0
    %3307 = vmatprep.subr.bf16.mxu0 0
    %3308 = vmatpush1.bf16.msra.mxu0 0
    %3309 = vmatprep.subr.bf16.mxu0 0
    %3310 = vmatpush1.bf16.msra.mxu0 0
    %3311 = vmatprep.subr.bf16.mxu0 0
    %3312 = vmatpush1.bf16.msra.mxu0 0
    %3313 = vmatprep.subr.bf16.mxu0 0
    %3314 = vmatpush1.bf16.msra.mxu0 %v2410
    %3315 = vmatprep.subr.bf16.mxu0 0
    %3316 = vmatpush1.bf16.msra.mxu0 %v2409
    %3317 = vmatprep.subr.bf16.mxu0 0
    %3318 = vmatpush2.bf16.msra.mxu0 0
    %3319 = vmatprep.subr.bf16.mxu0 0
    %3320 = vmatpush2.bf16.msra.mxu0 0
    %3321 = vmatprep.subr.bf16.mxu0 0
    %3322 = vmatpush2.bf16.msra.mxu0 0
    %3323 = vmatprep.subr.bf16.mxu0 0
    %3324 = vmatpush2.bf16.msra.mxu0 0
    %3325 = vmatprep.subr.bf16.mxu0 0
    %3326 = vmatpush2.bf16.msra.mxu0 0
    %3327 = vmatprep.subr.bf16.mxu0 0
    %3328 = vmatpush2.bf16.msra.mxu0 0
    %3329 = vmatprep.subr.bf16.mxu0 0
    %3330 = vmatpush2.bf16.msra.mxu0 0
    %3331 = vmatprep.subr.bf16.mxu0 0
    %3332 = vmatpush2.bf16.msra.mxu0 0
    %3333 = vmatprep.mubr.bf16.mxu0 0
    %3334 = vmatmul.mubr.bf16.gmra.mxu0 %v3202
    %v3335 = vpop.f32.mrf.mxu0
    %v3336 = vadd.f32 %v2278, %v3335
    %v3337 = vpop.f32.mrf.mxu0
    %v3338 = vpop.f32.mrf.mxu0
    %v3339 = vpop.f32.mrf.mxu0
    %3340 = vdwg.mxu0
    %v3341 = vmul.f32 %v3291, %v3336
    %v3342 = vadd.f32 %v3300, %v3341
    %v3343 = vtanh.pop %v3342
    %v3344 = vsub.f32 1.0, %v3299
    %v3345 = vmul.f32 %v3344, %v3343
    %v3346 = vmul.f32 %v3299, %v3199
    %v3347 = vadd.f32 %v3345, %v3346
    %v3348 = vpack.c.bf16 %v3347, %v3347
    %v3350 = vsel %vm543, %v3348, 0
    %3352 = vmatprep.subr.bf16.mxu0 0
    %3353 = vmatpush1.bf16.msra.mxu0 0
    %3354 = vmatprep.subr.bf16.mxu0 0
    %3355 = vmatpush1.bf16.msra.mxu0 0
    %3356 = vmatprep.subr.bf16.mxu0 0
    %3357 = vmatpush1.bf16.msra.mxu0 0
    %3358 = vmatprep.subr.bf16.mxu0 0
    %3359 = vmatpush1.bf16.msra.mxu0 0
    %3360 = vmatprep.subr.bf16.mxu0 0
    %3361 = vmatpush1.bf16.msra.mxu0 0
    %3362 = vmatprep.subr.bf16.mxu0 0
    %3363 = vmatpush1.bf16.msra.mxu0 0
    %3364 = vmatprep.subr.bf16.mxu0 0
    %3365 = vmatpush1.bf16.msra.mxu0 %v2289
    %3366 = vmatprep.subr.bf16.mxu0 0
    %3367 = vmatpush1.bf16.msra.mxu0 %v2288
    %3368 = vmatprep.subr.bf16.mxu0 0
    %3369 = vmatpush2.bf16.msra.mxu0 0
    %3370 = vmatprep.subr.bf16.mxu0 0
    %3371 = vmatpush2.bf16.msra.mxu0 0
    %3372 = vmatprep.subr.bf16.mxu0 0
    %3373 = vmatpush2.bf16.msra.mxu0 0
    %3374 = vmatprep.subr.bf16.mxu0 0
    %3375 = vmatpush2.bf16.msra.mxu0 0
    %3376 = vmatprep.subr.bf16.mxu0 0
    %3377 = vmatpush2.bf16.msra.mxu0 0
    %3378 = vmatprep.subr.bf16.mxu0 0
    %3379 = vmatpush2.bf16.msra.mxu0 0
    %3380 = vmatprep.subr.bf16.mxu0 0
    %3381 = vmatpush2.bf16.msra.mxu0 0
    %3382 = vmatprep.subr.bf16.mxu0 0
    %3383 = vmatpush2.bf16.msra.mxu0 0
    %3384 = vmatprep.mubr.bf16.mxu0 0
    %3385 = vmatmul.mubr.bf16.gmra.mxu0 %v3350
    %v3386 = vpop.f32.mrf.mxu0
    %v3387 = vadd.f32 0.0, %v3386
    %v3388 = vpop.f32.mrf.mxu0
    %v3389 = vpop.f32.mrf.mxu0
    %v3390 = vpop.f32.mrf.mxu0
    %3391 = vdwg.mxu0
    %3392 = vmatprep.subr.bf16.mxu0 0
    %3393 = vmatpush1.bf16.msra.mxu0 0
    %3394 = vmatprep.subr.bf16.mxu0 0
    %3395 = vmatpush1.bf16.msra.mxu0 0
    %3396 = vmatprep.subr.bf16.mxu0 0
    %3397 = vmatpush1.bf16.msra.mxu0 0
    %3398 = vmatprep.subr.bf16.mxu0 0
    %3399 = vmatpush1.bf16.msra.mxu0 0
    %3400 = vmatprep.subr.bf16.mxu0 0
    %3401 = vmatpush1.bf16.msra.mxu0 0
    %3402 = vmatprep.subr.bf16.mxu0 0
    %3403 = vmatpush1.bf16.msra.mxu0 0
    %3404 = vmatprep.subr.bf16.mxu0 0
    %3405 = vmatpush1.bf16.msra.mxu0 %v2341
    %3406 = vmatprep.subr.bf16.mxu0 0
    %3407 = vmatpush1.bf16.msra.mxu0 %v2340
    %3408 = vmatprep.subr.bf16.mxu0 0
    %3409 = vmatpush2.bf16.msra.mxu0 0
    %3410 = vmatprep.subr.bf16.mxu0 0
    %3411 = vmatpush2.bf16.msra.mxu0 0
    %3412 = vmatprep.subr.bf16.mxu0 0
    %3413 = vmatpush2.bf16.msra.mxu0 0
    %3414 = vmatprep.subr.bf16.mxu0 0
    %3415 = vmatpush2.bf16.msra.mxu0 0
    %3416 = vmatprep.subr.bf16.mxu0 0
    %3417 = vmatpush2.bf16.msra.mxu0 0
    %3418 = vmatprep.subr.bf16.mxu0 0
    %3419 = vmatpush2.bf16.msra.mxu0 0
    %3420 = vmatprep.subr.bf16.mxu0 0
    %3421 = vmatpush2.bf16.msra.mxu0 0
    %3422 = vmatprep.subr.bf16.mxu0 0
    %3423 = vmatpush2.bf16.msra.mxu0 0
    %3424 = vmatprep.mubr.bf16.mxu0 0
    %3425 = vmatmul.mubr.bf16.gmra.mxu0 %v3350
    %v3426 = vpop.f32.mrf.mxu0
    %v3427 = vadd.f32 0.0, %v3426
    %v3428 = vpop.f32.mrf.mxu0
    %v3429 = vpop.f32.mrf.mxu0
    %v3430 = vpop.f32.mrf.mxu0
    %3431 = vdwg.mxu0
    %v3432 = vld [vmem:[%s1718] sm:$0x3]
    %v3433 = vadd.f32 %v3432, %v3387
    %v3434 = vxor.u32 %v3433, 2147483648
    %v3435 = vmul.f32 %v3434, 1.442695
    %v3436 = vpow.pop %v3435
    %v3437 = vadd.f32 %v3436, 1.0
    %v3438 = vrcp.pop %v3437
    %v3439 = vmul.f32 1.0, %v3438
    %v3440 = vld [vmem:[%s1727] sm:$0x3]
    %v3441 = vadd.f32 %v3440, %v3427
    %v3442 = vxor.u32 %v3441, 2147483648
    %v3443 = vmul.f32 %v3442, 1.442695
    %v3444 = vpow.pop %v3443
    %v3445 = vadd.f32 %v3444, 1.0
    %v3446 = vrcp.pop %v3445
    %v3447 = vmul.f32 1.0, %v3446
    %v3448 = vld [vmem:[%s1736] sm:$0x3]
    %3449 = vmatprep.subr.bf16.mxu0 0
    %3450 = vmatpush1.bf16.msra.mxu0 0
    %3451 = vmatprep.subr.bf16.mxu0 0
    %3452 = vmatpush1.bf16.msra.mxu0 0
    %3453 = vmatprep.subr.bf16.mxu0 0
    %3454 = vmatpush1.bf16.msra.mxu0 0
    %3455 = vmatprep.subr.bf16.mxu0 0
    %3456 = vmatpush1.bf16.msra.mxu0 0
    %3457 = vmatprep.subr.bf16.mxu0 0
    %3458 = vmatpush1.bf16.msra.mxu0 0
    %3459 = vmatprep.subr.bf16.mxu0 0
    %3460 = vmatpush1.bf16.msra.mxu0 0
    %3461 = vmatprep.subr.bf16.mxu0 0
    %3462 = vmatpush1.bf16.msra.mxu0 %v2410
    %3463 = vmatprep.subr.bf16.mxu0 0
    %3464 = vmatpush1.bf16.msra.mxu0 %v2409
    %3465 = vmatprep.subr.bf16.mxu0 0
    %3466 = vmatpush2.bf16.msra.mxu0 0
    %3467 = vmatprep.subr.bf16.mxu0 0
    %3468 = vmatpush2.bf16.msra.mxu0 0
    %3469 = vmatprep.subr.bf16.mxu0 0
    %3470 = vmatpush2.bf16.msra.mxu0 0
    %3471 = vmatprep.subr.bf16.mxu0 0
    %3472 = vmatpush2.bf16.msra.mxu0 0
    %3473 = vmatprep.subr.bf16.mxu0 0
    %3474 = vmatpush2.bf16.msra.mxu0 0
    %3475 = vmatprep.subr.bf16.mxu0 0
    %3476 = vmatpush2.bf16.msra.mxu0 0
    %3477 = vmatprep.subr.bf16.mxu0 0
    %3478 = vmatpush2.bf16.msra.mxu0 0
    %3479 = vmatprep.subr.bf16.mxu0 0
    %3480 = vmatpush2.bf16.msra.mxu0 0
    %3481 = vmatprep.mubr.bf16.mxu0 0
    %3482 = vmatmul.mubr.bf16.gmra.mxu0 %v3350
    %v3483 = vpop.f32.mrf.mxu0
    %v3484 = vadd.f32 %v2278, %v3483
    %v3485 = vpop.f32.mrf.mxu0
    %v3486 = vpop.f32.mrf.mxu0
    %v3487 = vpop.f32.mrf.mxu0
    %3488 = vdwg.mxu0
    %v3489 = vmul.f32 %v3439, %v3484
    %v3490 = vadd.f32 %v3448, %v3489
    %v3491 = vtanh.pop %v3490
    %v3492 = vsub.f32 1.0, %v3447
    %v3493 = vmul.f32 %v3492, %v3491
    %v3494 = vmul.f32 %v3447, %v3347
    %v3495 = vadd.f32 %v3493, %v3494
    %v3496 = vld [vmem:[%s9] sm:$0xff]
    %v3497 = vld [vmem:[%s9 + $0x8] sm:$0xff]
    %v3498 = vld [vmem:[%s9 + $0x10] sm:$0xff]
    %v3499 = vld [vmem:[%s9 + $0x18] sm:$0xff]
    %v3500 = vld [vmem:[%s10] sm:$0x1]
    %v3502 = vlaneseq
    %v3503 = vshrl.u32 %v3502, 7
    %v3504 = vsub.s32 0, %v3503
    %v3505 = vrot.slane %v3500, %v3504
    %v3508 = vsel %vm543, %v3495, 0
    %3510 = vmatprep.subr.mxu0 0.0
    %3511 = vmatpush1.msra.mxu0 0.0
    %3512 = vmatprep.subr.mxu0 0.0
    %3513 = vmatpush1.msra.mxu0 0.0
    %3514 = vmatprep.subr.mxu0 0.0
    %3515 = vmatpush1.msra.mxu0 0.0
    %3516 = vmatprep.subr.mxu0 0.0
    %3517 = vmatpush1.msra.mxu0 0.0
    %3518 = vmatprep.subr.mxu0 0.0
    %3519 = vmatpush1.msra.mxu0 0.0
    %3520 = vmatprep.subr.mxu0 0.0
    %3521 = vmatpush1.msra.mxu0 0.0
    %3522 = vmatprep.subr.mxu0 0.0
    %3523 = vmatpush1.msra.mxu0 0.0
    %3524 = vmatprep.subr.mxu0 0.0
    %3525 = vmatpush1.msra.mxu0 0.0
    %3526 = vmatprep.subr.mxu0 0.0
    %3527 = vmatpush1.msra.mxu0 0.0
    %3528 = vmatprep.subr.mxu0 0.0
    %3529 = vmatpush1.msra.mxu0 0.0
    %3530 = vmatprep.subr.mxu0 0.0
    %3531 = vmatpush1.msra.mxu0 0.0
    %3532 = vmatprep.subr.mxu0 0.0
    %3533 = vmatpush1.msra.mxu0 0.0
    %3534 = vmatprep.subr.mxu0 0.0
    %3535 = vmatpush1.msra.mxu0 %v3499
    %3536 = vmatprep.subr.mxu0 0.0
    %3537 = vmatpush1.msra.mxu0 %v3498
    %3538 = vmatprep.subr.mxu0 0.0
    %3539 = vmatpush1.msra.mxu0 %v3497
    %3540 = vmatprep.subr.mxu0 0.0
    %3541 = vmatpush1.msra.mxu0 %v3496
    %3542 = vmatprep.subr.mxu0 0.0
    %3543 = vmatpush2.msra.mxu0 0.0
    %3544 = vmatprep.subr.mxu0 0.0
    %3545 = vmatpush2.msra.mxu0 0.0
    %3546 = vmatprep.subr.mxu0 0.0
    %3547 = vmatpush2.msra.mxu0 0.0
    %3548 = vmatprep.subr.mxu0 0.0
    %3549 = vmatpush2.msra.mxu0 0.0
    %3550 = vmatprep.subr.mxu0 0.0
    %3551 = vmatpush2.msra.mxu0 0.0
    %3552 = vmatprep.subr.mxu0 0.0
    %3553 = vmatpush2.msra.mxu0 0.0
    %3554 = vmatprep.subr.mxu0 0.0
    %3555 = vmatpush2.msra.mxu0 0.0
    %3556 = vmatprep.subr.mxu0 0.0
    %3557 = vmatpush2.msra.mxu0 0.0
    %3558 = vmatprep.subr.mxu0 0.0
    %3559 = vmatpush2.msra.mxu0 0.0
    %3560 = vmatprep.subr.mxu0 0.0
    %3561 = vmatpush2.msra.mxu0 0.0
    %3562 = vmatprep.subr.mxu0 0.0
    %3563 = vmatpush2.msra.mxu0 0.0
    %3564 = vmatprep.subr.mxu0 0.0
    %3565 = vmatpush2.msra.mxu0 0.0
    %3566 = vmatprep.subr.mxu0 0.0
    %3567 = vmatpush2.msra.mxu0 0.0
    %3568 = vmatprep.subr.mxu0 0.0
    %3569 = vmatpush2.msra.mxu0 0.0
    %3570 = vmatprep.subr.mxu0 0.0
    %3571 = vmatpush2.msra.mxu0 0.0
    %3572 = vmatprep.subr.mxu0 0.0
    %3573 = vmatpush2.msra.mxu0 0.0
    %3574 = vmatprep.mubr.f32.mxu0 0.0
    %3575 = vmatmul.mubr.f32.gmra.mxu0 %v3508
    %v3576 = vpop.f32.mrf.mxu0
    %v3577 = vadd.f32 %v3505, %v3576
    %v3578 = vpop.f32.mrf.mxu0
    %3579 = vdwg.mxu0
    %vm3580 = vcmask 25600
    %3581 = vst.msk [vmem:[#allocation12] sm:$0x3] %vm3580, %v3577
    // Predicated region
    $region58: #{tpu_custom_call.1} parent=1 // pred_check
      _
    $region59: #{tpu_custom_call.1} parent=1 // pred_check_branch
      %3583 = sbr.rel (0) target = $region61
    $region60: #{tpu_custom_call.1} parent=1 // pred_region
      %s3585 = ssub.s32 32, 32
      %3586 = vsyncadd [#allocation8], %s3585
      %s3588 = sshll.u32 [#allocation12], 4
      %s3589 = int_to_ptr.vmem [resolvable:$true] %s3588
      %3591 = dma.vmem_to_hbm [thread:$0]  %s3589, 32, %s11, [#allocation8]
    $region61: #{tpu_custom_call.1} parent=1 // pred_fallthru
      _
    // Predicated region
    $region62: #{tpu_custom_call.1} parent=1 // pred_check
      _
    $region63: #{tpu_custom_call.1} parent=1 // pred_check_branch
      %3593 = sbr.rel (0) target = $region65
    $region64: #{tpu_custom_call.1} parent=1 // pred_region
      %3594 = dma.done [#allocation8], 32
    $region65: #{tpu_custom_call.1} parent=1 // pred_fallthru
      _
    %3595 = vsyncpa [#allocation7], 1
    %3596 = vsyncpa [#allocation10], 1
    %3597 = vsyncpa [#allocation8], 1

</llo_original>
